<compile_context>
chip_gen: v7x
topology: tpu7x:2x2x1
jax: 0.10.0
libtpu: 0.0.40
codegen_flags: <defaults>
</compile_context>

<pallas_src>
import jax
import jax.numpy as jnp
from jax.experimental import pallas as pl
from jax.experimental.pallas import tpu as pltpu

# ---------------- model / layout configuration ----------------
N, C_IN, H, W = 2, 4, 16, 16      # input [N, C, H, W] (NCHW, like PyTorch)
K = 3                             # conv kernel, stride 1, pad 1
C_MID = 8                         # conv output channels
C_OUT = 10                        # final linear features
C_OUT_PAD = 128                   # lane-padded output width (kernel-internal only)
HP, WP = H + 2, W + 2             # spatially padded sizes (pad = 1)
NPOS = N * HP * WP                # 648 flattened padded positions
PLANES = 640                      # working lane width (5*128) > last valid position (609)
XLANES = 768                      # input lane width (6*128) >= max tap offset (38) + PLANES
N_PAD = 8                         # batch rows padded to a full sublane tile
TAP_OFFSETS = tuple(di * WP + dj for di in range(K) for dj in range(K))


# ---------------------------- Pallas fused kernel --------------------------------
def fused_model_kernel(x_ref, w1_ref, b1_ref, pool_ref, w2_ref, b2_ref, out_ref):
    # 3x3 conv (stride 1, pad 1) as 9 shifted-tap matmuls on the MXU.
    # x_ref is (C_IN, XLANES): padded image flattened as p = n*HP*WP + y*WP + x
    # (zeros beyond NPOS); tap (di, dj) reads position p + di*WP + dj.
    h = jnp.zeros((C_MID, PLANES), jnp.float32)
    for t, off in enumerate(TAP_OFFSETS):
        xs = x_ref[:, pl.ds(off, PLANES)]          # (C_IN, PLANES) shifted window
        h = h + jnp.dot(w1_ref[t], xs,             # (C_MID, C_IN) @ (C_IN, PLANES)
                        preferred_element_type=jnp.float32)   # DEFAULT precision
    a = jnp.maximum(h + b1_ref[...], 0.0)          # bias (C_MID, 1) + ReLU -> VPU, lane-dense

    # Global average pool == masked reduction over positions: one MXU pass against a
    # precomputed {0,1} mask (also drops padding / out-of-image positions). HIGHEST
    # keeps the 256-term reduction at f32 accuracy; cost is negligible (8x640x8).
    pooled = jax.lax.dot_general(
        a, pool_ref[...], (((1,), (1,)), ((), ())),
        precision=jax.lax.Precision.HIGHEST,
        preferred_element_type=jnp.float32)        # (C_MID, N_PAD)

    # Final linear: contract the channel dim of both operands (implicit transpose on
    # the MXU). 1/(H*W) is folded into w2; output is a full (8, 128) unmasked store.
    out_ref[...] = jax.lax.dot_general(
        pooled, w2_ref[...], (((0,), (0,)), ((), ())),
        preferred_element_type=jnp.float32) + b2_ref[...]


# ------------------------------- JAX glue ----------------------------------------
@jax.jit
def torchscript_wrapper_forward(x_nchw, kernel_params):
    """Equivalent of TorchScriptWrapper(model)(x) for the synthetic model."""
    w1t, b1c, pool_mask, w2p, b2p = kernel_params

    # The only per-call layout glue: channel-major, spatially padded, flattened input.
    x_cnhw = jnp.transpose(x_nchw, (1, 0, 2, 3))                      # (C, N, H, W)
    x_pad = jnp.pad(x_cnhw, ((0, 0), (0, 0), (1, 1), (1, 1)))         # (C, N, HP, WP)
    x_flat = jnp.pad(x_pad.reshape(C_IN, NPOS),
                     ((0, 0), (0, XLANES - NPOS)))                    # (C_IN, XLANES)

    flops = (2 * len(TAP_OFFSETS) * C_MID * C_IN * PLANES
             + 2 * C_MID * PLANES * N_PAD
             + 2 * N_PAD * C_MID * C_OUT_PAD)
    bytes_accessed = 4 * (C_IN * XLANES + len(TAP_OFFSETS) * C_MID * C_IN + C_MID
                          + N_PAD * PLANES + C_MID * C_OUT_PAD + C_OUT_PAD
                          + N_PAD * C_OUT_PAD)

    out_padded = pl.pallas_call(
        fused_model_kernel,
        out_shape=jax.ShapeDtypeStruct((N_PAD, C_OUT_PAD), jnp.float32),
        in_specs=[pl.BlockSpec(memory_space=pltpu.MemorySpace.VMEM)] * 6,
        out_specs=pl.BlockSpec(memory_space=pltpu.MemorySpace.VMEM),
        cost_estimate=pl.CostEstimate(
            flops=flops, transcendentals=0, bytes_accessed=bytes_accessed),
    )(x_flat, w1t, b1c, pool_mask, w2p, b2p)

    return out_padded[:N, :C_OUT]                                     # true (N, 10)


def init_params(key):
    """Deterministic synthetic model parameters (same sampling as before)."""
    k1, k2, k3, k4 = jax.random.split(key, 4)
    # conv weight rows ordered (di, dj, c_in) -> c_mid (im2col column order)
    w1 = jax.random.normal(k1, (K * K * C_IN, C_MID), jnp.float32) * 0.1
    b1 = jax.random.normal(k2, (1, C_MID), jnp.float32) * 0.1
    w2 = jax.random.normal(k3, (C_MID, C_OUT), jnp.float32) * 0.1
    b2 = jax.random.normal(k4, (1, C_OUT), jnp.float32) * 0.1
    return w1, b1, w2, b2


def pack_params(params):
    """One-time packing of model params into kernel operand layouts (hoisted out of
    the per-call path per the performance review)."""
    w1, b1, w2, b2 = params

    # per-tap conv weights: w1t[t, c_out, c_in] = w1[t*C_IN + c_in, c_out]
    w1t = jnp.transpose(w1.reshape(K * K, C_IN, C_MID), (0, 2, 1))    # (9, 8, 4)
    b1c = jnp.reshape(b1, (C_MID, 1))                                 # per-sublane bias

    # {0,1} valid-position mask for the masked global-average pool
    p = jnp.arange(PLANES)
    n_of_p = p // (HP * WP)
    y = (p % (HP * WP)) // WP
    x = p % WP
    valid = (y < H) & (x < W)
    pool_mask = ((jnp.arange(N_PAD)[:, None] == n_of_p[None, :])
                 & valid[None, :]).astype(jnp.float32)                # (N_PAD, PLANES)

    # lane-padded final linear with the 1/(H*W) pooling scale folded into w2
    w2p = jnp.zeros((C_MID, C_OUT_PAD), jnp.float32).at[:, :C_OUT].set(w2) / (H * W)
    b2p = jnp.zeros((1, C_OUT_PAD), jnp.float32).at[:, :C_OUT].set(b2)
    return w1t, b1c, pool_mask, w2p, b2p


# ------------------------------ reference check ----------------------------------
def _reference_forward(x_nchw, params):
    """Pure-JAX/XLA reference of the same synthetic model (independent code path)."""
    w1, b1, w2, b2 = params
    w_hwio = w1.reshape(K, K, C_IN, C_MID)                            # (di, dj, ci, co)
    x_nhwc = jnp.transpose(x_nchw, (0, 2, 3, 1))
    y = jax.lax.conv_general_dilated(
        x_nhwc, w_hwio, window_strides=(1, 1), padding="SAME",
        dimension_numbers=("NHWC", "HWIO", "NHWC"))
    h = jnp.maximum(y + b1.reshape(1, 1, 1, C_MID), 0.0)
    pooled = jnp.mean(h, axis=(1, 2))                                 # (N, C_MID)
    return pooled @ w2 + b2                                           # (N, C_OUT)


if __name__ == "__main__":
    key = jax.random.PRNGKey(0)
    kx, kp = jax.random.split(key)
    x = jax.random.normal(kx, (N, C_IN, H, W), jnp.float32)           # NCHW, like PyTorch
    params = init_params(kp)
    kernel_params = pack_params(params)                               # one-time packing

    out = torchscript_wrapper_forward(x, kernel_params)
    out = jax.block_until_ready(out)

    ref = _reference_forward(x, params)
    assert out.shape == (N, C_OUT)
    # Tolerance sized for single-pass (DEFAULT) MXU precision on the conv matmuls
    # (per perf review); observed error is far smaller when both paths use the MXU.
    assert jnp.allclose(out, ref, atol=1e-3, rtol=1e-3)
    print("KERNEL_OK")
</pallas_src>

<mosaic_0001>
module attributes {stable_mosaic.version = 11 : i64} {
  func.func @fused_model_kernel(%arg0: memref<4x768xf32, #tpu.memory_space<vmem>>, %arg1: memref<9x8x4xf32, #tpu.memory_space<vmem>>, %arg2: memref<8x1xf32, #tpu.memory_space<vmem>>, %arg3: memref<8x640xf32, #tpu.memory_space<vmem>>, %arg4: memref<8x128xf32, #tpu.memory_space<vmem>>, %arg5: memref<1x128xf32, #tpu.memory_space<vmem>>, %arg6: memref<8x128xf32, #tpu.memory_space<vmem>>) attributes {dimension_semantics = [], scalar_prefetch = 0 : i64, scratch_operands = 0 : i64, tpu.core_type = #tpu.core_type<tc>} {
    %cst = arith.constant 0.000000e+00 : f32
    %0 = vector.broadcast %cst : f32 to vector<8x640xf32>
    %c0 = arith.constant 0 : index
    %c0_0 = arith.constant 0 : index
    %1 = vector.load %arg0[%c0, %c0_0] : memref<4x768xf32, #tpu.memory_space<vmem>>, vector<4x640xf32>
    %c0_1 = arith.constant 0 : index
    %c0_2 = arith.constant 0 : index
    %c0_3 = arith.constant 0 : index
    %2 = vector.load %arg1[%c0_1, %c0_2, %c0_3] : memref<9x8x4xf32, #tpu.memory_space<vmem>>, vector<1x8x4xf32>
    %3 = vector.shape_cast %2 : vector<1x8x4xf32> to vector<8x4xf32>
    %cst_4 = arith.constant dense<0.000000e+00> : vector<8x640xf32>
    %4 = tpu.matmul %3, %1, %cst_4 {dimension_numbers = #tpu.dot_dimension_numbers<[1], [0], [0], [1], [0, 0, 1, 1], [], []>} : vector<8x4xf32>, vector<4x640xf32>, vector<8x640xf32> -> vector<8x640xf32>
    %5 = arith.addf %0, %4 : vector<8x640xf32>
    %c0_5 = arith.constant 0 : index
    %c1 = arith.constant 1 : index
    %6 = vector.load %arg0[%c0_5, %c1] : memref<4x768xf32, #tpu.memory_space<vmem>>, vector<4x640xf32>
    %c1_6 = arith.constant 1 : index
    %c0_7 = arith.constant 0 : index
    %c0_8 = arith.constant 0 : index
    %7 = vector.load %arg1[%c1_6, %c0_7, %c0_8] : memref<9x8x4xf32, #tpu.memory_space<vmem>>, vector<1x8x4xf32>
    %8 = vector.shape_cast %7 : vector<1x8x4xf32> to vector<8x4xf32>
    %cst_9 = arith.constant dense<0.000000e+00> : vector<8x640xf32>
    %9 = tpu.matmul %8, %6, %cst_9 {dimension_numbers = #tpu.dot_dimension_numbers<[1], [0], [0], [1], [0, 0, 1, 1], [], []>} : vector<8x4xf32>, vector<4x640xf32>, vector<8x640xf32> -> vector<8x640xf32>
    %10 = arith.addf %5, %9 : vector<8x640xf32>
    %c0_10 = arith.constant 0 : index
    %c2 = arith.constant 2 : index
    %11 = vector.load %arg0[%c0_10, %c2] : memref<4x768xf32, #tpu.memory_space<vmem>>, vector<4x640xf32>
    %c2_11 = arith.constant 2 : index
    %c0_12 = arith.constant 0 : index
    %c0_13 = arith.constant 0 : index
    %12 = vector.load %arg1[%c2_11, %c0_12, %c0_13] : memref<9x8x4xf32, #tpu.memory_space<vmem>>, vector<1x8x4xf32>
    %13 = vector.shape_cast %12 : vector<1x8x4xf32> to vector<8x4xf32>
    %cst_14 = arith.constant dense<0.000000e+00> : vector<8x640xf32>
    %14 = tpu.matmul %13, %11, %cst_14 {dimension_numbers = #tpu.dot_dimension_numbers<[1], [0], [0], [1], [0, 0, 1, 1], [], []>} : vector<8x4xf32>, vector<4x640xf32>, vector<8x640xf32> -> vector<8x640xf32>
    %15 = arith.addf %10, %14 : vector<8x640xf32>
    %c0_15 = arith.constant 0 : index
    %c18 = arith.constant 18 : index
    %16 = vector.load %arg0[%c0_15, %c18] : memref<4x768xf32, #tpu.memory_space<vmem>>, vector<4x640xf32>
    %c3 = arith.constant 3 : index
    %c0_16 = arith.constant 0 : index
    %c0_17 = arith.constant 0 : index
    %17 = vector.load %arg1[%c3, %c0_16, %c0_17] : memref<9x8x4xf32, #tpu.memory_space<vmem>>, vector<1x8x4xf32>
    %18 = vector.shape_cast %17 : vector<1x8x4xf32> to vector<8x4xf32>
    %cst_18 = arith.constant dense<0.000000e+00> : vector<8x640xf32>
    %19 = tpu.matmul %18, %16, %cst_18 {dimension_numbers = #tpu.dot_dimension_numbers<[1], [0], [0], [1], [0, 0, 1, 1], [], []>} : vector<8x4xf32>, vector<4x640xf32>, vector<8x640xf32> -> vector<8x640xf32>
    %20 = arith.addf %15, %19 : vector<8x640xf32>
    %c0_19 = arith.constant 0 : index
    %c19 = arith.constant 19 : index
    %21 = vector.load %arg0[%c0_19, %c19] : memref<4x768xf32, #tpu.memory_space<vmem>>, vector<4x640xf32>
    %c4 = arith.constant 4 : index
    %c0_20 = arith.constant 0 : index
    %c0_21 = arith.constant 0 : index
    %22 = vector.load %arg1[%c4, %c0_20, %c0_21] : memref<9x8x4xf32, #tpu.memory_space<vmem>>, vector<1x8x4xf32>
    %23 = vector.shape_cast %22 : vector<1x8x4xf32> to vector<8x4xf32>
    %cst_22 = arith.constant dense<0.000000e+00> : vector<8x640xf32>
    %24 = tpu.matmul %23, %21, %cst_22 {dimension_numbers = #tpu.dot_dimension_numbers<[1], [0], [0], [1], [0, 0, 1, 1], [], []>} : vector<8x4xf32>, vector<4x640xf32>, vector<8x640xf32> -> vector<8x640xf32>
    %25 = arith.addf %20, %24 : vector<8x640xf32>
    %c0_23 = arith.constant 0 : index
    %c20 = arith.constant 20 : index
    %26 = vector.load %arg0[%c0_23, %c20] : memref<4x768xf32, #tpu.memory_space<vmem>>, vector<4x640xf32>
    %c5 = arith.constant 5 : index
    %c0_24 = arith.constant 0 : index
    %c0_25 = arith.constant 0 : index
    %27 = vector.load %arg1[%c5, %c0_24, %c0_25] : memref<9x8x4xf32, #tpu.memory_space<vmem>>, vector<1x8x4xf32>
    %28 = vector.shape_cast %27 : vector<1x8x4xf32> to vector<8x4xf32>
    %cst_26 = arith.constant dense<0.000000e+00> : vector<8x640xf32>
    %29 = tpu.matmul %28, %26, %cst_26 {dimension_numbers = #tpu.dot_dimension_numbers<[1], [0], [0], [1], [0, 0, 1, 1], [], []>} : vector<8x4xf32>, vector<4x640xf32>, vector<8x640xf32> -> vector<8x640xf32>
    %30 = arith.addf %25, %29 : vector<8x640xf32>
    %c0_27 = arith.constant 0 : index
    %c36 = arith.constant 36 : index
    %31 = vector.load %arg0[%c0_27, %c36] : memref<4x768xf32, #tpu.memory_space<vmem>>, vector<4x640xf32>
    %c6 = arith.constant 6 : index
    %c0_28 = arith.constant 0 : index
    %c0_29 = arith.constant 0 : index
    %32 = vector.load %arg1[%c6, %c0_28, %c0_29] : memref<9x8x4xf32, #tpu.memory_space<vmem>>, vector<1x8x4xf32>
    %33 = vector.shape_cast %32 : vector<1x8x4xf32> to vector<8x4xf32>
    %cst_30 = arith.constant dense<0.000000e+00> : vector<8x640xf32>
    %34 = tpu.matmul %33, %31, %cst_30 {dimension_numbers = #tpu.dot_dimension_numbers<[1], [0], [0], [1], [0, 0, 1, 1], [], []>} : vector<8x4xf32>, vector<4x640xf32>, vector<8x640xf32> -> vector<8x640xf32>
    %35 = arith.addf %30, %34 : vector<8x640xf32>
    %c0_31 = arith.constant 0 : index
    %c37 = arith.constant 37 : index
    %36 = vector.load %arg0[%c0_31, %c37] : memref<4x768xf32, #tpu.memory_space<vmem>>, vector<4x640xf32>
    %c7 = arith.constant 7 : index
    %c0_32 = arith.constant 0 : index
    %c0_33 = arith.constant 0 : index
    %37 = vector.load %arg1[%c7, %c0_32, %c0_33] : memref<9x8x4xf32, #tpu.memory_space<vmem>>, vector<1x8x4xf32>
    %38 = vector.shape_cast %37 : vector<1x8x4xf32> to vector<8x4xf32>
    %cst_34 = arith.constant dense<0.000000e+00> : vector<8x640xf32>
    %39 = tpu.matmul %38, %36, %cst_34 {dimension_numbers = #tpu.dot_dimension_numbers<[1], [0], [0], [1], [0, 0, 1, 1], [], []>} : vector<8x4xf32>, vector<4x640xf32>, vector<8x640xf32> -> vector<8x640xf32>
    %40 = arith.addf %35, %39 : vector<8x640xf32>
    %c0_35 = arith.constant 0 : index
    %c38 = arith.constant 38 : index
    %41 = vector.load %arg0[%c0_35, %c38] : memref<4x768xf32, #tpu.memory_space<vmem>>, vector<4x640xf32>
    %c8 = arith.constant 8 : index
    %c0_36 = arith.constant 0 : index
    %c0_37 = arith.constant 0 : index
    %42 = vector.load %arg1[%c8, %c0_36, %c0_37] : memref<9x8x4xf32, #tpu.memory_space<vmem>>, vector<1x8x4xf32>
    %43 = vector.shape_cast %42 : vector<1x8x4xf32> to vector<8x4xf32>
    %cst_38 = arith.constant dense<0.000000e+00> : vector<8x640xf32>
    %44 = tpu.matmul %43, %41, %cst_38 {dimension_numbers = #tpu.dot_dimension_numbers<[1], [0], [0], [1], [0, 0, 1, 1], [], []>} : vector<8x4xf32>, vector<4x640xf32>, vector<8x640xf32> -> vector<8x640xf32>
    %45 = arith.addf %40, %44 : vector<8x640xf32>
    %c0_39 = arith.constant 0 : index
    %c0_40 = arith.constant 0 : index
    %46 = vector.load %arg2[%c0_39, %c0_40] : memref<8x1xf32, #tpu.memory_space<vmem>>, vector<8x1xf32>
    %47 = vector.broadcast %46 : vector<8x1xf32> to vector<8x640xf32>
    %48 = arith.addf %45, %47 : vector<8x640xf32>
    %cst_41 = arith.constant 0.000000e+00 : f32
    %49 = vector.broadcast %cst_41 : f32 to vector<8x640xf32>
    %50 = arith.maximumf %48, %49 : vector<8x640xf32>
    %c0_42 = arith.constant 0 : index
    %c0_43 = arith.constant 0 : index
    %51 = vector.load %arg3[%c0_42, %c0_43] : memref<8x640xf32, #tpu.memory_space<vmem>>, vector<8x640xf32>
    %cst_44 = arith.constant dense<0.000000e+00> : vector<8x8xf32>
    %52 = tpu.matmul %50, %51, %cst_44 {dimension_numbers = #tpu.dot_dimension_numbers<[1], [1], [0], [0], [0, 0, 1, 0], [], []>, precision = #tpu.contract_precision<fp32>} : vector<8x640xf32>, vector<8x640xf32>, vector<8x8xf32> -> vector<8x8xf32>
    %c0_45 = arith.constant 0 : index
    %c0_46 = arith.constant 0 : index
    %53 = vector.load %arg4[%c0_45, %c0_46] : memref<8x128xf32, #tpu.memory_space<vmem>>, vector<8x128xf32>
    %cst_47 = arith.constant dense<0.000000e+00> : vector<8x128xf32>
    %54 = tpu.matmul %52, %53, %cst_47 {dimension_numbers = #tpu.dot_dimension_numbers<[0], [0], [1], [1], [0, 1, 1, 1], [], []>} : vector<8x8xf32>, vector<8x128xf32>, vector<8x128xf32> -> vector<8x128xf32>
    %c0_48 = arith.constant 0 : index
    %c0_49 = arith.constant 0 : index
    %55 = vector.load %arg5[%c0_48, %c0_49] : memref<1x128xf32, #tpu.memory_space<vmem>>, vector<1x128xf32>
    %56 = vector.broadcast %55 : vector<1x128xf32> to vector<8x128xf32>
    %57 = arith.addf %54, %56 : vector<8x128xf32>
    %c0_50 = arith.constant 0 : index
    %c0_51 = arith.constant 0 : index
    %58 = vector.load %arg6[%c0_50, %c0_51] : memref<8x128xf32, #tpu.memory_space<vmem>>, vector<8x128xf32>
    tpu.vector_store %arg6[%c0_50, %c0_51], %57 {strides = array<i32>} : memref<8x128xf32, #tpu.memory_space<vmem>>, vector<8x128xf32>,
    return
  }
}

</mosaic_0001>

<llo_original>
// kernel: torchscript_wrapper_forward.1
$region0: #{torchscript_wrapper_forward.1}
  #allocation0 [shape = 'u32[]', space=smem, size = 0x4, offset = 0x4, fixed_abs, tag = 'smem constant byte address 0x4 - core index']
  #allocation1 [shape = 'u32[144,128]{1,0:T(1,128)}', space=vmem, size = 0x12000, scoped, tag = 'internal scratch']
  %s0 = inlined_call_operand.vmem [shape: f32[4,768], index: 0, kind: input, shape index: {}]
  %s1 = inlined_call_operand.vmem [shape: f32[9,8,4], index: 1, kind: input, shape index: {}]
  %s2 = inlined_call_operand.vmem [shape: f32[8,1], index: 2, kind: input, shape index: {}]
  %s3 = inlined_call_operand.vmem [shape: f32[8,640], index: 3, kind: input, shape index: {}]
  %s4 = inlined_call_operand.vmem [shape: f32[8,128], index: 4, kind: input, shape index: {}]
  %s5 = inlined_call_operand.vmem [shape: f32[1,128], index: 5, kind: input, shape index: {}]
  %s6 = inlined_call_operand.vmem [shape: f32[8,128], index: 6, kind: output, shape index: {}]
  %s7 = sld [smem:[#allocation0]]
  $region34: #{torchscript_wrapper_forward.1} parent=0
    _
  %s9 = ssub.s32 1, %s7
  %s10 = scalar_select 0, %s9, %s7
  // Predicated region
  $region2: #{torchscript_wrapper_forward.1} parent=0 // pred_check
    _
  $region3: #{torchscript_wrapper_forward.1} parent=0 // pred_check_branch
    %12 = sbr.rel (0) target = $region5
  $region4: #{torchscript_wrapper_forward.1} parent=0 // pred_region
    _
  $region5: #{torchscript_wrapper_forward.1} parent=0 // pred_fallthru
    _
  // Predicated region
  $region6: #{torchscript_wrapper_forward.1} parent=0 // pred_check
    _
  $region7: #{torchscript_wrapper_forward.1} parent=0 // pred_check_branch
    %14 = sbr.rel (0) target = $region9
  $region8: #{torchscript_wrapper_forward.1} parent=0 // pred_region
    _
  $region9: #{torchscript_wrapper_forward.1} parent=0 // pred_fallthru
    _
  // Predicated region
  $region10: #{torchscript_wrapper_forward.1} parent=0 // pred_check
    _
  $region11: #{torchscript_wrapper_forward.1} parent=0 // pred_check_branch
    %16 = sbr.rel (0) target = $region13
  $region12: #{torchscript_wrapper_forward.1} parent=0 // pred_region
    _
  $region13: #{torchscript_wrapper_forward.1} parent=0 // pred_fallthru
    _
  // Predicated region
  $region14: #{torchscript_wrapper_forward.1} parent=0 // pred_check
    _
  $region15: #{torchscript_wrapper_forward.1} parent=0 // pred_check_branch
    %18 = sbr.rel (0) target = $region17
  $region16: #{torchscript_wrapper_forward.1} parent=0 // pred_region
    _
  $region17: #{torchscript_wrapper_forward.1} parent=0 // pred_fallthru
    _
  // Predicated region
  $region18: #{torchscript_wrapper_forward.1} parent=0 // pred_check
    _
  $region19: #{torchscript_wrapper_forward.1} parent=0 // pred_check_branch
    %20 = sbr.rel (0) target = $region21
  $region20: #{torchscript_wrapper_forward.1} parent=0 // pred_region
    _
  $region21: #{torchscript_wrapper_forward.1} parent=0 // pred_fallthru
    _
  // Predicated region
  $region22: #{torchscript_wrapper_forward.1} parent=0 // pred_check
    _
  $region23: #{torchscript_wrapper_forward.1} parent=0 // pred_check_branch
    %22 = sbr.rel (0) target = $region25
  $region24: #{torchscript_wrapper_forward.1} parent=0 // pred_region
    _
  $region25: #{torchscript_wrapper_forward.1} parent=0 // pred_fallthru
    _
  %v23 = vld [vmem:[%s0] sm:$0xff]
  %v24 = vld [vmem:[%s0 + $0x8] sm:$0xff]
  %v25 = vld [vmem:[%s0 + $0x10] sm:$0xf]
  %v26 = vld [vmem:[%s1] sm:$0xff]
  %v27 = vld [vmem:[%s0] sm:$0xff]
  %v28 = vld [vmem:[%s0 + $0x8] sm:$0xff]
  %v29 = vld [vmem:[%s0 + $0x10] sm:$0xff]
  %s30 = scalar_lea.vmem %s1, 8
  %v31 = vld [vmem:[%s30] sm:$0xff]
  %v35 = vcombine.high %v27, %v27
  %v36 = vcombine.high %v28, %v28
  %v37 = vcombine.high %v29, %v29
  %38 = vrot.lane.b32.xlu0 %v27, 127
  %v39 = vpop.permute.xlu0 %38
  %40 = vrot.lane.b32.xlu0 %v35, 127
  %v41 = vpop.permute.xlu0 %40
  %42 = vrot.lane.b32.xlu0 %v28, 127
  %v43 = vpop.permute.xlu0 %42
  %44 = vrot.lane.b32.xlu0 %v36, 127
  %v45 = vpop.permute.xlu0 %44
  %46 = vrot.lane.b32.xlu0 %v29, 127
  %v47 = vpop.permute.xlu0 %46
  %48 = vrot.lane.b32.xlu0 %v37, 127
  %v49 = vpop.permute.xlu0 %48
  %vm50 = vcmask 1039360
  %v51 = vsel %vm50, %v39, %v41
  %v52 = vsel %vm50, %v41, %v43
  %v53 = vsel %vm50, %v43, %v45
  %v54 = vsel %vm50, %v45, %v47
  %v55 = vsel %vm50, %v47, %v49
  %vm56 = vcmask 31744
  %v58 = vsel %vm56, %v31, 0
  %vm60 = vcmask 1043456
  %v61 = vsel %vm60, %v51, 0
  %v63 = vsel %vm60, %v52, 0
  %v65 = vsel %vm60, %v53, 0
  %v67 = vsel %vm60, %v54, 0
  %v69 = vsel %vm60, %v55, 0
  %71 = vmatprep.subr.mxu0 %v63
  %72 = vmatpush1.msra.mxu0 %v61
  %73 = vmatprep.subr.mxu0 0.0
  %74 = vmatpush1.msra.mxu0 0.0
  %75 = vmatprep.subr.mxu0 0.0
  %76 = vmatpush1.msra.mxu0 0.0
  %77 = vmatprep.subr.mxu0 0.0
  %78 = vmatpush1.msra.mxu0 0.0
  %79 = vmatprep.subr.mxu0 0.0
  %80 = vmatpush1.msra.mxu0 0.0
  %81 = vmatprep.subr.mxu0 0.0
  %82 = vmatpush1.msra.mxu0 0.0
  %83 = vmatprep.subr.mxu0 0.0
  %84 = vmatpush1.msra.mxu0 0.0
  %85 = vmatprep.subr.mxu0 0.0
  %86 = vmatpush1.msra.mxu0 0.0
  %87 = vmatprep.subr.mxu0 0.0
  %88 = vmatpush1.msra.mxu0 0.0
  %89 = vmatprep.subr.mxu0 0.0
  %90 = vmatpush1.msra.mxu0 0.0
  %91 = vmatprep.subr.mxu0 0.0
  %92 = vmatpush1.msra.mxu0 0.0
  %93 = vmatprep.subr.mxu0 0.0
  %94 = vmatpush1.msra.mxu0 0.0
  %95 = vmatprep.subr.mxu0 0.0
  %96 = vmatpush1.msra.mxu0 0.0
  %97 = vmatprep.subr.mxu0 0.0
  %98 = vmatpush1.msra.mxu0 0.0
  %99 = vmatprep.subr.mxu0 0.0
  %100 = vmatpush1.msra.mxu0 0.0
  %101 = vmatprep.subr.mxu0 0.0
  %102 = vmatpush1.msra.mxu0 0.0
  %103 = vmatprep.subr.mxu0 0.0
  %104 = vmatpush1.msra.mxu0 0.0
  %105 = vmatprep.subr.mxu0 0.0
  %106 = vmatpush1.msra.mxu0 0.0
  %107 = vmatprep.subr.mxu0 0.0
  %108 = vmatpush1.msra.mxu0 0.0
  %109 = vmatprep.subr.mxu0 0.0
  %110 = vmatpush1.msra.mxu0 0.0
  %111 = vmatprep.subr.mxu0 0.0
  %112 = vmatpush1.msra.mxu0 0.0
  %113 = vmatprep.subr.mxu0 0.0
  %114 = vmatpush1.msra.mxu0 0.0
  %115 = vmatprep.subr.mxu0 0.0
  %116 = vmatpush1.msra.mxu0 0.0
  %117 = vmatprep.subr.mxu0 0.0
  %118 = vmatpush1.msra.mxu0 0.0
  %119 = vmatprep.subr.mxu0 0.0
  %120 = vmatpush1.msra.mxu0 0.0
  %121 = vmatprep.subr.mxu0 0.0
  %122 = vmatpush1.msra.mxu0 0.0
  %123 = vmatprep.subr.mxu0 0.0
  %124 = vmatpush1.msra.mxu0 0.0
  %125 = vmatprep.subr.mxu0 0.0
  %126 = vmatpush1.msra.mxu0 0.0
  %127 = vmatprep.subr.mxu0 0.0
  %128 = vmatpush1.msra.mxu0 0.0
  %129 = vmatprep.subr.mxu0 0.0
  %130 = vmatpush1.msra.mxu0 0.0
  %131 = vmatprep.subr.mxu0 0.0
  %132 = vmatpush1.msra.mxu0 0.0
  %133 = vmatprep.subr.mxu0 0.0
  %134 = vmatpush1.msra.mxu0 0.0
  %135 = vmatprep.mubr.f32.mxu0 0.0
  %136 = vmatmul.mubr.f32.gmra.mrb[0].mxu0 %v58
  %v137 = vpop.f32.mrb[0].mxu0
  %v138 = vadd.f32 0.0, %v137
  %v139 = vpop.f32.mrb[0].mxu0
  %v140 = vadd.f32 0.0, %v139
  %141 = vdwg.mxu0
  %142 = vmatprep.subr.mxu0 %v67
  %143 = vmatpush1.msra.mxu0 %v65
  %144 = vmatprep.subr.mxu0 0.0
  %145 = vmatpush1.msra.mxu0 0.0
  %146 = vmatprep.subr.mxu0 0.0
  %147 = vmatpush1.msra.mxu0 0.0
  %148 = vmatprep.subr.mxu0 0.0
  %149 = vmatpush1.msra.mxu0 0.0
  %150 = vmatprep.subr.mxu0 0.0
  %151 = vmatpush1.msra.mxu0 0.0
  %152 = vmatprep.subr.mxu0 0.0
  %153 = vmatpush1.msra.mxu0 0.0
  %154 = vmatprep.subr.mxu0 0.0
  %155 = vmatpush1.msra.mxu0 0.0
  %156 = vmatprep.subr.mxu0 0.0
  %157 = vmatpush1.msra.mxu0 0.0
  %158 = vmatprep.subr.mxu0 0.0
  %159 = vmatpush1.msra.mxu0 0.0
  %160 = vmatprep.subr.mxu0 0.0
  %161 = vmatpush1.msra.mxu0 0.0
  %162 = vmatprep.subr.mxu0 0.0
  %163 = vmatpush1.msra.mxu0 0.0
  %164 = vmatprep.subr.mxu0 0.0
  %165 = vmatpush1.msra.mxu0 0.0
  %166 = vmatprep.subr.mxu0 0.0
  %167 = vmatpush1.msra.mxu0 0.0
  %168 = vmatprep.subr.mxu0 0.0
  %169 = vmatpush1.msra.mxu0 0.0
  %170 = vmatprep.subr.mxu0 0.0
  %171 = vmatpush1.msra.mxu0 0.0
  %172 = vmatprep.subr.mxu0 0.0
  %173 = vmatpush1.msra.mxu0 0.0
  %174 = vmatprep.subr.mxu0 0.0
  %175 = vmatpush1.msra.mxu0 0.0
  %176 = vmatprep.subr.mxu0 0.0
  %177 = vmatpush1.msra.mxu0 0.0
  %178 = vmatprep.subr.mxu0 0.0
  %179 = vmatpush1.msra.mxu0 0.0
  %180 = vmatprep.subr.mxu0 0.0
  %181 = vmatpush1.msra.mxu0 0.0
  %182 = vmatprep.subr.mxu0 0.0
  %183 = vmatpush1.msra.mxu0 0.0
  %184 = vmatprep.subr.mxu0 0.0
  %185 = vmatpush1.msra.mxu0 0.0
  %186 = vmatprep.subr.mxu0 0.0
  %187 = vmatpush1.msra.mxu0 0.0
  %188 = vmatprep.subr.mxu0 0.0
  %189 = vmatpush1.msra.mxu0 0.0
  %190 = vmatprep.subr.mxu0 0.0
  %191 = vmatpush1.msra.mxu0 0.0
  %192 = vmatprep.subr.mxu0 0.0
  %193 = vmatpush1.msra.mxu0 0.0
  %194 = vmatprep.subr.mxu0 0.0
  %195 = vmatpush1.msra.mxu0 0.0
  %196 = vmatprep.subr.mxu0 0.0
  %197 = vmatpush1.msra.mxu0 0.0
  %198 = vmatprep.subr.mxu0 0.0
  %199 = vmatpush1.msra.mxu0 0.0
  %200 = vmatprep.subr.mxu0 0.0
  %201 = vmatpush1.msra.mxu0 0.0
  %202 = vmatprep.subr.mxu0 0.0
  %203 = vmatpush1.msra.mxu0 0.0
  %204 = vmatprep.subr.mxu0 0.0
  %205 = vmatpush1.msra.mxu0 0.0
  %206 = vmatprep.mubr.f32.mxu0 0.0
  %207 = vmatmul.mubr.f32.gmra.mrb[0].mxu0 %v58
  %v208 = vpop.f32.mrb[0].mxu0
  %v209 = vadd.f32 0.0, %v208
  %v210 = vpop.f32.mrb[0].mxu0
  %v211 = vadd.f32 0.0, %v210
  %212 = vdwg.mxu0
  %213 = vmatprep.subr.mxu0 0.0
  %214 = vmatpush1.msra.mxu0 %v69
  %215 = vmatprep.subr.mxu0 0.0
  %216 = vmatpush1.msra.mxu0 0.0
  %217 = vmatprep.subr.mxu0 0.0
  %218 = vmatpush1.msra.mxu0 0.0
  %219 = vmatprep.subr.mxu0 0.0
  %220 = vmatpush1.msra.mxu0 0.0
  %221 = vmatprep.subr.mxu0 0.0
  %222 = vmatpush1.msra.mxu0 0.0
  %223 = vmatprep.subr.mxu0 0.0
  %224 = vmatpush1.msra.mxu0 0.0
  %225 = vmatprep.subr.mxu0 0.0
  %226 = vmatpush1.msra.mxu0 0.0
  %227 = vmatprep.subr.mxu0 0.0
  %228 = vmatpush1.msra.mxu0 0.0
  %229 = vmatprep.subr.mxu0 0.0
  %230 = vmatpush1.msra.mxu0 0.0
  %231 = vmatprep.subr.mxu0 0.0
  %232 = vmatpush1.msra.mxu0 0.0
  %233 = vmatprep.subr.mxu0 0.0
  %234 = vmatpush1.msra.mxu0 0.0
  %235 = vmatprep.subr.mxu0 0.0
  %236 = vmatpush1.msra.mxu0 0.0
  %237 = vmatprep.subr.mxu0 0.0
  %238 = vmatpush1.msra.mxu0 0.0
  %239 = vmatprep.subr.mxu0 0.0
  %240 = vmatpush1.msra.mxu0 0.0
  %241 = vmatprep.subr.mxu0 0.0
  %242 = vmatpush1.msra.mxu0 0.0
  %243 = vmatprep.subr.mxu0 0.0
  %244 = vmatpush1.msra.mxu0 0.0
  %245 = vmatprep.subr.mxu0 0.0
  %246 = vmatpush1.msra.mxu0 0.0
  %247 = vmatprep.subr.mxu0 0.0
  %248 = vmatpush1.msra.mxu0 0.0
  %249 = vmatprep.subr.mxu0 0.0
  %250 = vmatpush1.msra.mxu0 0.0
  %251 = vmatprep.subr.mxu0 0.0
  %252 = vmatpush1.msra.mxu0 0.0
  %253 = vmatprep.subr.mxu0 0.0
  %254 = vmatpush1.msra.mxu0 0.0
  %255 = vmatprep.subr.mxu0 0.0
  %256 = vmatpush1.msra.mxu0 0.0
  %257 = vmatprep.subr.mxu0 0.0
  %258 = vmatpush1.msra.mxu0 0.0
  %259 = vmatprep.subr.mxu0 0.0
  %260 = vmatpush1.msra.mxu0 0.0
  %261 = vmatprep.subr.mxu0 0.0
  %262 = vmatpush1.msra.mxu0 0.0
  %263 = vmatprep.subr.mxu0 0.0
  %264 = vmatpush1.msra.mxu0 0.0
  %265 = vmatprep.subr.mxu0 0.0
  %266 = vmatpush1.msra.mxu0 0.0
  %267 = vmatprep.subr.mxu0 0.0
  %268 = vmatpush1.msra.mxu0 0.0
  %269 = vmatprep.subr.mxu0 0.0
  %270 = vmatpush1.msra.mxu0 0.0
  %271 = vmatprep.subr.mxu0 0.0
  %272 = vmatpush1.msra.mxu0 0.0
  %273 = vmatprep.subr.mxu0 0.0
  %274 = vmatpush1.msra.mxu0 0.0
  %275 = vmatprep.subr.mxu0 0.0
  %276 = vmatpush1.msra.mxu0 0.0
  %277 = vmatprep.mubr.f32.mxu0 0.0
  %278 = vmatmul.mubr.f32.gmra.mrb[0].mxu0 %v58
  %v279 = vpop.f32.mrb[0].mxu0
  %v280 = vadd.f32 0.0, %v279
  %v281 = vpop.f32.mrb[0].mxu0
  %282 = vdwg.mxu0
  %v286 = vcombine.high %v23, %v23
  %v287 = vcombine.high %v24, %v24
  %v289 = vsel %vm56, %v26, 0
  %v291 = vsel %vm60, %v23, 0
  %v293 = vsel %vm60, %v286, 0
  %v295 = vsel %vm60, %v24, 0
  %v297 = vsel %vm60, %v287, 0
  %v299 = vsel %vm60, %v25, 0
  %301 = vmatprep.subr.mxu0 %v293
  %302 = vmatpush1.msra.mxu0 %v291
  %303 = vmatprep.subr.mxu0 0.0
  %304 = vmatpush1.msra.mxu0 0.0
  %305 = vmatprep.subr.mxu0 0.0
  %306 = vmatpush1.msra.mxu0 0.0
  %307 = vmatprep.subr.mxu0 0.0
  %308 = vmatpush1.msra.mxu0 0.0
  %309 = vmatprep.subr.mxu0 0.0
  %310 = vmatpush1.msra.mxu0 0.0
  %311 = vmatprep.subr.mxu0 0.0
  %312 = vmatpush1.msra.mxu0 0.0
  %313 = vmatprep.subr.mxu0 0.0
  %314 = vmatpush1.msra.mxu0 0.0
  %315 = vmatprep.subr.mxu0 0.0
  %316 = vmatpush1.msra.mxu0 0.0
  %317 = vmatprep.subr.mxu0 0.0
  %318 = vmatpush1.msra.mxu0 0.0
  %319 = vmatprep.subr.mxu0 0.0
  %320 = vmatpush1.msra.mxu0 0.0
  %321 = vmatprep.subr.mxu0 0.0
  %322 = vmatpush1.msra.mxu0 0.0
  %323 = vmatprep.subr.mxu0 0.0
  %324 = vmatpush1.msra.mxu0 0.0
  %325 = vmatprep.subr.mxu0 0.0
  %326 = vmatpush1.msra.mxu0 0.0
  %327 = vmatprep.subr.mxu0 0.0
  %328 = vmatpush1.msra.mxu0 0.0
  %329 = vmatprep.subr.mxu0 0.0
  %330 = vmatpush1.msra.mxu0 0.0
  %331 = vmatprep.subr.mxu0 0.0
  %332 = vmatpush1.msra.mxu0 0.0
  %333 = vmatprep.subr.mxu0 0.0
  %334 = vmatpush1.msra.mxu0 0.0
  %335 = vmatprep.subr.mxu0 0.0
  %336 = vmatpush1.msra.mxu0 0.0
  %337 = vmatprep.subr.mxu0 0.0
  %338 = vmatpush1.msra.mxu0 0.0
  %339 = vmatprep.subr.mxu0 0.0
  %340 = vmatpush1.msra.mxu0 0.0
  %341 = vmatprep.subr.mxu0 0.0
  %342 = vmatpush1.msra.mxu0 0.0
  %343 = vmatprep.subr.mxu0 0.0
  %344 = vmatpush1.msra.mxu0 0.0
  %345 = vmatprep.subr.mxu0 0.0
  %346 = vmatpush1.msra.mxu0 0.0
  %347 = vmatprep.subr.mxu0 0.0
  %348 = vmatpush1.msra.mxu0 0.0
  %349 = vmatprep.subr.mxu0 0.0
  %350 = vmatpush1.msra.mxu0 0.0
  %351 = vmatprep.subr.mxu0 0.0
  %352 = vmatpush1.msra.mxu0 0.0
  %353 = vmatprep.subr.mxu0 0.0
  %354 = vmatpush1.msra.mxu0 0.0
  %355 = vmatprep.subr.mxu0 0.0
  %356 = vmatpush1.msra.mxu0 0.0
  %357 = vmatprep.subr.mxu0 0.0
  %358 = vmatpush1.msra.mxu0 0.0
  %359 = vmatprep.subr.mxu0 0.0
  %360 = vmatpush1.msra.mxu0 0.0
  %361 = vmatprep.subr.mxu0 0.0
  %362 = vmatpush1.msra.mxu0 0.0
  %363 = vmatprep.subr.mxu0 0.0
  %364 = vmatpush1.msra.mxu0 0.0
  %365 = vmatprep.mubr.f32.mxu0 0.0
  %366 = vmatmul.mubr.f32.gmra.mrb[0].mxu0 %v289
  %v367 = vpop.f32.mrb[0].mxu0
  %v368 = vadd.f32 %v138, %v367
  %v369 = vpop.f32.mrb[0].mxu0
  %v370 = vadd.f32 %v140, %v369
  %371 = vdwg.mxu0
  %372 = vmatprep.subr.mxu0 %v297
  %373 = vmatpush1.msra.mxu0 %v295
  %374 = vmatprep.subr.mxu0 0.0
  %375 = vmatpush1.msra.mxu0 0.0
  %376 = vmatprep.subr.mxu0 0.0
  %377 = vmatpush1.msra.mxu0 0.0
  %378 = vmatprep.subr.mxu0 0.0
  %379 = vmatpush1.msra.mxu0 0.0
  %380 = vmatprep.subr.mxu0 0.0
  %381 = vmatpush1.msra.mxu0 0.0
  %382 = vmatprep.subr.mxu0 0.0
  %383 = vmatpush1.msra.mxu0 0.0
  %384 = vmatprep.subr.mxu0 0.0
  %385 = vmatpush1.msra.mxu0 0.0
  %386 = vmatprep.subr.mxu0 0.0
  %387 = vmatpush1.msra.mxu0 0.0
  %388 = vmatprep.subr.mxu0 0.0
  %389 = vmatpush1.msra.mxu0 0.0
  %390 = vmatprep.subr.mxu0 0.0
  %391 = vmatpush1.msra.mxu0 0.0
  %392 = vmatprep.subr.mxu0 0.0
  %393 = vmatpush1.msra.mxu0 0.0
  %394 = vmatprep.subr.mxu0 0.0
  %395 = vmatpush1.msra.mxu0 0.0
  %396 = vmatprep.subr.mxu0 0.0
  %397 = vmatpush1.msra.mxu0 0.0
  %398 = vmatprep.subr.mxu0 0.0
  %399 = vmatpush1.msra.mxu0 0.0
  %400 = vmatprep.subr.mxu0 0.0
  %401 = vmatpush1.msra.mxu0 0.0
  %402 = vmatprep.subr.mxu0 0.0
  %403 = vmatpush1.msra.mxu0 0.0
  %404 = vmatprep.subr.mxu0 0.0
  %405 = vmatpush1.msra.mxu0 0.0
  %406 = vmatprep.subr.mxu0 0.0
  %407 = vmatpush1.msra.mxu0 0.0
  %408 = vmatprep.subr.mxu0 0.0
  %409 = vmatpush1.msra.mxu0 0.0
  %410 = vmatprep.subr.mxu0 0.0
  %411 = vmatpush1.msra.mxu0 0.0
  %412 = vmatprep.subr.mxu0 0.0
  %413 = vmatpush1.msra.mxu0 0.0
  %414 = vmatprep.subr.mxu0 0.0
  %415 = vmatpush1.msra.mxu0 0.0
  %416 = vmatprep.subr.mxu0 0.0
  %417 = vmatpush1.msra.mxu0 0.0
  %418 = vmatprep.subr.mxu0 0.0
  %419 = vmatpush1.msra.mxu0 0.0
  %420 = vmatprep.subr.mxu0 0.0
  %421 = vmatpush1.msra.mxu0 0.0
  %422 = vmatprep.subr.mxu0 0.0
  %423 = vmatpush1.msra.mxu0 0.0
  %424 = vmatprep.subr.mxu0 0.0
  %425 = vmatpush1.msra.mxu0 0.0
  %426 = vmatprep.subr.mxu0 0.0
  %427 = vmatpush1.msra.mxu0 0.0
  %428 = vmatprep.subr.mxu0 0.0
  %429 = vmatpush1.msra.mxu0 0.0
  %430 = vmatprep.subr.mxu0 0.0
  %431 = vmatpush1.msra.mxu0 0.0
  %432 = vmatprep.subr.mxu0 0.0
  %433 = vmatpush1.msra.mxu0 0.0
  %434 = vmatprep.subr.mxu0 0.0
  %435 = vmatpush1.msra.mxu0 0.0
  %436 = vmatprep.mubr.f32.mxu0 0.0
  %437 = vmatmul.mubr.f32.gmra.mrb[0].mxu0 %v289
  %v438 = vpop.f32.mrb[0].mxu0
  %v439 = vadd.f32 %v209, %v438
  %v440 = vpop.f32.mrb[0].mxu0
  %v441 = vadd.f32 %v211, %v440
  %442 = vdwg.mxu0
  %443 = vmatprep.subr.mxu0 0.0
  %444 = vmatpush1.msra.mxu0 %v299
  %445 = vmatprep.subr.mxu0 0.0
  %446 = vmatpush1.msra.mxu0 0.0
  %447 = vmatprep.subr.mxu0 0.0
  %448 = vmatpush1.msra.mxu0 0.0
  %449 = vmatprep.subr.mxu0 0.0
  %450 = vmatpush1.msra.mxu0 0.0
  %451 = vmatprep.subr.mxu0 0.0
  %452 = vmatpush1.msra.mxu0 0.0
  %453 = vmatprep.subr.mxu0 0.0
  %454 = vmatpush1.msra.mxu0 0.0
  %455 = vmatprep.subr.mxu0 0.0
  %456 = vmatpush1.msra.mxu0 0.0
  %457 = vmatprep.subr.mxu0 0.0
  %458 = vmatpush1.msra.mxu0 0.0
  %459 = vmatprep.subr.mxu0 0.0
  %460 = vmatpush1.msra.mxu0 0.0
  %461 = vmatprep.subr.mxu0 0.0
  %462 = vmatpush1.msra.mxu0 0.0
  %463 = vmatprep.subr.mxu0 0.0
  %464 = vmatpush1.msra.mxu0 0.0
  %465 = vmatprep.subr.mxu0 0.0
  %466 = vmatpush1.msra.mxu0 0.0
  %467 = vmatprep.subr.mxu0 0.0
  %468 = vmatpush1.msra.mxu0 0.0
  %469 = vmatprep.subr.mxu0 0.0
  %470 = vmatpush1.msra.mxu0 0.0
  %471 = vmatprep.subr.mxu0 0.0
  %472 = vmatpush1.msra.mxu0 0.0
  %473 = vmatprep.subr.mxu0 0.0
  %474 = vmatpush1.msra.mxu0 0.0
  %475 = vmatprep.subr.mxu0 0.0
  %476 = vmatpush1.msra.mxu0 0.0
  %477 = vmatprep.subr.mxu0 0.0
  %478 = vmatpush1.msra.mxu0 0.0
  %479 = vmatprep.subr.mxu0 0.0
  %480 = vmatpush1.msra.mxu0 0.0
  %481 = vmatprep.subr.mxu0 0.0
  %482 = vmatpush1.msra.mxu0 0.0
  %483 = vmatprep.subr.mxu0 0.0
  %484 = vmatpush1.msra.mxu0 0.0
  %485 = vmatprep.subr.mxu0 0.0
  %486 = vmatpush1.msra.mxu0 0.0
  %487 = vmatprep.subr.mxu0 0.0
  %488 = vmatpush1.msra.mxu0 0.0
  %489 = vmatprep.subr.mxu0 0.0
  %490 = vmatpush1.msra.mxu0 0.0
  %491 = vmatprep.subr.mxu0 0.0
  %492 = vmatpush1.msra.mxu0 0.0
  %493 = vmatprep.subr.mxu0 0.0
  %494 = vmatpush1.msra.mxu0 0.0
  %495 = vmatprep.subr.mxu0 0.0
  %496 = vmatpush1.msra.mxu0 0.0
  %497 = vmatprep.subr.mxu0 0.0
  %498 = vmatpush1.msra.mxu0 0.0
  %499 = vmatprep.subr.mxu0 0.0
  %500 = vmatpush1.msra.mxu0 0.0
  %501 = vmatprep.subr.mxu0 0.0
  %502 = vmatpush1.msra.mxu0 0.0
  %503 = vmatprep.subr.mxu0 0.0
  %504 = vmatpush1.msra.mxu0 0.0
  %505 = vmatprep.subr.mxu0 0.0
  %506 = vmatpush1.msra.mxu0 0.0
  %507 = vmatprep.mubr.f32.mxu0 0.0
  %508 = vmatmul.mubr.f32.gmra.mrb[0].mxu0 %v289
  %v509 = vpop.f32.mrb[0].mxu0
  %v510 = vadd.f32 %v280, %v509
  %v511 = vpop.f32.mrb[0].mxu0
  %512 = vdwg.mxu0
  %v513 = vld [vmem:[%s0] sm:$0xff]
  %v514 = vld [vmem:[%s0 + $0x8] sm:$0xff]
  %v515 = vld [vmem:[%s0 + $0x10] sm:$0xff]
  %s516 = scalar_lea.vmem %s1, 16
  %v517 = vld [vmem:[%s516] sm:$0xff]
  %v521 = vcombine.high %v513, %v513
  %v522 = vcombine.high %v514, %v514
  %v523 = vcombine.high %v515, %v515
  %524 = vrot.lane.b32.xlu0 %v513, 126
  %v525 = vpop.permute.xlu0 %524
  %526 = vrot.lane.b32.xlu0 %v521, 126
  %v527 = vpop.permute.xlu0 %526
  %528 = vrot.lane.b32.xlu0 %v514, 126
  %v529 = vpop.permute.xlu0 %528
  %530 = vrot.lane.b32.xlu0 %v522, 126
  %v531 = vpop.permute.xlu0 %530
  %532 = vrot.lane.b32.xlu0 %v515, 126
  %v533 = vpop.permute.xlu0 %532
  %534 = vrot.lane.b32.xlu0 %v523, 126
  %v535 = vpop.permute.xlu0 %534
  %vm536 = vcmask 1031168
  %v537 = vsel %vm536, %v525, %v527
  %v538 = vsel %vm536, %v527, %v529
  %v539 = vsel %vm536, %v529, %v531
  %v540 = vsel %vm536, %v531, %v533
  %v541 = vsel %vm536, %v533, %v535
  %v543 = vsel %vm56, %v517, 0
  %v545 = vsel %vm60, %v537, 0
  %v547 = vsel %vm60, %v538, 0
  %v549 = vsel %vm60, %v539, 0
  %v551 = vsel %vm60, %v540, 0
  %v553 = vsel %vm60, %v541, 0
  %555 = vmatprep.subr.mxu0 %v547
  %556 = vmatpush1.msra.mxu0 %v545
  %557 = vmatprep.subr.mxu0 0.0
  %558 = vmatpush1.msra.mxu0 0.0
  %559 = vmatprep.subr.mxu0 0.0
  %560 = vmatpush1.msra.mxu0 0.0
  %561 = vmatprep.subr.mxu0 0.0
  %562 = vmatpush1.msra.mxu0 0.0
  %563 = vmatprep.subr.mxu0 0.0
  %564 = vmatpush1.msra.mxu0 0.0
  %565 = vmatprep.subr.mxu0 0.0
  %566 = vmatpush1.msra.mxu0 0.0
  %567 = vmatprep.subr.mxu0 0.0
  %568 = vmatpush1.msra.mxu0 0.0
  %569 = vmatprep.subr.mxu0 0.0
  %570 = vmatpush1.msra.mxu0 0.0
  %571 = vmatprep.subr.mxu0 0.0
  %572 = vmatpush1.msra.mxu0 0.0
  %573 = vmatprep.subr.mxu0 0.0
  %574 = vmatpush1.msra.mxu0 0.0
  %575 = vmatprep.subr.mxu0 0.0
  %576 = vmatpush1.msra.mxu0 0.0
  %577 = vmatprep.subr.mxu0 0.0
  %578 = vmatpush1.msra.mxu0 0.0
  %579 = vmatprep.subr.mxu0 0.0
  %580 = vmatpush1.msra.mxu0 0.0
  %581 = vmatprep.subr.mxu0 0.0
  %582 = vmatpush1.msra.mxu0 0.0
  %583 = vmatprep.subr.mxu0 0.0
  %584 = vmatpush1.msra.mxu0 0.0
  %585 = vmatprep.subr.mxu0 0.0
  %586 = vmatpush1.msra.mxu0 0.0
  %587 = vmatprep.subr.mxu0 0.0
  %588 = vmatpush1.msra.mxu0 0.0
  %589 = vmatprep.subr.mxu0 0.0
  %590 = vmatpush1.msra.mxu0 0.0
  %591 = vmatprep.subr.mxu0 0.0
  %592 = vmatpush1.msra.mxu0 0.0
  %593 = vmatprep.subr.mxu0 0.0
  %594 = vmatpush1.msra.mxu0 0.0
  %595 = vmatprep.subr.mxu0 0.0
  %596 = vmatpush1.msra.mxu0 0.0
  %597 = vmatprep.subr.mxu0 0.0
  %598 = vmatpush1.msra.mxu0 0.0
  %599 = vmatprep.subr.mxu0 0.0
  %600 = vmatpush1.msra.mxu0 0.0
  %601 = vmatprep.subr.mxu0 0.0
  %602 = vmatpush1.msra.mxu0 0.0
  %603 = vmatprep.subr.mxu0 0.0
  %604 = vmatpush1.msra.mxu0 0.0
  %605 = vmatprep.subr.mxu0 0.0
  %606 = vmatpush1.msra.mxu0 0.0
  %607 = vmatprep.subr.mxu0 0.0
  %608 = vmatpush1.msra.mxu0 0.0
  %609 = vmatprep.subr.mxu0 0.0
  %610 = vmatpush1.msra.mxu0 0.0
  %611 = vmatprep.subr.mxu0 0.0
  %612 = vmatpush1.msra.mxu0 0.0
  %613 = vmatprep.subr.mxu0 0.0
  %614 = vmatpush1.msra.mxu0 0.0
  %615 = vmatprep.subr.mxu0 0.0
  %616 = vmatpush1.msra.mxu0 0.0
  %617 = vmatprep.subr.mxu0 0.0
  %618 = vmatpush1.msra.mxu0 0.0
  %619 = vmatprep.mubr.f32.mxu0 0.0
  %620 = vmatmul.mubr.f32.gmra.mrb[0].mxu0 %v543
  %v621 = vpop.f32.mrb[0].mxu0
  %v622 = vadd.f32 0.0, %v621
  %v623 = vpop.f32.mrb[0].mxu0
  %v624 = vadd.f32 0.0, %v623
  %625 = vdwg.mxu0
  %626 = vmatprep.subr.mxu0 %v551
  %627 = vmatpush1.msra.mxu0 %v549
  %628 = vmatprep.subr.mxu0 0.0
  %629 = vmatpush1.msra.mxu0 0.0
  %630 = vmatprep.subr.mxu0 0.0
  %631 = vmatpush1.msra.mxu0 0.0
  %632 = vmatprep.subr.mxu0 0.0
  %633 = vmatpush1.msra.mxu0 0.0
  %634 = vmatprep.subr.mxu0 0.0
  %635 = vmatpush1.msra.mxu0 0.0
  %636 = vmatprep.subr.mxu0 0.0
  %637 = vmatpush1.msra.mxu0 0.0
  %638 = vmatprep.subr.mxu0 0.0
  %639 = vmatpush1.msra.mxu0 0.0
  %640 = vmatprep.subr.mxu0 0.0
  %641 = vmatpush1.msra.mxu0 0.0
  %642 = vmatprep.subr.mxu0 0.0
  %643 = vmatpush1.msra.mxu0 0.0
  %644 = vmatprep.subr.mxu0 0.0
  %645 = vmatpush1.msra.mxu0 0.0
  %646 = vmatprep.subr.mxu0 0.0
  %647 = vmatpush1.msra.mxu0 0.0
  %648 = vmatprep.subr.mxu0 0.0
  %649 = vmatpush1.msra.mxu0 0.0
  %650 = vmatprep.subr.mxu0 0.0
  %651 = vmatpush1.msra.mxu0 0.0
  %652 = vmatprep.subr.mxu0 0.0
  %653 = vmatpush1.msra.mxu0 0.0
  %654 = vmatprep.subr.mxu0 0.0
  %655 = vmatpush1.msra.mxu0 0.0
  %656 = vmatprep.subr.mxu0 0.0
  %657 = vmatpush1.msra.mxu0 0.0
  %658 = vmatprep.subr.mxu0 0.0
  %659 = vmatpush1.msra.mxu0 0.0
  %660 = vmatprep.subr.mxu0 0.0
  %661 = vmatpush1.msra.mxu0 0.0
  %662 = vmatprep.subr.mxu0 0.0
  %663 = vmatpush1.msra.mxu0 0.0
  %664 = vmatprep.subr.mxu0 0.0
  %665 = vmatpush1.msra.mxu0 0.0
  %666 = vmatprep.subr.mxu0 0.0
  %667 = vmatpush1.msra.mxu0 0.0
  %668 = vmatprep.subr.mxu0 0.0
  %669 = vmatpush1.msra.mxu0 0.0
  %670 = vmatprep.subr.mxu0 0.0
  %671 = vmatpush1.msra.mxu0 0.0
  %672 = vmatprep.subr.mxu0 0.0
  %673 = vmatpush1.msra.mxu0 0.0
  %674 = vmatprep.subr.mxu0 0.0
  %675 = vmatpush1.msra.mxu0 0.0
  %676 = vmatprep.subr.mxu0 0.0
  %677 = vmatpush1.msra.mxu0 0.0
  %678 = vmatprep.subr.mxu0 0.0
  %679 = vmatpush1.msra.mxu0 0.0
  %680 = vmatprep.subr.mxu0 0.0
  %681 = vmatpush1.msra.mxu0 0.0
  %682 = vmatprep.subr.mxu0 0.0
  %683 = vmatpush1.msra.mxu0 0.0
  %684 = vmatprep.subr.mxu0 0.0
  %685 = vmatpush1.msra.mxu0 0.0
  %686 = vmatprep.subr.mxu0 0.0
  %687 = vmatpush1.msra.mxu0 0.0
  %688 = vmatprep.subr.mxu0 0.0
  %689 = vmatpush1.msra.mxu0 0.0
  %690 = vmatprep.mubr.f32.mxu0 0.0
  %691 = vmatmul.mubr.f32.gmra.mrb[0].mxu0 %v543
  %v692 = vpop.f32.mrb[0].mxu0
  %v693 = vadd.f32 0.0, %v692
  %v694 = vpop.f32.mrb[0].mxu0
  %v695 = vadd.f32 0.0, %v694
  %696 = vdwg.mxu0
  %697 = vmatprep.subr.mxu0 0.0
  %698 = vmatpush1.msra.mxu0 %v553
  %699 = vmatprep.subr.mxu0 0.0
  %700 = vmatpush1.msra.mxu0 0.0
  %701 = vmatprep.subr.mxu0 0.0
  %702 = vmatpush1.msra.mxu0 0.0
  %703 = vmatprep.subr.mxu0 0.0
  %704 = vmatpush1.msra.mxu0 0.0
  %705 = vmatprep.subr.mxu0 0.0
  %706 = vmatpush1.msra.mxu0 0.0
  %707 = vmatprep.subr.mxu0 0.0
  %708 = vmatpush1.msra.mxu0 0.0
  %709 = vmatprep.subr.mxu0 0.0
  %710 = vmatpush1.msra.mxu0 0.0
  %711 = vmatprep.subr.mxu0 0.0
  %712 = vmatpush1.msra.mxu0 0.0
  %713 = vmatprep.subr.mxu0 0.0
  %714 = vmatpush1.msra.mxu0 0.0
  %715 = vmatprep.subr.mxu0 0.0
  %716 = vmatpush1.msra.mxu0 0.0
  %717 = vmatprep.subr.mxu0 0.0
  %718 = vmatpush1.msra.mxu0 0.0
  %719 = vmatprep.subr.mxu0 0.0
  %720 = vmatpush1.msra.mxu0 0.0
  %721 = vmatprep.subr.mxu0 0.0
  %722 = vmatpush1.msra.mxu0 0.0
  %723 = vmatprep.subr.mxu0 0.0
  %724 = vmatpush1.msra.mxu0 0.0
  %725 = vmatprep.subr.mxu0 0.0
  %726 = vmatpush1.msra.mxu0 0.0
  %727 = vmatprep.subr.mxu0 0.0
  %728 = vmatpush1.msra.mxu0 0.0
  %729 = vmatprep.subr.mxu0 0.0
  %730 = vmatpush1.msra.mxu0 0.0
  %731 = vmatprep.subr.mxu0 0.0
  %732 = vmatpush1.msra.mxu0 0.0
  %733 = vmatprep.subr.mxu0 0.0
  %734 = vmatpush1.msra.mxu0 0.0
  %735 = vmatprep.subr.mxu0 0.0
  %736 = vmatpush1.msra.mxu0 0.0
  %737 = vmatprep.subr.mxu0 0.0
  %738 = vmatpush1.msra.mxu0 0.0
  %739 = vmatprep.subr.mxu0 0.0
  %740 = vmatpush1.msra.mxu0 0.0
  %741 = vmatprep.subr.mxu0 0.0
  %742 = vmatpush1.msra.mxu0 0.0
  %743 = vmatprep.subr.mxu0 0.0
  %744 = vmatpush1.msra.mxu0 0.0
  %745 = vmatprep.subr.mxu0 0.0
  %746 = vmatpush1.msra.mxu0 0.0
  %747 = vmatprep.subr.mxu0 0.0
  %748 = vmatpush1.msra.mxu0 0.0
  %749 = vmatprep.subr.mxu0 0.0
  %750 = vmatpush1.msra.mxu0 0.0
  %751 = vmatprep.subr.mxu0 0.0
  %752 = vmatpush1.msra.mxu0 0.0
  %753 = vmatprep.subr.mxu0 0.0
  %754 = vmatpush1.msra.mxu0 0.0
  %755 = vmatprep.subr.mxu0 0.0
  %756 = vmatpush1.msra.mxu0 0.0
  %757 = vmatprep.subr.mxu0 0.0
  %758 = vmatpush1.msra.mxu0 0.0
  %759 = vmatprep.subr.mxu0 0.0
  %760 = vmatpush1.msra.mxu0 0.0
  %761 = vmatprep.mubr.f32.mxu0 0.0
  %762 = vmatmul.mubr.f32.gmra.mrb[0].mxu0 %v543
  %v763 = vpop.f32.mrb[0].mxu0
  %v764 = vadd.f32 0.0, %v763
  %v765 = vpop.f32.mrb[0].mxu0
  %766 = vdwg.mxu0
  %v767 = vadd.f32 %v368, %v622
  %v768 = vadd.f32 %v370, %v624
  %v769 = vadd.f32 %v439, %v693
  %v770 = vadd.f32 %v441, %v695
  %v771 = vadd.f32 %v510, %v764
  %v772 = vld [vmem:[%s0] sm:$0xff]
  %v773 = vld [vmem:[%s0 + $0x8] sm:$0xff]
  %v774 = vld [vmem:[%s0 + $0x10] sm:$0xff]
  %s775 = scalar_lea.vmem %s1, 24
  %v776 = vld [vmem:[%s775] sm:$0xff]
  %v780 = vcombine.high %v772, %v772
  %v781 = vcombine.high %v773, %v773
  %v782 = vcombine.high %v774, %v774
  %783 = vrot.lane.b32.xlu0 %v772, 110
  %v784 = vpop.permute.xlu0 %783
  %785 = vrot.lane.b32.xlu0 %v780, 110
  %v786 = vpop.permute.xlu0 %785
  %787 = vrot.lane.b32.xlu0 %v773, 110
  %v788 = vpop.permute.xlu0 %787
  %789 = vrot.lane.b32.xlu0 %v781, 110
  %v790 = vpop.permute.xlu0 %789
  %791 = vrot.lane.b32.xlu0 %v774, 110
  %v792 = vpop.permute.xlu0 %791
  %793 = vrot.lane.b32.xlu0 %v782, 110
  %v794 = vpop.permute.xlu0 %793
  %vm795 = vcmask 900096
  %v796 = vsel %vm795, %v784, %v786
  %v797 = vsel %vm795, %v786, %v788
  %v798 = vsel %vm795, %v788, %v790
  %v799 = vsel %vm795, %v790, %v792
  %v800 = vsel %vm795, %v792, %v794
  %v802 = vsel %vm56, %v776, 0
  %v804 = vsel %vm60, %v796, 0
  %v806 = vsel %vm60, %v797, 0
  %v808 = vsel %vm60, %v798, 0
  %v810 = vsel %vm60, %v799, 0
  %v812 = vsel %vm60, %v800, 0
  %814 = vmatprep.subr.mxu0 %v806
  %815 = vmatpush1.msra.mxu0 %v804
  %816 = vmatprep.subr.mxu0 0.0
  %817 = vmatpush1.msra.mxu0 0.0
  %818 = vmatprep.subr.mxu0 0.0
  %819 = vmatpush1.msra.mxu0 0.0
  %820 = vmatprep.subr.mxu0 0.0
  %821 = vmatpush1.msra.mxu0 0.0
  %822 = vmatprep.subr.mxu0 0.0
  %823 = vmatpush1.msra.mxu0 0.0
  %824 = vmatprep.subr.mxu0 0.0
  %825 = vmatpush1.msra.mxu0 0.0
  %826 = vmatprep.subr.mxu0 0.0
  %827 = vmatpush1.msra.mxu0 0.0
  %828 = vmatprep.subr.mxu0 0.0
  %829 = vmatpush1.msra.mxu0 0.0
  %830 = vmatprep.subr.mxu0 0.0
  %831 = vmatpush1.msra.mxu0 0.0
  %832 = vmatprep.subr.mxu0 0.0
  %833 = vmatpush1.msra.mxu0 0.0
  %834 = vmatprep.subr.mxu0 0.0
  %835 = vmatpush1.msra.mxu0 0.0
  %836 = vmatprep.subr.mxu0 0.0
  %837 = vmatpush1.msra.mxu0 0.0
  %838 = vmatprep.subr.mxu0 0.0
  %839 = vmatpush1.msra.mxu0 0.0
  %840 = vmatprep.subr.mxu0 0.0
  %841 = vmatpush1.msra.mxu0 0.0
  %842 = vmatprep.subr.mxu0 0.0
  %843 = vmatpush1.msra.mxu0 0.0
  %844 = vmatprep.subr.mxu0 0.0
  %845 = vmatpush1.msra.mxu0 0.0
  %846 = vmatprep.subr.mxu0 0.0
  %847 = vmatpush1.msra.mxu0 0.0
  %848 = vmatprep.subr.mxu0 0.0
  %849 = vmatpush1.msra.mxu0 0.0
  %850 = vmatprep.subr.mxu0 0.0
  %851 = vmatpush1.msra.mxu0 0.0
  %852 = vmatprep.subr.mxu0 0.0
  %853 = vmatpush1.msra.mxu0 0.0
  %854 = vmatprep.subr.mxu0 0.0
  %855 = vmatpush1.msra.mxu0 0.0
  %856 = vmatprep.subr.mxu0 0.0
  %857 = vmatpush1.msra.mxu0 0.0
  %858 = vmatprep.subr.mxu0 0.0
  %859 = vmatpush1.msra.mxu0 0.0
  %860 = vmatprep.subr.mxu0 0.0
  %861 = vmatpush1.msra.mxu0 0.0
  %862 = vmatprep.subr.mxu0 0.0
  %863 = vmatpush1.msra.mxu0 0.0
  %864 = vmatprep.subr.mxu0 0.0
  %865 = vmatpush1.msra.mxu0 0.0
  %866 = vmatprep.subr.mxu0 0.0
  %867 = vmatpush1.msra.mxu0 0.0
  %868 = vmatprep.subr.mxu0 0.0
  %869 = vmatpush1.msra.mxu0 0.0
  %870 = vmatprep.subr.mxu0 0.0
  %871 = vmatpush1.msra.mxu0 0.0
  %872 = vmatprep.subr.mxu0 0.0
  %873 = vmatpush1.msra.mxu0 0.0
  %874 = vmatprep.subr.mxu0 0.0
  %875 = vmatpush1.msra.mxu0 0.0
  %876 = vmatprep.subr.mxu0 0.0
  %877 = vmatpush1.msra.mxu0 0.0
  %878 = vmatprep.mubr.f32.mxu0 0.0
  %879 = vmatmul.mubr.f32.gmra.mrb[0].mxu0 %v802
  %v880 = vpop.f32.mrb[0].mxu0
  %v881 = vadd.f32 0.0, %v880
  %v882 = vpop.f32.mrb[0].mxu0
  %v883 = vadd.f32 0.0, %v882
  %884 = vdwg.mxu0
  %885 = vmatprep.subr.mxu0 %v810
  %886 = vmatpush1.msra.mxu0 %v808
  %887 = vmatprep.subr.mxu0 0.0
  %888 = vmatpush1.msra.mxu0 0.0
  %889 = vmatprep.subr.mxu0 0.0
  %890 = vmatpush1.msra.mxu0 0.0
  %891 = vmatprep.subr.mxu0 0.0
  %892 = vmatpush1.msra.mxu0 0.0
  %893 = vmatprep.subr.mxu0 0.0
  %894 = vmatpush1.msra.mxu0 0.0
  %895 = vmatprep.subr.mxu0 0.0
  %896 = vmatpush1.msra.mxu0 0.0
  %897 = vmatprep.subr.mxu0 0.0
  %898 = vmatpush1.msra.mxu0 0.0
  %899 = vmatprep.subr.mxu0 0.0
  %900 = vmatpush1.msra.mxu0 0.0
  %901 = vmatprep.subr.mxu0 0.0
  %902 = vmatpush1.msra.mxu0 0.0
  %903 = vmatprep.subr.mxu0 0.0
  %904 = vmatpush1.msra.mxu0 0.0
  %905 = vmatprep.subr.mxu0 0.0
  %906 = vmatpush1.msra.mxu0 0.0
  %907 = vmatprep.subr.mxu0 0.0
  %908 = vmatpush1.msra.mxu0 0.0
  %909 = vmatprep.subr.mxu0 0.0
  %910 = vmatpush1.msra.mxu0 0.0
  %911 = vmatprep.subr.mxu0 0.0
  %912 = vmatpush1.msra.mxu0 0.0
  %913 = vmatprep.subr.mxu0 0.0
  %914 = vmatpush1.msra.mxu0 0.0
  %915 = vmatprep.subr.mxu0 0.0
  %916 = vmatpush1.msra.mxu0 0.0
  %917 = vmatprep.subr.mxu0 0.0
  %918 = vmatpush1.msra.mxu0 0.0
  %919 = vmatprep.subr.mxu0 0.0
  %920 = vmatpush1.msra.mxu0 0.0
  %921 = vmatprep.subr.mxu0 0.0
  %922 = vmatpush1.msra.mxu0 0.0
  %923 = vmatprep.subr.mxu0 0.0
  %924 = vmatpush1.msra.mxu0 0.0
  %925 = vmatprep.subr.mxu0 0.0
  %926 = vmatpush1.msra.mxu0 0.0
  %927 = vmatprep.subr.mxu0 0.0
  %928 = vmatpush1.msra.mxu0 0.0
  %929 = vmatprep.subr.mxu0 0.0
  %930 = vmatpush1.msra.mxu0 0.0
  %931 = vmatprep.subr.mxu0 0.0
  %932 = vmatpush1.msra.mxu0 0.0
  %933 = vmatprep.subr.mxu0 0.0
  %934 = vmatpush1.msra.mxu0 0.0
  %935 = vmatprep.subr.mxu0 0.0
  %936 = vmatpush1.msra.mxu0 0.0
  %937 = vmatprep.subr.mxu0 0.0
  %938 = vmatpush1.msra.mxu0 0.0
  %939 = vmatprep.subr.mxu0 0.0
  %940 = vmatpush1.msra.mxu0 0.0
  %941 = vmatprep.subr.mxu0 0.0
  %942 = vmatpush1.msra.mxu0 0.0
  %943 = vmatprep.subr.mxu0 0.0
  %944 = vmatpush1.msra.mxu0 0.0
  %945 = vmatprep.subr.mxu0 0.0
  %946 = vmatpush1.msra.mxu0 0.0
  %947 = vmatprep.subr.mxu0 0.0
  %948 = vmatpush1.msra.mxu0 0.0
  %949 = vmatprep.mubr.f32.mxu0 0.0
  %950 = vmatmul.mubr.f32.gmra.mrb[0].mxu0 %v802
  %v951 = vpop.f32.mrb[0].mxu0
  %v952 = vadd.f32 0.0, %v951
  %v953 = vpop.f32.mrb[0].mxu0
  %v954 = vadd.f32 0.0, %v953
  %955 = vdwg.mxu0
  %956 = vmatprep.subr.mxu0 0.0
  %957 = vmatpush1.msra.mxu0 %v812
  %958 = vmatprep.subr.mxu0 0.0
  %959 = vmatpush1.msra.mxu0 0.0
  %960 = vmatprep.subr.mxu0 0.0
  %961 = vmatpush1.msra.mxu0 0.0
  %962 = vmatprep.subr.mxu0 0.0
  %963 = vmatpush1.msra.mxu0 0.0
  %964 = vmatprep.subr.mxu0 0.0
  %965 = vmatpush1.msra.mxu0 0.0
  %966 = vmatprep.subr.mxu0 0.0
  %967 = vmatpush1.msra.mxu0 0.0
  %968 = vmatprep.subr.mxu0 0.0
  %969 = vmatpush1.msra.mxu0 0.0
  %970 = vmatprep.subr.mxu0 0.0
  %971 = vmatpush1.msra.mxu0 0.0
  %972 = vmatprep.subr.mxu0 0.0
  %973 = vmatpush1.msra.mxu0 0.0
  %974 = vmatprep.subr.mxu0 0.0
  %975 = vmatpush1.msra.mxu0 0.0
  %976 = vmatprep.subr.mxu0 0.0
  %977 = vmatpush1.msra.mxu0 0.0
  %978 = vmatprep.subr.mxu0 0.0
  %979 = vmatpush1.msra.mxu0 0.0
  %980 = vmatprep.subr.mxu0 0.0
  %981 = vmatpush1.msra.mxu0 0.0
  %982 = vmatprep.subr.mxu0 0.0
  %983 = vmatpush1.msra.mxu0 0.0
  %984 = vmatprep.subr.mxu0 0.0
  %985 = vmatpush1.msra.mxu0 0.0
  %986 = vmatprep.subr.mxu0 0.0
  %987 = vmatpush1.msra.mxu0 0.0
  %988 = vmatprep.subr.mxu0 0.0
  %989 = vmatpush1.msra.mxu0 0.0
  %990 = vmatprep.subr.mxu0 0.0
  %991 = vmatpush1.msra.mxu0 0.0
  %992 = vmatprep.subr.mxu0 0.0
  %993 = vmatpush1.msra.mxu0 0.0
  %994 = vmatprep.subr.mxu0 0.0
  %995 = vmatpush1.msra.mxu0 0.0
  %996 = vmatprep.subr.mxu0 0.0
  %997 = vmatpush1.msra.mxu0 0.0
  %998 = vmatprep.subr.mxu0 0.0
  %999 = vmatpush1.msra.mxu0 0.0
  %1000 = vmatprep.subr.mxu0 0.0
  %1001 = vmatpush1.msra.mxu0 0.0
  %1002 = vmatprep.subr.mxu0 0.0
  %1003 = vmatpush1.msra.mxu0 0.0
  %1004 = vmatprep.subr.mxu0 0.0
  %1005 = vmatpush1.msra.mxu0 0.0
  %1006 = vmatprep.subr.mxu0 0.0
  %1007 = vmatpush1.msra.mxu0 0.0
  %1008 = vmatprep.subr.mxu0 0.0
  %1009 = vmatpush1.msra.mxu0 0.0
  %1010 = vmatprep.subr.mxu0 0.0
  %1011 = vmatpush1.msra.mxu0 0.0
  %1012 = vmatprep.subr.mxu0 0.0
  %1013 = vmatpush1.msra.mxu0 0.0
  %1014 = vmatprep.subr.mxu0 0.0
  %1015 = vmatpush1.msra.mxu0 0.0
  %1016 = vmatprep.subr.mxu0 0.0
  %1017 = vmatpush1.msra.mxu0 0.0
  %1018 = vmatprep.subr.mxu0 0.0
  %1019 = vmatpush1.msra.mxu0 0.0
  %1020 = vmatprep.mubr.f32.mxu0 0.0
  %1021 = vmatmul.mubr.f32.gmra.mrb[0].mxu0 %v802
  %v1022 = vpop.f32.mrb[0].mxu0
  %v1023 = vadd.f32 0.0, %v1022
  %v1024 = vpop.f32.mrb[0].mxu0
  %1025 = vdwg.mxu0
  %v1026 = vadd.f32 %v767, %v881
  %v1027 = vadd.f32 %v768, %v883
  %v1028 = vadd.f32 %v769, %v952
  %v1029 = vadd.f32 %v770, %v954
  %v1030 = vadd.f32 %v771, %v1023
  %v1031 = vld [vmem:[%s0] sm:$0xff]
  %v1032 = vld [vmem:[%s0 + $0x8] sm:$0xff]
  %v1033 = vld [vmem:[%s0 + $0x10] sm:$0xff]
  %s1034 = scalar_lea.vmem %s1, 32
  %v1035 = vld [vmem:[%s1034] sm:$0xff]
  %v1039 = vcombine.high %v1031, %v1031
  %v1040 = vcombine.high %v1032, %v1032
  %v1041 = vcombine.high %v1033, %v1033
  %1042 = vrot.lane.b32.xlu0 %v1031, 109
  %v1043 = vpop.permute.xlu0 %1042
  %1044 = vrot.lane.b32.xlu0 %v1039, 109
  %v1045 = vpop.permute.xlu0 %1044
  %1046 = vrot.lane.b32.xlu0 %v1032, 109
  %v1047 = vpop.permute.xlu0 %1046
  %1048 = vrot.lane.b32.xlu0 %v1040, 109
  %v1049 = vpop.permute.xlu0 %1048
  %1050 = vrot.lane.b32.xlu0 %v1033, 109
  %v1051 = vpop.permute.xlu0 %1050
  %1052 = vrot.lane.b32.xlu0 %v1041, 109
  %v1053 = vpop.permute.xlu0 %1052
  %vm1054 = vcmask 891904
  %v1055 = vsel %vm1054, %v1043, %v1045
  %v1056 = vsel %vm1054, %v1045, %v1047
  %v1057 = vsel %vm1054, %v1047, %v1049
  %v1058 = vsel %vm1054, %v1049, %v1051
  %v1059 = vsel %vm1054, %v1051, %v1053
  %v1061 = vsel %vm56, %v1035, 0
  %v1063 = vsel %vm60, %v1055, 0
  %v1065 = vsel %vm60, %v1056, 0
  %v1067 = vsel %vm60, %v1057, 0
  %v1069 = vsel %vm60, %v1058, 0
  %v1071 = vsel %vm60, %v1059, 0
  %1073 = vmatprep.subr.mxu0 %v1065
  %1074 = vmatpush1.msra.mxu0 %v1063
  %1075 = vmatprep.subr.mxu0 0.0
  %1076 = vmatpush1.msra.mxu0 0.0
  %1077 = vmatprep.subr.mxu0 0.0
  %1078 = vmatpush1.msra.mxu0 0.0
  %1079 = vmatprep.subr.mxu0 0.0
  %1080 = vmatpush1.msra.mxu0 0.0
  %1081 = vmatprep.subr.mxu0 0.0
  %1082 = vmatpush1.msra.mxu0 0.0
  %1083 = vmatprep.subr.mxu0 0.0
  %1084 = vmatpush1.msra.mxu0 0.0
  %1085 = vmatprep.subr.mxu0 0.0
  %1086 = vmatpush1.msra.mxu0 0.0
  %1087 = vmatprep.subr.mxu0 0.0
  %1088 = vmatpush1.msra.mxu0 0.0
  %1089 = vmatprep.subr.mxu0 0.0
  %1090 = vmatpush1.msra.mxu0 0.0
  %1091 = vmatprep.subr.mxu0 0.0
  %1092 = vmatpush1.msra.mxu0 0.0
  %1093 = vmatprep.subr.mxu0 0.0
  %1094 = vmatpush1.msra.mxu0 0.0
  %1095 = vmatprep.subr.mxu0 0.0
  %1096 = vmatpush1.msra.mxu0 0.0
  %1097 = vmatprep.subr.mxu0 0.0
  %1098 = vmatpush1.msra.mxu0 0.0
  %1099 = vmatprep.subr.mxu0 0.0
  %1100 = vmatpush1.msra.mxu0 0.0
  %1101 = vmatprep.subr.mxu0 0.0
  %1102 = vmatpush1.msra.mxu0 0.0
  %1103 = vmatprep.subr.mxu0 0.0
  %1104 = vmatpush1.msra.mxu0 0.0
  %1105 = vmatprep.subr.mxu0 0.0
  %1106 = vmatpush1.msra.mxu0 0.0
  %1107 = vmatprep.subr.mxu0 0.0
  %1108 = vmatpush1.msra.mxu0 0.0
  %1109 = vmatprep.subr.mxu0 0.0
  %1110 = vmatpush1.msra.mxu0 0.0
  %1111 = vmatprep.subr.mxu0 0.0
  %1112 = vmatpush1.msra.mxu0 0.0
  %1113 = vmatprep.subr.mxu0 0.0
  %1114 = vmatpush1.msra.mxu0 0.0
  %1115 = vmatprep.subr.mxu0 0.0
  %1116 = vmatpush1.msra.mxu0 0.0
  %1117 = vmatprep.subr.mxu0 0.0
  %1118 = vmatpush1.msra.mxu0 0.0
  %1119 = vmatprep.subr.mxu0 0.0
  %1120 = vmatpush1.msra.mxu0 0.0
  %1121 = vmatprep.subr.mxu0 0.0
  %1122 = vmatpush1.msra.mxu0 0.0
  %1123 = vmatprep.subr.mxu0 0.0
  %1124 = vmatpush1.msra.mxu0 0.0
  %1125 = vmatprep.subr.mxu0 0.0
  %1126 = vmatpush1.msra.mxu0 0.0
  %1127 = vmatprep.subr.mxu0 0.0
  %1128 = vmatpush1.msra.mxu0 0.0
  %1129 = vmatprep.subr.mxu0 0.0
  %1130 = vmatpush1.msra.mxu0 0.0
  %1131 = vmatprep.subr.mxu0 0.0
  %1132 = vmatpush1.msra.mxu0 0.0
  %1133 = vmatprep.subr.mxu0 0.0
  %1134 = vmatpush1.msra.mxu0 0.0
  %1135 = vmatprep.subr.mxu0 0.0
  %1136 = vmatpush1.msra.mxu0 0.0
  %1137 = vmatprep.mubr.f32.mxu0 0.0
  %1138 = vmatmul.mubr.f32.gmra.mrb[0].mxu0 %v1061
  %v1139 = vpop.f32.mrb[0].mxu0
  %v1140 = vadd.f32 0.0, %v1139
  %v1141 = vpop.f32.mrb[0].mxu0
  %v1142 = vadd.f32 0.0, %v1141
  %1143 = vdwg.mxu0
  %1144 = vmatprep.subr.mxu0 %v1069
  %1145 = vmatpush1.msra.mxu0 %v1067
  %1146 = vmatprep.subr.mxu0 0.0
  %1147 = vmatpush1.msra.mxu0 0.0
  %1148 = vmatprep.subr.mxu0 0.0
  %1149 = vmatpush1.msra.mxu0 0.0
  %1150 = vmatprep.subr.mxu0 0.0
  %1151 = vmatpush1.msra.mxu0 0.0
  %1152 = vmatprep.subr.mxu0 0.0
  %1153 = vmatpush1.msra.mxu0 0.0
  %1154 = vmatprep.subr.mxu0 0.0
  %1155 = vmatpush1.msra.mxu0 0.0
  %1156 = vmatprep.subr.mxu0 0.0
  %1157 = vmatpush1.msra.mxu0 0.0
  %1158 = vmatprep.subr.mxu0 0.0
  %1159 = vmatpush1.msra.mxu0 0.0
  %1160 = vmatprep.subr.mxu0 0.0
  %1161 = vmatpush1.msra.mxu0 0.0
  %1162 = vmatprep.subr.mxu0 0.0
  %1163 = vmatpush1.msra.mxu0 0.0
  %1164 = vmatprep.subr.mxu0 0.0
  %1165 = vmatpush1.msra.mxu0 0.0
  %1166 = vmatprep.subr.mxu0 0.0
  %1167 = vmatpush1.msra.mxu0 0.0
  %1168 = vmatprep.subr.mxu0 0.0
  %1169 = vmatpush1.msra.mxu0 0.0
  %1170 = vmatprep.subr.mxu0 0.0
  %1171 = vmatpush1.msra.mxu0 0.0
  %1172 = vmatprep.subr.mxu0 0.0
  %1173 = vmatpush1.msra.mxu0 0.0
  %1174 = vmatprep.subr.mxu0 0.0
  %1175 = vmatpush1.msra.mxu0 0.0
  %1176 = vmatprep.subr.mxu0 0.0
  %1177 = vmatpush1.msra.mxu0 0.0
  %1178 = vmatprep.subr.mxu0 0.0
  %1179 = vmatpush1.msra.mxu0 0.0
  %1180 = vmatprep.subr.mxu0 0.0
  %1181 = vmatpush1.msra.mxu0 0.0
  %1182 = vmatprep.subr.mxu0 0.0
  %1183 = vmatpush1.msra.mxu0 0.0
  %1184 = vmatprep.subr.mxu0 0.0
  %1185 = vmatpush1.msra.mxu0 0.0
  %1186 = vmatprep.subr.mxu0 0.0
  %1187 = vmatpush1.msra.mxu0 0.0
  %1188 = vmatprep.subr.mxu0 0.0
  %1189 = vmatpush1.msra.mxu0 0.0
  %1190 = vmatprep.subr.mxu0 0.0
  %1191 = vmatpush1.msra.mxu0 0.0
  %1192 = vmatprep.subr.mxu0 0.0
  %1193 = vmatpush1.msra.mxu0 0.0
  %1194 = vmatprep.subr.mxu0 0.0
  %1195 = vmatpush1.msra.mxu0 0.0
  %1196 = vmatprep.subr.mxu0 0.0
  %1197 = vmatpush1.msra.mxu0 0.0
  %1198 = vmatprep.subr.mxu0 0.0
  %1199 = vmatpush1.msra.mxu0 0.0
  %1200 = vmatprep.subr.mxu0 0.0
  %1201 = vmatpush1.msra.mxu0 0.0
  %1202 = vmatprep.subr.mxu0 0.0
  %1203 = vmatpush1.msra.mxu0 0.0
  %1204 = vmatprep.subr.mxu0 0.0
  %1205 = vmatpush1.msra.mxu0 0.0
  %1206 = vmatprep.subr.mxu0 0.0
  %1207 = vmatpush1.msra.mxu0 0.0
  %1208 = vmatprep.mubr.f32.mxu0 0.0
  %1209 = vmatmul.mubr.f32.gmra.mrb[0].mxu0 %v1061
  %v1210 = vpop.f32.mrb[0].mxu0
  %v1211 = vadd.f32 0.0, %v1210
  %v1212 = vpop.f32.mrb[0].mxu0
  %v1213 = vadd.f32 0.0, %v1212
  %1214 = vdwg.mxu0
  %1215 = vmatprep.subr.mxu0 0.0
  %1216 = vmatpush1.msra.mxu0 %v1071
  %1217 = vmatprep.subr.mxu0 0.0
  %1218 = vmatpush1.msra.mxu0 0.0
  %1219 = vmatprep.subr.mxu0 0.0
  %1220 = vmatpush1.msra.mxu0 0.0
  %1221 = vmatprep.subr.mxu0 0.0
  %1222 = vmatpush1.msra.mxu0 0.0
  %1223 = vmatprep.subr.mxu0 0.0
  %1224 = vmatpush1.msra.mxu0 0.0
  %1225 = vmatprep.subr.mxu0 0.0
  %1226 = vmatpush1.msra.mxu0 0.0
  %1227 = vmatprep.subr.mxu0 0.0
  %1228 = vmatpush1.msra.mxu0 0.0
  %1229 = vmatprep.subr.mxu0 0.0
  %1230 = vmatpush1.msra.mxu0 0.0
  %1231 = vmatprep.subr.mxu0 0.0
  %1232 = vmatpush1.msra.mxu0 0.0
  %1233 = vmatprep.subr.mxu0 0.0
  %1234 = vmatpush1.msra.mxu0 0.0
  %1235 = vmatprep.subr.mxu0 0.0
  %1236 = vmatpush1.msra.mxu0 0.0
  %1237 = vmatprep.subr.mxu0 0.0
  %1238 = vmatpush1.msra.mxu0 0.0
  %1239 = vmatprep.subr.mxu0 0.0
  %1240 = vmatpush1.msra.mxu0 0.0
  %1241 = vmatprep.subr.mxu0 0.0
  %1242 = vmatpush1.msra.mxu0 0.0
  %1243 = vmatprep.subr.mxu0 0.0
  %1244 = vmatpush1.msra.mxu0 0.0
  %1245 = vmatprep.subr.mxu0 0.0
  %1246 = vmatpush1.msra.mxu0 0.0
  %1247 = vmatprep.subr.mxu0 0.0
  %1248 = vmatpush1.msra.mxu0 0.0
  %1249 = vmatprep.subr.mxu0 0.0
  %1250 = vmatpush1.msra.mxu0 0.0
  %1251 = vmatprep.subr.mxu0 0.0
  %1252 = vmatpush1.msra.mxu0 0.0
  %1253 = vmatprep.subr.mxu0 0.0
  %1254 = vmatpush1.msra.mxu0 0.0
  %1255 = vmatprep.subr.mxu0 0.0
  %1256 = vmatpush1.msra.mxu0 0.0
  %1257 = vmatprep.subr.mxu0 0.0
  %1258 = vmatpush1.msra.mxu0 0.0
  %1259 = vmatprep.subr.mxu0 0.0
  %1260 = vmatpush1.msra.mxu0 0.0
  %1261 = vmatprep.subr.mxu0 0.0
  %1262 = vmatpush1.msra.mxu0 0.0
  %1263 = vmatprep.subr.mxu0 0.0
  %1264 = vmatpush1.msra.mxu0 0.0
  %1265 = vmatprep.subr.mxu0 0.0
  %1266 = vmatpush1.msra.mxu0 0.0
  %1267 = vmatprep.subr.mxu0 0.0
  %1268 = vmatpush1.msra.mxu0 0.0
  %1269 = vmatprep.subr.mxu0 0.0
  %1270 = vmatpush1.msra.mxu0 0.0
  %1271 = vmatprep.subr.mxu0 0.0
  %1272 = vmatpush1.msra.mxu0 0.0
  %1273 = vmatprep.subr.mxu0 0.0
  %1274 = vmatpush1.msra.mxu0 0.0
  %1275 = vmatprep.subr.mxu0 0.0
  %1276 = vmatpush1.msra.mxu0 0.0
  %1277 = vmatprep.subr.mxu0 0.0
  %1278 = vmatpush1.msra.mxu0 0.0
  %1279 = vmatprep.mubr.f32.mxu0 0.0
  %1280 = vmatmul.mubr.f32.gmra.mrb[0].mxu0 %v1061
  %v1281 = vpop.f32.mrb[0].mxu0
  %v1282 = vadd.f32 0.0, %v1281
  %v1283 = vpop.f32.mrb[0].mxu0
  %1284 = vdwg.mxu0
  %v1285 = vadd.f32 %v1026, %v1140
  %v1286 = vadd.f32 %v1027, %v1142
  %v1287 = vadd.f32 %v1028, %v1211
  %v1288 = vadd.f32 %v1029, %v1213
  %v1289 = vadd.f32 %v1030, %v1282
  %v1290 = vld [vmem:[%s0] sm:$0xff]
  %v1291 = vld [vmem:[%s0 + $0x8] sm:$0xff]
  %v1292 = vld [vmem:[%s0 + $0x10] sm:$0xff]
  %s1293 = scalar_lea.vmem %s1, 40
  %v1294 = vld [vmem:[%s1293] sm:$0xff]
  %v1298 = vcombine.high %v1290, %v1290
  %v1299 = vcombine.high %v1291, %v1291
  %v1300 = vcombine.high %v1292, %v1292
  %1301 = vrot.lane.b32.xlu0 %v1290, 108
  %v1302 = vpop.permute.xlu0 %1301
  %1303 = vrot.lane.b32.xlu0 %v1298, 108
  %v1304 = vpop.permute.xlu0 %1303
  %1305 = vrot.lane.b32.xlu0 %v1291, 108
  %v1306 = vpop.permute.xlu0 %1305
  %1307 = vrot.lane.b32.xlu0 %v1299, 108
  %v1308 = vpop.permute.xlu0 %1307
  %1309 = vrot.lane.b32.xlu0 %v1292, 108
  %v1310 = vpop.permute.xlu0 %1309
  %1311 = vrot.lane.b32.xlu0 %v1300, 108
  %v1312 = vpop.permute.xlu0 %1311
  %vm1313 = vcmask 883712
  %v1314 = vsel %vm1313, %v1302, %v1304
  %v1315 = vsel %vm1313, %v1304, %v1306
  %v1316 = vsel %vm1313, %v1306, %v1308
  %v1317 = vsel %vm1313, %v1308, %v1310
  %v1318 = vsel %vm1313, %v1310, %v1312
  %v1320 = vsel %vm56, %v1294, 0
  %v1322 = vsel %vm60, %v1314, 0
  %v1324 = vsel %vm60, %v1315, 0
  %v1326 = vsel %vm60, %v1316, 0
  %v1328 = vsel %vm60, %v1317, 0
  %v1330 = vsel %vm60, %v1318, 0
  %1332 = vmatprep.subr.mxu0 %v1324
  %1333 = vmatpush1.msra.mxu0 %v1322
  %1334 = vmatprep.subr.mxu0 0.0
  %1335 = vmatpush1.msra.mxu0 0.0
  %1336 = vmatprep.subr.mxu0 0.0
  %1337 = vmatpush1.msra.mxu0 0.0
  %1338 = vmatprep.subr.mxu0 0.0
  %1339 = vmatpush1.msra.mxu0 0.0
  %1340 = vmatprep.subr.mxu0 0.0
  %1341 = vmatpush1.msra.mxu0 0.0
  %1342 = vmatprep.subr.mxu0 0.0
  %1343 = vmatpush1.msra.mxu0 0.0
  %1344 = vmatprep.subr.mxu0 0.0
  %1345 = vmatpush1.msra.mxu0 0.0
  %1346 = vmatprep.subr.mxu0 0.0
  %1347 = vmatpush1.msra.mxu0 0.0
  %1348 = vmatprep.subr.mxu0 0.0
  %1349 = vmatpush1.msra.mxu0 0.0
  %1350 = vmatprep.subr.mxu0 0.0
  %1351 = vmatpush1.msra.mxu0 0.0
  %1352 = vmatprep.subr.mxu0 0.0
  %1353 = vmatpush1.msra.mxu0 0.0
  %1354 = vmatprep.subr.mxu0 0.0
  %1355 = vmatpush1.msra.mxu0 0.0
  %1356 = vmatprep.subr.mxu0 0.0
  %1357 = vmatpush1.msra.mxu0 0.0
  %1358 = vmatprep.subr.mxu0 0.0
  %1359 = vmatpush1.msra.mxu0 0.0
  %1360 = vmatprep.subr.mxu0 0.0
  %1361 = vmatpush1.msra.mxu0 0.0
  %1362 = vmatprep.subr.mxu0 0.0
  %1363 = vmatpush1.msra.mxu0 0.0
  %1364 = vmatprep.subr.mxu0 0.0
  %1365 = vmatpush1.msra.mxu0 0.0
  %1366 = vmatprep.subr.mxu0 0.0
  %1367 = vmatpush1.msra.mxu0 0.0
  %1368 = vmatprep.subr.mxu0 0.0
  %1369 = vmatpush1.msra.mxu0 0.0
  %1370 = vmatprep.subr.mxu0 0.0
  %1371 = vmatpush1.msra.mxu0 0.0
  %1372 = vmatprep.subr.mxu0 0.0
  %1373 = vmatpush1.msra.mxu0 0.0
  %1374 = vmatprep.subr.mxu0 0.0
  %1375 = vmatpush1.msra.mxu0 0.0
  %1376 = vmatprep.subr.mxu0 0.0
  %1377 = vmatpush1.msra.mxu0 0.0
  %1378 = vmatprep.subr.mxu0 0.0
  %1379 = vmatpush1.msra.mxu0 0.0
  %1380 = vmatprep.subr.mxu0 0.0
  %1381 = vmatpush1.msra.mxu0 0.0
  %1382 = vmatprep.subr.mxu0 0.0
  %1383 = vmatpush1.msra.mxu0 0.0
  %1384 = vmatprep.subr.mxu0 0.0
  %1385 = vmatpush1.msra.mxu0 0.0
  %1386 = vmatprep.subr.mxu0 0.0
  %1387 = vmatpush1.msra.mxu0 0.0
  %1388 = vmatprep.subr.mxu0 0.0
  %1389 = vmatpush1.msra.mxu0 0.0
  %1390 = vmatprep.subr.mxu0 0.0
  %1391 = vmatpush1.msra.mxu0 0.0
  %1392 = vmatprep.subr.mxu0 0.0
  %1393 = vmatpush1.msra.mxu0 0.0
  %1394 = vmatprep.subr.mxu0 0.0
  %1395 = vmatpush1.msra.mxu0 0.0
  %1396 = vmatprep.mubr.f32.mxu0 0.0
  %1397 = vmatmul.mubr.f32.gmra.mrb[0].mxu0 %v1320
  %v1398 = vpop.f32.mrb[0].mxu0
  %v1399 = vadd.f32 0.0, %v1398
  %v1400 = vpop.f32.mrb[0].mxu0
  %v1401 = vadd.f32 0.0, %v1400
  %1402 = vdwg.mxu0
  %1403 = vmatprep.subr.mxu0 %v1328
  %1404 = vmatpush1.msra.mxu0 %v1326
  %1405 = vmatprep.subr.mxu0 0.0
  %1406 = vmatpush1.msra.mxu0 0.0
  %1407 = vmatprep.subr.mxu0 0.0
  %1408 = vmatpush1.msra.mxu0 0.0
  %1409 = vmatprep.subr.mxu0 0.0
  %1410 = vmatpush1.msra.mxu0 0.0
  %1411 = vmatprep.subr.mxu0 0.0
  %1412 = vmatpush1.msra.mxu0 0.0
  %1413 = vmatprep.subr.mxu0 0.0
  %1414 = vmatpush1.msra.mxu0 0.0
  %1415 = vmatprep.subr.mxu0 0.0
  %1416 = vmatpush1.msra.mxu0 0.0
  %1417 = vmatprep.subr.mxu0 0.0
  %1418 = vmatpush1.msra.mxu0 0.0
  %1419 = vmatprep.subr.mxu0 0.0
  %1420 = vmatpush1.msra.mxu0 0.0
  %1421 = vmatprep.subr.mxu0 0.0
  %1422 = vmatpush1.msra.mxu0 0.0
  %1423 = vmatprep.subr.mxu0 0.0
  %1424 = vmatpush1.msra.mxu0 0.0
  %1425 = vmatprep.subr.mxu0 0.0
  %1426 = vmatpush1.msra.mxu0 0.0
  %1427 = vmatprep.subr.mxu0 0.0
  %1428 = vmatpush1.msra.mxu0 0.0
  %1429 = vmatprep.subr.mxu0 0.0
  %1430 = vmatpush1.msra.mxu0 0.0
  %1431 = vmatprep.subr.mxu0 0.0
  %1432 = vmatpush1.msra.mxu0 0.0
  %1433 = vmatprep.subr.mxu0 0.0
  %1434 = vmatpush1.msra.mxu0 0.0
  %1435 = vmatprep.subr.mxu0 0.0
  %1436 = vmatpush1.msra.mxu0 0.0
  %1437 = vmatprep.subr.mxu0 0.0
  %1438 = vmatpush1.msra.mxu0 0.0
  %1439 = vmatprep.subr.mxu0 0.0
  %1440 = vmatpush1.msra.mxu0 0.0
  %1441 = vmatprep.subr.mxu0 0.0
  %1442 = vmatpush1.msra.mxu0 0.0
  %1443 = vmatprep.subr.mxu0 0.0
  %1444 = vmatpush1.msra.mxu0 0.0
  %1445 = vmatprep.subr.mxu0 0.0
  %1446 = vmatpush1.msra.mxu0 0.0
  %1447 = vmatprep.subr.mxu0 0.0
  %1448 = vmatpush1.msra.mxu0 0.0
  %1449 = vmatprep.subr.mxu0 0.0
  %1450 = vmatpush1.msra.mxu0 0.0
  %1451 = vmatprep.subr.mxu0 0.0
  %1452 = vmatpush1.msra.mxu0 0.0
  %1453 = vmatprep.subr.mxu0 0.0
  %1454 = vmatpush1.msra.mxu0 0.0
  %1455 = vmatprep.subr.mxu0 0.0
  %1456 = vmatpush1.msra.mxu0 0.0
  %1457 = vmatprep.subr.mxu0 0.0
  %1458 = vmatpush1.msra.mxu0 0.0
  %1459 = vmatprep.subr.mxu0 0.0
  %1460 = vmatpush1.msra.mxu0 0.0
  %1461 = vmatprep.subr.mxu0 0.0
  %1462 = vmatpush1.msra.mxu0 0.0
  %1463 = vmatprep.subr.mxu0 0.0
  %1464 = vmatpush1.msra.mxu0 0.0
  %1465 = vmatprep.subr.mxu0 0.0
  %1466 = vmatpush1.msra.mxu0 0.0
  %1467 = vmatprep.mubr.f32.mxu0 0.0
  %1468 = vmatmul.mubr.f32.gmra.mrb[0].mxu0 %v1320
  %v1469 = vpop.f32.mrb[0].mxu0
  %v1470 = vadd.f32 0.0, %v1469
  %v1471 = vpop.f32.mrb[0].mxu0
  %v1472 = vadd.f32 0.0, %v1471
  %1473 = vdwg.mxu0
  %1474 = vmatprep.subr.mxu0 0.0
  %1475 = vmatpush1.msra.mxu0 %v1330
  %1476 = vmatprep.subr.mxu0 0.0
  %1477 = vmatpush1.msra.mxu0 0.0
  %1478 = vmatprep.subr.mxu0 0.0
  %1479 = vmatpush1.msra.mxu0 0.0
  %1480 = vmatprep.subr.mxu0 0.0
  %1481 = vmatpush1.msra.mxu0 0.0
  %1482 = vmatprep.subr.mxu0 0.0
  %1483 = vmatpush1.msra.mxu0 0.0
  %1484 = vmatprep.subr.mxu0 0.0
  %1485 = vmatpush1.msra.mxu0 0.0
  %1486 = vmatprep.subr.mxu0 0.0
  %1487 = vmatpush1.msra.mxu0 0.0
  %1488 = vmatprep.subr.mxu0 0.0
  %1489 = vmatpush1.msra.mxu0 0.0
  %1490 = vmatprep.subr.mxu0 0.0
  %1491 = vmatpush1.msra.mxu0 0.0
  %1492 = vmatprep.subr.mxu0 0.0
  %1493 = vmatpush1.msra.mxu0 0.0
  %1494 = vmatprep.subr.mxu0 0.0
  %1495 = vmatpush1.msra.mxu0 0.0
  %1496 = vmatprep.subr.mxu0 0.0
  %1497 = vmatpush1.msra.mxu0 0.0
  %1498 = vmatprep.subr.mxu0 0.0
  %1499 = vmatpush1.msra.mxu0 0.0
  %1500 = vmatprep.subr.mxu0 0.0
  %1501 = vmatpush1.msra.mxu0 0.0
  %1502 = vmatprep.subr.mxu0 0.0
  %1503 = vmatpush1.msra.mxu0 0.0
  %1504 = vmatprep.subr.mxu0 0.0
  %1505 = vmatpush1.msra.mxu0 0.0
  %1506 = vmatprep.subr.mxu0 0.0
  %1507 = vmatpush1.msra.mxu0 0.0
  %1508 = vmatprep.subr.mxu0 0.0
  %1509 = vmatpush1.msra.mxu0 0.0
  %1510 = vmatprep.subr.mxu0 0.0
  %1511 = vmatpush1.msra.mxu0 0.0
  %1512 = vmatprep.subr.mxu0 0.0
  %1513 = vmatpush1.msra.mxu0 0.0
  %1514 = vmatprep.subr.mxu0 0.0
  %1515 = vmatpush1.msra.mxu0 0.0
  %1516 = vmatprep.subr.mxu0 0.0
  %1517 = vmatpush1.msra.mxu0 0.0
  %1518 = vmatprep.subr.mxu0 0.0
  %1519 = vmatpush1.msra.mxu0 0.0
  %1520 = vmatprep.subr.mxu0 0.0
  %1521 = vmatpush1.msra.mxu0 0.0
  %1522 = vmatprep.subr.mxu0 0.0
  %1523 = vmatpush1.msra.mxu0 0.0
  %1524 = vmatprep.subr.mxu0 0.0
  %1525 = vmatpush1.msra.mxu0 0.0
  %1526 = vmatprep.subr.mxu0 0.0
  %1527 = vmatpush1.msra.mxu0 0.0
  %1528 = vmatprep.subr.mxu0 0.0
  %1529 = vmatpush1.msra.mxu0 0.0
  %1530 = vmatprep.subr.mxu0 0.0
  %1531 = vmatpush1.msra.mxu0 0.0
  %1532 = vmatprep.subr.mxu0 0.0
  %1533 = vmatpush1.msra.mxu0 0.0
  %1534 = vmatprep.subr.mxu0 0.0
  %1535 = vmatpush1.msra.mxu0 0.0
  %1536 = vmatprep.subr.mxu0 0.0
  %1537 = vmatpush1.msra.mxu0 0.0
  %1538 = vmatprep.mubr.f32.mxu0 0.0
  %1539 = vmatmul.mubr.f32.gmra.mrb[0].mxu0 %v1320
  %v1540 = vpop.f32.mrb[0].mxu0
  %v1541 = vadd.f32 0.0, %v1540
  %v1542 = vpop.f32.mrb[0].mxu0
  %1543 = vdwg.mxu0
  %v1544 = vadd.f32 %v1285, %v1399
  %v1545 = vadd.f32 %v1286, %v1401
  %v1546 = vadd.f32 %v1287, %v1470
  %v1547 = vadd.f32 %v1288, %v1472
  %v1548 = vadd.f32 %v1289, %v1541
  %v1549 = vld [vmem:[%s0] sm:$0xff]
  %v1550 = vld [vmem:[%s0 + $0x8] sm:$0xff]
  %v1551 = vld [vmem:[%s0 + $0x10] sm:$0xff]
  %s1552 = scalar_lea.vmem %s1, 48
  %v1553 = vld [vmem:[%s1552] sm:$0xff]
  %v1557 = vcombine.high %v1549, %v1549
  %v1558 = vcombine.high %v1550, %v1550
  %v1559 = vcombine.high %v1551, %v1551
  %1560 = vrot.lane.b32.xlu0 %v1549, 92
  %v1561 = vpop.permute.xlu0 %1560
  %1562 = vrot.lane.b32.xlu0 %v1557, 92
  %v1563 = vpop.permute.xlu0 %1562
  %1564 = vrot.lane.b32.xlu0 %v1550, 92
  %v1565 = vpop.permute.xlu0 %1564
  %1566 = vrot.lane.b32.xlu0 %v1558, 92
  %v1567 = vpop.permute.xlu0 %1566
  %1568 = vrot.lane.b32.xlu0 %v1551, 92
  %v1569 = vpop.permute.xlu0 %1568
  %1570 = vrot.lane.b32.xlu0 %v1559, 92
  %v1571 = vpop.permute.xlu0 %1570
  %vm1572 = vcmask 752640
  %v1573 = vsel %vm1572, %v1561, %v1563
  %v1574 = vsel %vm1572, %v1563, %v1565
  %v1575 = vsel %vm1572, %v1565, %v1567
  %v1576 = vsel %vm1572, %v1567, %v1569
  %v1577 = vsel %vm1572, %v1569, %v1571
  %v1579 = vsel %vm56, %v1553, 0
  %v1581 = vsel %vm60, %v1573, 0
  %v1583 = vsel %vm60, %v1574, 0
  %v1585 = vsel %vm60, %v1575, 0
  %v1587 = vsel %vm60, %v1576, 0
  %v1589 = vsel %vm60, %v1577, 0
  %1591 = vmatprep.subr.mxu0 %v1583
  %1592 = vmatpush1.msra.mxu0 %v1581
  %1593 = vmatprep.subr.mxu0 0.0
  %1594 = vmatpush1.msra.mxu0 0.0
  %1595 = vmatprep.subr.mxu0 0.0
  %1596 = vmatpush1.msra.mxu0 0.0
  %1597 = vmatprep.subr.mxu0 0.0
  %1598 = vmatpush1.msra.mxu0 0.0
  %1599 = vmatprep.subr.mxu0 0.0
  %1600 = vmatpush1.msra.mxu0 0.0
  %1601 = vmatprep.subr.mxu0 0.0
  %1602 = vmatpush1.msra.mxu0 0.0
  %1603 = vmatprep.subr.mxu0 0.0
  %1604 = vmatpush1.msra.mxu0 0.0
  %1605 = vmatprep.subr.mxu0 0.0
  %1606 = vmatpush1.msra.mxu0 0.0
  %1607 = vmatprep.subr.mxu0 0.0
  %1608 = vmatpush1.msra.mxu0 0.0
  %1609 = vmatprep.subr.mxu0 0.0
  %1610 = vmatpush1.msra.mxu0 0.0
  %1611 = vmatprep.subr.mxu0 0.0
  %1612 = vmatpush1.msra.mxu0 0.0
  %1613 = vmatprep.subr.mxu0 0.0
  %1614 = vmatpush1.msra.mxu0 0.0
  %1615 = vmatprep.subr.mxu0 0.0
  %1616 = vmatpush1.msra.mxu0 0.0
  %1617 = vmatprep.subr.mxu0 0.0
  %1618 = vmatpush1.msra.mxu0 0.0
  %1619 = vmatprep.subr.mxu0 0.0
  %1620 = vmatpush1.msra.mxu0 0.0
  %1621 = vmatprep.subr.mxu0 0.0
  %1622 = vmatpush1.msra.mxu0 0.0
  %1623 = vmatprep.subr.mxu0 0.0
  %1624 = vmatpush1.msra.mxu0 0.0
  %1625 = vmatprep.subr.mxu0 0.0
  %1626 = vmatpush1.msra.mxu0 0.0
  %1627 = vmatprep.subr.mxu0 0.0
  %1628 = vmatpush1.msra.mxu0 0.0
  %1629 = vmatprep.subr.mxu0 0.0
  %1630 = vmatpush1.msra.mxu0 0.0
  %1631 = vmatprep.subr.mxu0 0.0
  %1632 = vmatpush1.msra.mxu0 0.0
  %1633 = vmatprep.subr.mxu0 0.0
  %1634 = vmatpush1.msra.mxu0 0.0
  %1635 = vmatprep.subr.mxu0 0.0
  %1636 = vmatpush1.msra.mxu0 0.0
  %1637 = vmatprep.subr.mxu0 0.0
  %1638 = vmatpush1.msra.mxu0 0.0
  %1639 = vmatprep.subr.mxu0 0.0
  %1640 = vmatpush1.msra.mxu0 0.0
  %1641 = vmatprep.subr.mxu0 0.0
  %1642 = vmatpush1.msra.mxu0 0.0
  %1643 = vmatprep.subr.mxu0 0.0
  %1644 = vmatpush1.msra.mxu0 0.0
  %1645 = vmatprep.subr.mxu0 0.0
  %1646 = vmatpush1.msra.mxu0 0.0
  %1647 = vmatprep.subr.mxu0 0.0
  %1648 = vmatpush1.msra.mxu0 0.0
  %1649 = vmatprep.subr.mxu0 0.0
  %1650 = vmatpush1.msra.mxu0 0.0
  %1651 = vmatprep.subr.mxu0 0.0
  %1652 = vmatpush1.msra.mxu0 0.0
  %1653 = vmatprep.subr.mxu0 0.0
  %1654 = vmatpush1.msra.mxu0 0.0
  %1655 = vmatprep.mubr.f32.mxu0 0.0
  %1656 = vmatmul.mubr.f32.gmra.mrb[0].mxu0 %v1579
  %v1657 = vpop.f32.mrb[0].mxu0
  %v1658 = vadd.f32 0.0, %v1657
  %v1659 = vpop.f32.mrb[0].mxu0
  %v1660 = vadd.f32 0.0, %v1659
  %1661 = vdwg.mxu0
  %1662 = vmatprep.subr.mxu0 %v1587
  %1663 = vmatpush1.msra.mxu0 %v1585
  %1664 = vmatprep.subr.mxu0 0.0
  %1665 = vmatpush1.msra.mxu0 0.0
  %1666 = vmatprep.subr.mxu0 0.0
  %1667 = vmatpush1.msra.mxu0 0.0
  %1668 = vmatprep.subr.mxu0 0.0
  %1669 = vmatpush1.msra.mxu0 0.0
  %1670 = vmatprep.subr.mxu0 0.0
  %1671 = vmatpush1.msra.mxu0 0.0
  %1672 = vmatprep.subr.mxu0 0.0
  %1673 = vmatpush1.msra.mxu0 0.0
  %1674 = vmatprep.subr.mxu0 0.0
  %1675 = vmatpush1.msra.mxu0 0.0
  %1676 = vmatprep.subr.mxu0 0.0
  %1677 = vmatpush1.msra.mxu0 0.0
  %1678 = vmatprep.subr.mxu0 0.0
  %1679 = vmatpush1.msra.mxu0 0.0
  %1680 = vmatprep.subr.mxu0 0.0
  %1681 = vmatpush1.msra.mxu0 0.0
  %1682 = vmatprep.subr.mxu0 0.0
  %1683 = vmatpush1.msra.mxu0 0.0
  %1684 = vmatprep.subr.mxu0 0.0
  %1685 = vmatpush1.msra.mxu0 0.0
  %1686 = vmatprep.subr.mxu0 0.0
  %1687 = vmatpush1.msra.mxu0 0.0
  %1688 = vmatprep.subr.mxu0 0.0
  %1689 = vmatpush1.msra.mxu0 0.0
  %1690 = vmatprep.subr.mxu0 0.0
  %1691 = vmatpush1.msra.mxu0 0.0
  %1692 = vmatprep.subr.mxu0 0.0
  %1693 = vmatpush1.msra.mxu0 0.0
  %1694 = vmatprep.subr.mxu0 0.0
  %1695 = vmatpush1.msra.mxu0 0.0
  %1696 = vmatprep.subr.mxu0 0.0
  %1697 = vmatpush1.msra.mxu0 0.0
  %1698 = vmatprep.subr.mxu0 0.0
  %1699 = vmatpush1.msra.mxu0 0.0
  %1700 = vmatprep.subr.mxu0 0.0
  %1701 = vmatpush1.msra.mxu0 0.0
  %1702 = vmatprep.subr.mxu0 0.0
  %1703 = vmatpush1.msra.mxu0 0.0
  %1704 = vmatprep.subr.mxu0 0.0
  %1705 = vmatpush1.msra.mxu0 0.0
  %1706 = vmatprep.subr.mxu0 0.0
  %1707 = vmatpush1.msra.mxu0 0.0
  %1708 = vmatprep.subr.mxu0 0.0
  %1709 = vmatpush1.msra.mxu0 0.0
  %1710 = vmatprep.subr.mxu0 0.0
  %1711 = vmatpush1.msra.mxu0 0.0
  %1712 = vmatprep.subr.mxu0 0.0
  %1713 = vmatpush1.msra.mxu0 0.0
  %1714 = vmatprep.subr.mxu0 0.0
  %1715 = vmatpush1.msra.mxu0 0.0
  %1716 = vmatprep.subr.mxu0 0.0
  %1717 = vmatpush1.msra.mxu0 0.0
  %1718 = vmatprep.subr.mxu0 0.0
  %1719 = vmatpush1.msra.mxu0 0.0
  %1720 = vmatprep.subr.mxu0 0.0
  %1721 = vmatpush1.msra.mxu0 0.0
  %1722 = vmatprep.subr.mxu0 0.0
  %1723 = vmatpush1.msra.mxu0 0.0
  %1724 = vmatprep.subr.mxu0 0.0
  %1725 = vmatpush1.msra.mxu0 0.0
  %1726 = vmatprep.mubr.f32.mxu0 0.0
  %1727 = vmatmul.mubr.f32.gmra.mrb[0].mxu0 %v1579
  %v1728 = vpop.f32.mrb[0].mxu0
  %v1729 = vadd.f32 0.0, %v1728
  %v1730 = vpop.f32.mrb[0].mxu0
  %v1731 = vadd.f32 0.0, %v1730
  %1732 = vdwg.mxu0
  %1733 = vmatprep.subr.mxu0 0.0
  %1734 = vmatpush1.msra.mxu0 %v1589
  %1735 = vmatprep.subr.mxu0 0.0
  %1736 = vmatpush1.msra.mxu0 0.0
  %1737 = vmatprep.subr.mxu0 0.0
  %1738 = vmatpush1.msra.mxu0 0.0
  %1739 = vmatprep.subr.mxu0 0.0
  %1740 = vmatpush1.msra.mxu0 0.0
  %1741 = vmatprep.subr.mxu0 0.0
  %1742 = vmatpush1.msra.mxu0 0.0
  %1743 = vmatprep.subr.mxu0 0.0
  %1744 = vmatpush1.msra.mxu0 0.0
  %1745 = vmatprep.subr.mxu0 0.0
  %1746 = vmatpush1.msra.mxu0 0.0
  %1747 = vmatprep.subr.mxu0 0.0
  %1748 = vmatpush1.msra.mxu0 0.0
  %1749 = vmatprep.subr.mxu0 0.0
  %1750 = vmatpush1.msra.mxu0 0.0
  %1751 = vmatprep.subr.mxu0 0.0
  %1752 = vmatpush1.msra.mxu0 0.0
  %1753 = vmatprep.subr.mxu0 0.0
  %1754 = vmatpush1.msra.mxu0 0.0
  %1755 = vmatprep.subr.mxu0 0.0
  %1756 = vmatpush1.msra.mxu0 0.0
  %1757 = vmatprep.subr.mxu0 0.0
  %1758 = vmatpush1.msra.mxu0 0.0
  %1759 = vmatprep.subr.mxu0 0.0
  %1760 = vmatpush1.msra.mxu0 0.0
  %1761 = vmatprep.subr.mxu0 0.0
  %1762 = vmatpush1.msra.mxu0 0.0
  %1763 = vmatprep.subr.mxu0 0.0
  %1764 = vmatpush1.msra.mxu0 0.0
  %1765 = vmatprep.subr.mxu0 0.0
  %1766 = vmatpush1.msra.mxu0 0.0
  %1767 = vmatprep.subr.mxu0 0.0
  %1768 = vmatpush1.msra.mxu0 0.0
  %1769 = vmatprep.subr.mxu0 0.0
  %1770 = vmatpush1.msra.mxu0 0.0
  %1771 = vmatprep.subr.mxu0 0.0
  %1772 = vmatpush1.msra.mxu0 0.0
  %1773 = vmatprep.subr.mxu0 0.0
  %1774 = vmatpush1.msra.mxu0 0.0
  %1775 = vmatprep.subr.mxu0 0.0
  %1776 = vmatpush1.msra.mxu0 0.0
  %1777 = vmatprep.subr.mxu0 0.0
  %1778 = vmatpush1.msra.mxu0 0.0
  %1779 = vmatprep.subr.mxu0 0.0
  %1780 = vmatpush1.msra.mxu0 0.0
  %1781 = vmatprep.subr.mxu0 0.0
  %1782 = vmatpush1.msra.mxu0 0.0
  %1783 = vmatprep.subr.mxu0 0.0
  %1784 = vmatpush1.msra.mxu0 0.0
  %1785 = vmatprep.subr.mxu0 0.0
  %1786 = vmatpush1.msra.mxu0 0.0
  %1787 = vmatprep.subr.mxu0 0.0
  %1788 = vmatpush1.msra.mxu0 0.0
  %1789 = vmatprep.subr.mxu0 0.0
  %1790 = vmatpush1.msra.mxu0 0.0
  %1791 = vmatprep.subr.mxu0 0.0
  %1792 = vmatpush1.msra.mxu0 0.0
  %1793 = vmatprep.subr.mxu0 0.0
  %1794 = vmatpush1.msra.mxu0 0.0
  %1795 = vmatprep.subr.mxu0 0.0
  %1796 = vmatpush1.msra.mxu0 0.0
  %1797 = vmatprep.mubr.f32.mxu0 0.0
  %1798 = vmatmul.mubr.f32.gmra.mrb[0].mxu0 %v1579
  %v1799 = vpop.f32.mrb[0].mxu0
  %v1800 = vadd.f32 0.0, %v1799
  %v1801 = vpop.f32.mrb[0].mxu0
  %1802 = vdwg.mxu0
  %v1803 = vadd.f32 %v1544, %v1658
  %v1804 = vadd.f32 %v1545, %v1660
  %v1805 = vadd.f32 %v1546, %v1729
  %v1806 = vadd.f32 %v1547, %v1731
  %v1807 = vadd.f32 %v1548, %v1800
  %v1808 = vld [vmem:[%s0] sm:$0xff]
  %v1809 = vld [vmem:[%s0 + $0x8] sm:$0xff]
  %v1810 = vld [vmem:[%s0 + $0x10] sm:$0xff]
  %s1811 = scalar_lea.vmem %s1, 56
  %v1812 = vld [vmem:[%s1811] sm:$0xff]
  %v1816 = vcombine.high %v1808, %v1808
  %v1817 = vcombine.high %v1809, %v1809
  %v1818 = vcombine.high %v1810, %v1810
  %1819 = vrot.lane.b32.xlu0 %v1808, 91
  %v1820 = vpop.permute.xlu0 %1819
  %1821 = vrot.lane.b32.xlu0 %v1816, 91
  %v1822 = vpop.permute.xlu0 %1821
  %1823 = vrot.lane.b32.xlu0 %v1809, 91
  %v1824 = vpop.permute.xlu0 %1823
  %1825 = vrot.lane.b32.xlu0 %v1817, 91
  %v1826 = vpop.permute.xlu0 %1825
  %1827 = vrot.lane.b32.xlu0 %v1810, 91
  %v1828 = vpop.permute.xlu0 %1827
  %1829 = vrot.lane.b32.xlu0 %v1818, 91
  %v1830 = vpop.permute.xlu0 %1829
  %vm1831 = vcmask 744448
  %v1832 = vsel %vm1831, %v1820, %v1822
  %v1833 = vsel %vm1831, %v1822, %v1824
  %v1834 = vsel %vm1831, %v1824, %v1826
  %v1835 = vsel %vm1831, %v1826, %v1828
  %v1836 = vsel %vm1831, %v1828, %v1830
  %v1838 = vsel %vm56, %v1812, 0
  %v1840 = vsel %vm60, %v1832, 0
  %v1842 = vsel %vm60, %v1833, 0
  %v1844 = vsel %vm60, %v1834, 0
  %v1846 = vsel %vm60, %v1835, 0
  %v1848 = vsel %vm60, %v1836, 0
  %1850 = vmatprep.subr.mxu0 %v1842
  %1851 = vmatpush1.msra.mxu0 %v1840
  %1852 = vmatprep.subr.mxu0 0.0
  %1853 = vmatpush1.msra.mxu0 0.0
  %1854 = vmatprep.subr.mxu0 0.0
  %1855 = vmatpush1.msra.mxu0 0.0
  %1856 = vmatprep.subr.mxu0 0.0
  %1857 = vmatpush1.msra.mxu0 0.0
  %1858 = vmatprep.subr.mxu0 0.0
  %1859 = vmatpush1.msra.mxu0 0.0
  %1860 = vmatprep.subr.mxu0 0.0
  %1861 = vmatpush1.msra.mxu0 0.0
  %1862 = vmatprep.subr.mxu0 0.0
  %1863 = vmatpush1.msra.mxu0 0.0
  %1864 = vmatprep.subr.mxu0 0.0
  %1865 = vmatpush1.msra.mxu0 0.0
  %1866 = vmatprep.subr.mxu0 0.0
  %1867 = vmatpush1.msra.mxu0 0.0
  %1868 = vmatprep.subr.mxu0 0.0
  %1869 = vmatpush1.msra.mxu0 0.0
  %1870 = vmatprep.subr.mxu0 0.0
  %1871 = vmatpush1.msra.mxu0 0.0
  %1872 = vmatprep.subr.mxu0 0.0
  %1873 = vmatpush1.msra.mxu0 0.0
  %1874 = vmatprep.subr.mxu0 0.0
  %1875 = vmatpush1.msra.mxu0 0.0
  %1876 = vmatprep.subr.mxu0 0.0
  %1877 = vmatpush1.msra.mxu0 0.0
  %1878 = vmatprep.subr.mxu0 0.0
  %1879 = vmatpush1.msra.mxu0 0.0
  %1880 = vmatprep.subr.mxu0 0.0
  %1881 = vmatpush1.msra.mxu0 0.0
  %1882 = vmatprep.subr.mxu0 0.0
  %1883 = vmatpush1.msra.mxu0 0.0
  %1884 = vmatprep.subr.mxu0 0.0
  %1885 = vmatpush1.msra.mxu0 0.0
  %1886 = vmatprep.subr.mxu0 0.0
  %1887 = vmatpush1.msra.mxu0 0.0
  %1888 = vmatprep.subr.mxu0 0.0
  %1889 = vmatpush1.msra.mxu0 0.0
  %1890 = vmatprep.subr.mxu0 0.0
  %1891 = vmatpush1.msra.mxu0 0.0
  %1892 = vmatprep.subr.mxu0 0.0
  %1893 = vmatpush1.msra.mxu0 0.0
  %1894 = vmatprep.subr.mxu0 0.0
  %1895 = vmatpush1.msra.mxu0 0.0
  %1896 = vmatprep.subr.mxu0 0.0
  %1897 = vmatpush1.msra.mxu0 0.0
  %1898 = vmatprep.subr.mxu0 0.0
  %1899 = vmatpush1.msra.mxu0 0.0
  %1900 = vmatprep.subr.mxu0 0.0
  %1901 = vmatpush1.msra.mxu0 0.0
  %1902 = vmatprep.subr.mxu0 0.0
  %1903 = vmatpush1.msra.mxu0 0.0
  %1904 = vmatprep.subr.mxu0 0.0
  %1905 = vmatpush1.msra.mxu0 0.0
  %1906 = vmatprep.subr.mxu0 0.0
  %1907 = vmatpush1.msra.mxu0 0.0
  %1908 = vmatprep.subr.mxu0 0.0
  %1909 = vmatpush1.msra.mxu0 0.0
  %1910 = vmatprep.subr.mxu0 0.0
  %1911 = vmatpush1.msra.mxu0 0.0
  %1912 = vmatprep.subr.mxu0 0.0
  %1913 = vmatpush1.msra.mxu0 0.0
  %1914 = vmatprep.mubr.f32.mxu0 0.0
  %1915 = vmatmul.mubr.f32.gmra.mrb[0].mxu0 %v1838
  %v1916 = vpop.f32.mrb[0].mxu0
  %v1917 = vadd.f32 0.0, %v1916
  %v1918 = vpop.f32.mrb[0].mxu0
  %v1919 = vadd.f32 0.0, %v1918
  %1920 = vdwg.mxu0
  %1921 = vmatprep.subr.mxu0 %v1846
  %1922 = vmatpush1.msra.mxu0 %v1844
  %1923 = vmatprep.subr.mxu0 0.0
  %1924 = vmatpush1.msra.mxu0 0.0
  %1925 = vmatprep.subr.mxu0 0.0
  %1926 = vmatpush1.msra.mxu0 0.0
  %1927 = vmatprep.subr.mxu0 0.0
  %1928 = vmatpush1.msra.mxu0 0.0
  %1929 = vmatprep.subr.mxu0 0.0
  %1930 = vmatpush1.msra.mxu0 0.0
  %1931 = vmatprep.subr.mxu0 0.0
  %1932 = vmatpush1.msra.mxu0 0.0
  %1933 = vmatprep.subr.mxu0 0.0
  %1934 = vmatpush1.msra.mxu0 0.0
  %1935 = vmatprep.subr.mxu0 0.0
  %1936 = vmatpush1.msra.mxu0 0.0
  %1937 = vmatprep.subr.mxu0 0.0
  %1938 = vmatpush1.msra.mxu0 0.0
  %1939 = vmatprep.subr.mxu0 0.0
  %1940 = vmatpush1.msra.mxu0 0.0
  %1941 = vmatprep.subr.mxu0 0.0
  %1942 = vmatpush1.msra.mxu0 0.0
  %1943 = vmatprep.subr.mxu0 0.0
  %1944 = vmatpush1.msra.mxu0 0.0
  %1945 = vmatprep.subr.mxu0 0.0
  %1946 = vmatpush1.msra.mxu0 0.0
  %1947 = vmatprep.subr.mxu0 0.0
  %1948 = vmatpush1.msra.mxu0 0.0
  %1949 = vmatprep.subr.mxu0 0.0
  %1950 = vmatpush1.msra.mxu0 0.0
  %1951 = vmatprep.subr.mxu0 0.0
  %1952 = vmatpush1.msra.mxu0 0.0
  %1953 = vmatprep.subr.mxu0 0.0
  %1954 = vmatpush1.msra.mxu0 0.0
  %1955 = vmatprep.subr.mxu0 0.0
  %1956 = vmatpush1.msra.mxu0 0.0
  %1957 = vmatprep.subr.mxu0 0.0
  %1958 = vmatpush1.msra.mxu0 0.0
  %1959 = vmatprep.subr.mxu0 0.0
  %1960 = vmatpush1.msra.mxu0 0.0
  %1961 = vmatprep.subr.mxu0 0.0
  %1962 = vmatpush1.msra.mxu0 0.0
  %1963 = vmatprep.subr.mxu0 0.0
  %1964 = vmatpush1.msra.mxu0 0.0
  %1965 = vmatprep.subr.mxu0 0.0
  %1966 = vmatpush1.msra.mxu0 0.0
  %1967 = vmatprep.subr.mxu0 0.0
  %1968 = vmatpush1.msra.mxu0 0.0
  %1969 = vmatprep.subr.mxu0 0.0
  %1970 = vmatpush1.msra.mxu0 0.0
  %1971 = vmatprep.subr.mxu0 0.0
  %1972 = vmatpush1.msra.mxu0 0.0
  %1973 = vmatprep.subr.mxu0 0.0
  %1974 = vmatpush1.msra.mxu0 0.0
  %1975 = vmatprep.subr.mxu0 0.0
  %1976 = vmatpush1.msra.mxu0 0.0
  %1977 = vmatprep.subr.mxu0 0.0
  %1978 = vmatpush1.msra.mxu0 0.0
  %1979 = vmatprep.subr.mxu0 0.0
  %1980 = vmatpush1.msra.mxu0 0.0
  %1981 = vmatprep.subr.mxu0 0.0
  %1982 = vmatpush1.msra.mxu0 0.0
  %1983 = vmatprep.subr.mxu0 0.0
  %1984 = vmatpush1.msra.mxu0 0.0
  %1985 = vmatprep.mubr.f32.mxu0 0.0
  %1986 = vmatmul.mubr.f32.gmra.mrb[0].mxu0 %v1838
  %v1987 = vpop.f32.mrb[0].mxu0
  %v1988 = vadd.f32 0.0, %v1987
  %v1989 = vpop.f32.mrb[0].mxu0
  %v1990 = vadd.f32 0.0, %v1989
  %1991 = vdwg.mxu0
  %1992 = vmatprep.subr.mxu0 0.0
  %1993 = vmatpush1.msra.mxu0 %v1848
  %1994 = vmatprep.subr.mxu0 0.0
  %1995 = vmatpush1.msra.mxu0 0.0
  %1996 = vmatprep.subr.mxu0 0.0
  %1997 = vmatpush1.msra.mxu0 0.0
  %1998 = vmatprep.subr.mxu0 0.0
  %1999 = vmatpush1.msra.mxu0 0.0
  %2000 = vmatprep.subr.mxu0 0.0
  %2001 = vmatpush1.msra.mxu0 0.0
  %2002 = vmatprep.subr.mxu0 0.0
  %2003 = vmatpush1.msra.mxu0 0.0
  %2004 = vmatprep.subr.mxu0 0.0
  %2005 = vmatpush1.msra.mxu0 0.0
  %2006 = vmatprep.subr.mxu0 0.0
  %2007 = vmatpush1.msra.mxu0 0.0
  %2008 = vmatprep.subr.mxu0 0.0
  %2009 = vmatpush1.msra.mxu0 0.0
  %2010 = vmatprep.subr.mxu0 0.0
  %2011 = vmatpush1.msra.mxu0 0.0
  %2012 = vmatprep.subr.mxu0 0.0
  %2013 = vmatpush1.msra.mxu0 0.0
  %2014 = vmatprep.subr.mxu0 0.0
  %2015 = vmatpush1.msra.mxu0 0.0
  %2016 = vmatprep.subr.mxu0 0.0
  %2017 = vmatpush1.msra.mxu0 0.0
  %2018 = vmatprep.subr.mxu0 0.0
  %2019 = vmatpush1.msra.mxu0 0.0
  %2020 = vmatprep.subr.mxu0 0.0
  %2021 = vmatpush1.msra.mxu0 0.0
  %2022 = vmatprep.subr.mxu0 0.0
  %2023 = vmatpush1.msra.mxu0 0.0
  %2024 = vmatprep.subr.mxu0 0.0
  %2025 = vmatpush1.msra.mxu0 0.0
  %2026 = vmatprep.subr.mxu0 0.0
  %2027 = vmatpush1.msra.mxu0 0.0
  %2028 = vmatprep.subr.mxu0 0.0
  %2029 = vmatpush1.msra.mxu0 0.0
  %2030 = vmatprep.subr.mxu0 0.0
  %2031 = vmatpush1.msra.mxu0 0.0
  %2032 = vmatprep.subr.mxu0 0.0
  %2033 = vmatpush1.msra.mxu0 0.0
  %2034 = vmatprep.subr.mxu0 0.0
  %2035 = vmatpush1.msra.mxu0 0.0
  %2036 = vmatprep.subr.mxu0 0.0
  %2037 = vmatpush1.msra.mxu0 0.0
  %2038 = vmatprep.subr.mxu0 0.0
  %2039 = vmatpush1.msra.mxu0 0.0
  %2040 = vmatprep.subr.mxu0 0.0
  %2041 = vmatpush1.msra.mxu0 0.0
  %2042 = vmatprep.subr.mxu0 0.0
  %2043 = vmatpush1.msra.mxu0 0.0
  %2044 = vmatprep.subr.mxu0 0.0
  %2045 = vmatpush1.msra.mxu0 0.0
  %2046 = vmatprep.subr.mxu0 0.0
  %2047 = vmatpush1.msra.mxu0 0.0
  %2048 = vmatprep.subr.mxu0 0.0
  %2049 = vmatpush1.msra.mxu0 0.0
  %2050 = vmatprep.subr.mxu0 0.0
  %2051 = vmatpush1.msra.mxu0 0.0
  %2052 = vmatprep.subr.mxu0 0.0
  %2053 = vmatpush1.msra.mxu0 0.0
  %2054 = vmatprep.subr.mxu0 0.0
  %2055 = vmatpush1.msra.mxu0 0.0
  %2056 = vmatprep.mubr.f32.mxu0 0.0
  %2057 = vmatmul.mubr.f32.gmra.mrb[0].mxu0 %v1838
  %v2058 = vpop.f32.mrb[0].mxu0
  %v2059 = vadd.f32 0.0, %v2058
  %v2060 = vpop.f32.mrb[0].mxu0
  %2061 = vdwg.mxu0
  %v2062 = vadd.f32 %v1803, %v1917
  %v2063 = vadd.f32 %v1804, %v1919
  %v2064 = vadd.f32 %v1805, %v1988
  %v2065 = vadd.f32 %v1806, %v1990
  %v2066 = vadd.f32 %v1807, %v2059
  %v2067 = vld [vmem:[%s0] sm:$0xff]
  %v2068 = vld [vmem:[%s0 + $0x8] sm:$0xff]
  %v2069 = vld [vmem:[%s0 + $0x10] sm:$0xff]
  %s2070 = scalar_lea.vmem %s1, 64
  %v2071 = vld [vmem:[%s2070] sm:$0xff]
  %v2075 = vcombine.high %v2067, %v2067
  %v2076 = vcombine.high %v2068, %v2068
  %v2077 = vcombine.high %v2069, %v2069
  %2078 = vrot.lane.b32.xlu0 %v2067, 90
  %v2079 = vpop.permute.xlu0 %2078
  %2080 = vrot.lane.b32.xlu0 %v2075, 90
  %v2081 = vpop.permute.xlu0 %2080
  %2082 = vrot.lane.b32.xlu0 %v2068, 90
  %v2083 = vpop.permute.xlu0 %2082
  %2084 = vrot.lane.b32.xlu0 %v2076, 90
  %v2085 = vpop.permute.xlu0 %2084
  %2086 = vrot.lane.b32.xlu0 %v2069, 90
  %v2087 = vpop.permute.xlu0 %2086
  %2088 = vrot.lane.b32.xlu0 %v2077, 90
  %v2089 = vpop.permute.xlu0 %2088
  %vm2090 = vcmask 736256
  %v2091 = vsel %vm2090, %v2079, %v2081
  %v2092 = vsel %vm2090, %v2081, %v2083
  %v2093 = vsel %vm2090, %v2083, %v2085
  %v2094 = vsel %vm2090, %v2085, %v2087
  %v2095 = vsel %vm2090, %v2087, %v2089
  %v2097 = vsel %vm56, %v2071, 0
  %v2099 = vsel %vm60, %v2091, 0
  %v2101 = vsel %vm60, %v2092, 0
  %v2103 = vsel %vm60, %v2093, 0
  %v2105 = vsel %vm60, %v2094, 0
  %v2107 = vsel %vm60, %v2095, 0
  %2109 = vmatprep.subr.mxu0 %v2101
  %2110 = vmatpush1.msra.mxu0 %v2099
  %2111 = vmatprep.subr.mxu0 0.0
  %2112 = vmatpush1.msra.mxu0 0.0
  %2113 = vmatprep.subr.mxu0 0.0
  %2114 = vmatpush1.msra.mxu0 0.0
  %2115 = vmatprep.subr.mxu0 0.0
  %2116 = vmatpush1.msra.mxu0 0.0
  %2117 = vmatprep.subr.mxu0 0.0
  %2118 = vmatpush1.msra.mxu0 0.0
  %2119 = vmatprep.subr.mxu0 0.0
  %2120 = vmatpush1.msra.mxu0 0.0
  %2121 = vmatprep.subr.mxu0 0.0
  %2122 = vmatpush1.msra.mxu0 0.0
  %2123 = vmatprep.subr.mxu0 0.0
  %2124 = vmatpush1.msra.mxu0 0.0
  %2125 = vmatprep.subr.mxu0 0.0
  %2126 = vmatpush1.msra.mxu0 0.0
  %2127 = vmatprep.subr.mxu0 0.0
  %2128 = vmatpush1.msra.mxu0 0.0
  %2129 = vmatprep.subr.mxu0 0.0
  %2130 = vmatpush1.msra.mxu0 0.0
  %2131 = vmatprep.subr.mxu0 0.0
  %2132 = vmatpush1.msra.mxu0 0.0
  %2133 = vmatprep.subr.mxu0 0.0
  %2134 = vmatpush1.msra.mxu0 0.0
  %2135 = vmatprep.subr.mxu0 0.0
  %2136 = vmatpush1.msra.mxu0 0.0
  %2137 = vmatprep.subr.mxu0 0.0
  %2138 = vmatpush1.msra.mxu0 0.0
  %2139 = vmatprep.subr.mxu0 0.0
  %2140 = vmatpush1.msra.mxu0 0.0
  %2141 = vmatprep.subr.mxu0 0.0
  %2142 = vmatpush1.msra.mxu0 0.0
  %2143 = vmatprep.subr.mxu0 0.0
  %2144 = vmatpush1.msra.mxu0 0.0
  %2145 = vmatprep.subr.mxu0 0.0
  %2146 = vmatpush1.msra.mxu0 0.0
  %2147 = vmatprep.subr.mxu0 0.0
  %2148 = vmatpush1.msra.mxu0 0.0
  %2149 = vmatprep.subr.mxu0 0.0
  %2150 = vmatpush1.msra.mxu0 0.0
  %2151 = vmatprep.subr.mxu0 0.0
  %2152 = vmatpush1.msra.mxu0 0.0
  %2153 = vmatprep.subr.mxu0 0.0
  %2154 = vmatpush1.msra.mxu0 0.0
  %2155 = vmatprep.subr.mxu0 0.0
  %2156 = vmatpush1.msra.mxu0 0.0
  %2157 = vmatprep.subr.mxu0 0.0
  %2158 = vmatpush1.msra.mxu0 0.0
  %2159 = vmatprep.subr.mxu0 0.0
  %2160 = vmatpush1.msra.mxu0 0.0
  %2161 = vmatprep.subr.mxu0 0.0
  %2162 = vmatpush1.msra.mxu0 0.0
  %2163 = vmatprep.subr.mxu0 0.0
  %2164 = vmatpush1.msra.mxu0 0.0
  %2165 = vmatprep.subr.mxu0 0.0
  %2166 = vmatpush1.msra.mxu0 0.0
  %2167 = vmatprep.subr.mxu0 0.0
  %2168 = vmatpush1.msra.mxu0 0.0
  %2169 = vmatprep.subr.mxu0 0.0
  %2170 = vmatpush1.msra.mxu0 0.0
  %2171 = vmatprep.subr.mxu0 0.0
  %2172 = vmatpush1.msra.mxu0 0.0
  %2173 = vmatprep.mubr.f32.mxu0 0.0
  %2174 = vmatmul.mubr.f32.gmra.mrb[0].mxu0 %v2097
  %v2175 = vpop.f32.mrb[0].mxu0
  %v2176 = vadd.f32 0.0, %v2175
  %v2177 = vpop.f32.mrb[0].mxu0
  %v2178 = vadd.f32 0.0, %v2177
  %2179 = vdwg.mxu0
  %2180 = vmatprep.subr.mxu0 %v2105
  %2181 = vmatpush1.msra.mxu0 %v2103
  %2182 = vmatprep.subr.mxu0 0.0
  %2183 = vmatpush1.msra.mxu0 0.0
  %2184 = vmatprep.subr.mxu0 0.0
  %2185 = vmatpush1.msra.mxu0 0.0
  %2186 = vmatprep.subr.mxu0 0.0
  %2187 = vmatpush1.msra.mxu0 0.0
  %2188 = vmatprep.subr.mxu0 0.0
  %2189 = vmatpush1.msra.mxu0 0.0
  %2190 = vmatprep.subr.mxu0 0.0
  %2191 = vmatpush1.msra.mxu0 0.0
  %2192 = vmatprep.subr.mxu0 0.0
  %2193 = vmatpush1.msra.mxu0 0.0
  %2194 = vmatprep.subr.mxu0 0.0
  %2195 = vmatpush1.msra.mxu0 0.0
  %2196 = vmatprep.subr.mxu0 0.0
  %2197 = vmatpush1.msra.mxu0 0.0
  %2198 = vmatprep.subr.mxu0 0.0
  %2199 = vmatpush1.msra.mxu0 0.0
  %2200 = vmatprep.subr.mxu0 0.0
  %2201 = vmatpush1.msra.mxu0 0.0
  %2202 = vmatprep.subr.mxu0 0.0
  %2203 = vmatpush1.msra.mxu0 0.0
  %2204 = vmatprep.subr.mxu0 0.0
  %2205 = vmatpush1.msra.mxu0 0.0
  %2206 = vmatprep.subr.mxu0 0.0
  %2207 = vmatpush1.msra.mxu0 0.0
  %2208 = vmatprep.subr.mxu0 0.0
  %2209 = vmatpush1.msra.mxu0 0.0
  %2210 = vmatprep.subr.mxu0 0.0
  %2211 = vmatpush1.msra.mxu0 0.0
  %2212 = vmatprep.subr.mxu0 0.0
  %2213 = vmatpush1.msra.mxu0 0.0
  %2214 = vmatprep.subr.mxu0 0.0
  %2215 = vmatpush1.msra.mxu0 0.0
  %2216 = vmatprep.subr.mxu0 0.0
  %2217 = vmatpush1.msra.mxu0 0.0
  %2218 = vmatprep.subr.mxu0 0.0
  %2219 = vmatpush1.msra.mxu0 0.0
  %2220 = vmatprep.subr.mxu0 0.0
  %2221 = vmatpush1.msra.mxu0 0.0
  %2222 = vmatprep.subr.mxu0 0.0
  %2223 = vmatpush1.msra.mxu0 0.0
  %2224 = vmatprep.subr.mxu0 0.0
  %2225 = vmatpush1.msra.mxu0 0.0
  %2226 = vmatprep.subr.mxu0 0.0
  %2227 = vmatpush1.msra.mxu0 0.0
  %2228 = vmatprep.subr.mxu0 0.0
  %2229 = vmatpush1.msra.mxu0 0.0
  %2230 = vmatprep.subr.mxu0 0.0
  %2231 = vmatpush1.msra.mxu0 0.0
  %2232 = vmatprep.subr.mxu0 0.0
  %2233 = vmatpush1.msra.mxu0 0.0
  %2234 = vmatprep.subr.mxu0 0.0
  %2235 = vmatpush1.msra.mxu0 0.0
  %2236 = vmatprep.subr.mxu0 0.0
  %2237 = vmatpush1.msra.mxu0 0.0
  %2238 = vmatprep.subr.mxu0 0.0
  %2239 = vmatpush1.msra.mxu0 0.0
  %2240 = vmatprep.subr.mxu0 0.0
  %2241 = vmatpush1.msra.mxu0 0.0
  %2242 = vmatprep.subr.mxu0 0.0
  %2243 = vmatpush1.msra.mxu0 0.0
  %2244 = vmatprep.mubr.f32.mxu0 0.0
  %2245 = vmatmul.mubr.f32.gmra.mrb[0].mxu0 %v2097
  %v2246 = vpop.f32.mrb[0].mxu0
  %v2247 = vadd.f32 0.0, %v2246
  %v2248 = vpop.f32.mrb[0].mxu0
  %v2249 = vadd.f32 0.0, %v2248
  %2250 = vdwg.mxu0
  %2251 = vmatprep.subr.mxu0 0.0
  %2252 = vmatpush1.msra.mxu0 %v2107
  %2253 = vmatprep.subr.mxu0 0.0
  %2254 = vmatpush1.msra.mxu0 0.0
  %2255 = vmatprep.subr.mxu0 0.0
  %2256 = vmatpush1.msra.mxu0 0.0
  %2257 = vmatprep.subr.mxu0 0.0
  %2258 = vmatpush1.msra.mxu0 0.0
  %2259 = vmatprep.subr.mxu0 0.0
  %2260 = vmatpush1.msra.mxu0 0.0
  %2261 = vmatprep.subr.mxu0 0.0
  %2262 = vmatpush1.msra.mxu0 0.0
  %2263 = vmatprep.subr.mxu0 0.0
  %2264 = vmatpush1.msra.mxu0 0.0
  %2265 = vmatprep.subr.mxu0 0.0
  %2266 = vmatpush1.msra.mxu0 0.0
  %2267 = vmatprep.subr.mxu0 0.0
  %2268 = vmatpush1.msra.mxu0 0.0
  %2269 = vmatprep.subr.mxu0 0.0
  %2270 = vmatpush1.msra.mxu0 0.0
  %2271 = vmatprep.subr.mxu0 0.0
  %2272 = vmatpush1.msra.mxu0 0.0
  %2273 = vmatprep.subr.mxu0 0.0
  %2274 = vmatpush1.msra.mxu0 0.0
  %2275 = vmatprep.subr.mxu0 0.0
  %2276 = vmatpush1.msra.mxu0 0.0
  %2277 = vmatprep.subr.mxu0 0.0
  %2278 = vmatpush1.msra.mxu0 0.0
  %2279 = vmatprep.subr.mxu0 0.0
  %2280 = vmatpush1.msra.mxu0 0.0
  %2281 = vmatprep.subr.mxu0 0.0
  %2282 = vmatpush1.msra.mxu0 0.0
  %2283 = vmatprep.subr.mxu0 0.0
  %2284 = vmatpush1.msra.mxu0 0.0
  %2285 = vmatprep.subr.mxu0 0.0
  %2286 = vmatpush1.msra.mxu0 0.0
  %2287 = vmatprep.subr.mxu0 0.0
  %2288 = vmatpush1.msra.mxu0 0.0
  %2289 = vmatprep.subr.mxu0 0.0
  %2290 = vmatpush1.msra.mxu0 0.0
  %2291 = vmatprep.subr.mxu0 0.0
  %2292 = vmatpush1.msra.mxu0 0.0
  %2293 = vmatprep.subr.mxu0 0.0
  %2294 = vmatpush1.msra.mxu0 0.0
  %2295 = vmatprep.subr.mxu0 0.0
  %2296 = vmatpush1.msra.mxu0 0.0
  %2297 = vmatprep.subr.mxu0 0.0
  %2298 = vmatpush1.msra.mxu0 0.0
  %2299 = vmatprep.subr.mxu0 0.0
  %2300 = vmatpush1.msra.mxu0 0.0
  %2301 = vmatprep.subr.mxu0 0.0
  %2302 = vmatpush1.msra.mxu0 0.0
  %2303 = vmatprep.subr.mxu0 0.0
  %2304 = vmatpush1.msra.mxu0 0.0
  %2305 = vmatprep.subr.mxu0 0.0
  %2306 = vmatpush1.msra.mxu0 0.0
  %2307 = vmatprep.subr.mxu0 0.0
  %2308 = vmatpush1.msra.mxu0 0.0
  %2309 = vmatprep.subr.mxu0 0.0
  %2310 = vmatpush1.msra.mxu0 0.0
  %2311 = vmatprep.subr.mxu0 0.0
  %2312 = vmatpush1.msra.mxu0 0.0
  %2313 = vmatprep.subr.mxu0 0.0
  %2314 = vmatpush1.msra.mxu0 0.0
  %2315 = vmatprep.mubr.f32.mxu0 0.0
  %2316 = vmatmul.mubr.f32.gmra.mrb[0].mxu0 %v2097
  %v2317 = vpop.f32.mrb[0].mxu0
  %v2318 = vadd.f32 0.0, %v2317
  %v2319 = vpop.f32.mrb[0].mxu0
  %2320 = vdwg.mxu0
  %v2321 = vadd.f32 %v2062, %v2176
  %v2322 = vadd.f32 %v2063, %v2178
  %v2323 = vadd.f32 %v2064, %v2247
  %v2324 = vadd.f32 %v2065, %v2249
  %v2325 = vadd.f32 %v2066, %v2318
  %v2326 = vld [vmem:[%s2] sm:$0xff]
  %2328 = vset.pattern.permute.xlu0 0
  %2329 = vperm.xlu0 %2328, %v2326
  %v2330 = vpop.permute.xlu0 %2329
  %v2332 = vadd.f32 %v2321, %v2330
  %v2333 = vadd.f32 %v2322, %v2330
  %v2334 = vadd.f32 %v2323, %v2330
  %v2335 = vadd.f32 %v2324, %v2330
  %v2336 = vadd.f32 %v2325, %v2330
  %v2337 = vmax.f32 %v2332, 0.0
  %v2338 = vmax.f32 %v2333, 0.0
  %v2339 = vmax.f32 %v2334, 0.0
  %v2340 = vmax.f32 %v2335, 0.0
  %v2341 = vmax.f32 %v2336, 0.0
  %v2342 = vld [vmem:[%s3] sm:$0xff]
  %v2343 = vld [vmem:[%s3 + $0x8] sm:$0xff]
  %v2344 = vld [vmem:[%s3 + $0x10] sm:$0xff]
  %v2345 = vld [vmem:[%s3 + $0x18] sm:$0xff]
  %v2346 = vld [vmem:[%s3 + $0x20] sm:$0xff]
  %v2347 = vand.u32 %v2343, 4294901760
  %2348 = vmatprep.subr.mxu0 %v2347
  %v2349 = vand.u32 %v2342, 4294901760
  %2350 = vmatpush1.xpose.msra.mxu0 %v2349
  %2351 = vmatprep.subr.mxu0 0.0
  %2352 = vmatpush1.xpose.msra.mxu0 0.0
  %2353 = vmatprep.subr.mxu0 0.0
  %2354 = vmatpush1.xpose.msra.mxu0 0.0
  %2355 = vmatprep.subr.mxu0 0.0
  %2356 = vmatpush1.xpose.msra.mxu0 0.0
  %2357 = vmatprep.subr.mxu0 0.0
  %2358 = vmatpush1.xpose.msra.mxu0 0.0
  %2359 = vmatprep.subr.mxu0 0.0
  %2360 = vmatpush1.xpose.msra.mxu0 0.0
  %2361 = vmatprep.subr.mxu0 0.0
  %2362 = vmatpush1.xpose.msra.mxu0 0.0
  %2363 = vmatprep.subr.mxu0 0.0
  %2364 = vmatpush1.xpose.msra.mxu0 0.0
  %2365 = vmatprep.subr.mxu0 0.0
  %2366 = vmatpush1.xpose.msra.mxu0 0.0
  %2367 = vmatprep.subr.mxu0 0.0
  %2368 = vmatpush1.xpose.msra.mxu0 0.0
  %2369 = vmatprep.subr.mxu0 0.0
  %2370 = vmatpush1.xpose.msra.mxu0 0.0
  %2371 = vmatprep.subr.mxu0 0.0
  %2372 = vmatpush1.xpose.msra.mxu0 0.0
  %2373 = vmatprep.subr.mxu0 0.0
  %2374 = vmatpush1.xpose.msra.mxu0 0.0
  %2375 = vmatprep.subr.mxu0 0.0
  %2376 = vmatpush1.xpose.msra.mxu0 0.0
  %2377 = vmatprep.subr.mxu0 0.0
  %2378 = vmatpush1.xpose.msra.mxu0 0.0
  %2379 = vmatprep.subr.mxu0 0.0
  %2380 = vmatpush1.xpose.msra.mxu0 0.0
  %2381 = vmatprep.subr.mxu0 0.0
  %2382 = vmatpush1.xpose.msra.mxu0 0.0
  %2383 = vmatprep.subr.mxu0 0.0
  %2384 = vmatpush1.xpose.msra.mxu0 0.0
  %2385 = vmatprep.subr.mxu0 0.0
  %2386 = vmatpush1.xpose.msra.mxu0 0.0
  %2387 = vmatprep.subr.mxu0 0.0
  %2388 = vmatpush1.xpose.msra.mxu0 0.0
  %2389 = vmatprep.subr.mxu0 0.0
  %2390 = vmatpush1.xpose.msra.mxu0 0.0
  %2391 = vmatprep.subr.mxu0 0.0
  %2392 = vmatpush1.xpose.msra.mxu0 0.0
  %2393 = vmatprep.subr.mxu0 0.0
  %2394 = vmatpush1.xpose.msra.mxu0 0.0
  %2395 = vmatprep.subr.mxu0 0.0
  %2396 = vmatpush1.xpose.msra.mxu0 0.0
  %2397 = vmatprep.subr.mxu0 0.0
  %2398 = vmatpush1.xpose.msra.mxu0 0.0
  %2399 = vmatprep.subr.mxu0 0.0
  %2400 = vmatpush1.xpose.msra.mxu0 0.0
  %2401 = vmatprep.subr.mxu0 0.0
  %2402 = vmatpush1.xpose.msra.mxu0 0.0
  %2403 = vmatprep.subr.mxu0 0.0
  %2404 = vmatpush1.xpose.msra.mxu0 0.0
  %2405 = vmatprep.subr.mxu0 0.0
  %2406 = vmatpush1.xpose.msra.mxu0 0.0
  %2407 = vmatprep.subr.mxu0 0.0
  %2408 = vmatpush1.xpose.msra.mxu0 0.0
  %2409 = vmatprep.subr.mxu0 0.0
  %2410 = vmatpush1.xpose.msra.mxu0 0.0
  %2411 = vmatprep.subr.mxu0 0.0
  %2412 = vmatpush1.xpose.msra.mxu0 0.0
  %v2413 = vand.u32 %v2338, 4294901760
  %v2414 = vsub.f32 %v2338, %v2413
  %v2415 = vand.u32 %v2414, 4294901760
  %v2416 = vsub.f32 %v2414, %v2415
  %v2417 = vand.u32 %v2416, 4294901760
  %2418 = vmatprep.mubr.f32.mxu0 %v2417
  %v2419 = vand.u32 %v2337, 4294901760
  %v2420 = vsub.f32 %v2337, %v2419
  %v2421 = vand.u32 %v2420, 4294901760
  %v2422 = vsub.f32 %v2420, %v2421
  %v2423 = vand.u32 %v2422, 4294901760
  %2424 = vmatmul.mubr.f32.gmra.mrb[0].mxu0 %v2423
  %v2425 = vpop.f32.mrb[0].mxu0
  %v2426 = vadd.f32 0.0, %v2425
  %v2427 = vpop.f32.mrb[0].mxu0
  %2428 = vdwg.mxu0
  %v2429 = vand.u32 %v2343, 4294901760
  %v2430 = vsub.f32 %v2343, %v2429
  %v2431 = vand.u32 %v2430, 4294901760
  %v2432 = vsub.f32 %v2430, %v2431
  %v2433 = vand.u32 %v2432, 4294901760
  %2434 = vmatprep.subr.mxu0 %v2433
  %v2435 = vand.u32 %v2342, 4294901760
  %v2436 = vsub.f32 %v2342, %v2435
  %v2437 = vand.u32 %v2436, 4294901760
  %v2438 = vsub.f32 %v2436, %v2437
  %v2439 = vand.u32 %v2438, 4294901760
  %2440 = vmatpush1.xpose.msra.mxu0 %v2439
  %2441 = vmatprep.subr.mxu0 0.0
  %2442 = vmatpush1.xpose.msra.mxu0 0.0
  %2443 = vmatprep.subr.mxu0 0.0
  %2444 = vmatpush1.xpose.msra.mxu0 0.0
  %2445 = vmatprep.subr.mxu0 0.0
  %2446 = vmatpush1.xpose.msra.mxu0 0.0
  %2447 = vmatprep.subr.mxu0 0.0
  %2448 = vmatpush1.xpose.msra.mxu0 0.0
  %2449 = vmatprep.subr.mxu0 0.0
  %2450 = vmatpush1.xpose.msra.mxu0 0.0
  %2451 = vmatprep.subr.mxu0 0.0
  %2452 = vmatpush1.xpose.msra.mxu0 0.0
  %2453 = vmatprep.subr.mxu0 0.0
  %2454 = vmatpush1.xpose.msra.mxu0 0.0
  %2455 = vmatprep.subr.mxu0 0.0
  %2456 = vmatpush1.xpose.msra.mxu0 0.0
  %2457 = vmatprep.subr.mxu0 0.0
  %2458 = vmatpush1.xpose.msra.mxu0 0.0
  %2459 = vmatprep.subr.mxu0 0.0
  %2460 = vmatpush1.xpose.msra.mxu0 0.0
  %2461 = vmatprep.subr.mxu0 0.0
  %2462 = vmatpush1.xpose.msra.mxu0 0.0
  %2463 = vmatprep.subr.mxu0 0.0
  %2464 = vmatpush1.xpose.msra.mxu0 0.0
  %2465 = vmatprep.subr.mxu0 0.0
  %2466 = vmatpush1.xpose.msra.mxu0 0.0
  %2467 = vmatprep.subr.mxu0 0.0
  %2468 = vmatpush1.xpose.msra.mxu0 0.0
  %2469 = vmatprep.subr.mxu0 0.0
  %2470 = vmatpush1.xpose.msra.mxu0 0.0
  %2471 = vmatprep.subr.mxu0 0.0
  %2472 = vmatpush1.xpose.msra.mxu0 0.0
  %2473 = vmatprep.subr.mxu0 0.0
  %2474 = vmatpush1.xpose.msra.mxu0 0.0
  %2475 = vmatprep.subr.mxu0 0.0
  %2476 = vmatpush1.xpose.msra.mxu0 0.0
  %2477 = vmatprep.subr.mxu0 0.0
  %2478 = vmatpush1.xpose.msra.mxu0 0.0
  %2479 = vmatprep.subr.mxu0 0.0
  %2480 = vmatpush1.xpose.msra.mxu0 0.0
  %2481 = vmatprep.subr.mxu0 0.0
  %2482 = vmatpush1.xpose.msra.mxu0 0.0
  %2483 = vmatprep.subr.mxu0 0.0
  %2484 = vmatpush1.xpose.msra.mxu0 0.0
  %2485 = vmatprep.subr.mxu0 0.0
  %2486 = vmatpush1.xpose.msra.mxu0 0.0
  %2487 = vmatprep.subr.mxu0 0.0
  %2488 = vmatpush1.xpose.msra.mxu0 0.0
  %2489 = vmatprep.subr.mxu0 0.0
  %2490 = vmatpush1.xpose.msra.mxu0 0.0
  %2491 = vmatprep.subr.mxu0 0.0
  %2492 = vmatpush1.xpose.msra.mxu0 0.0
  %2493 = vmatprep.subr.mxu0 0.0
  %2494 = vmatpush1.xpose.msra.mxu0 0.0
  %2495 = vmatprep.subr.mxu0 0.0
  %2496 = vmatpush1.xpose.msra.mxu0 0.0
  %2497 = vmatprep.subr.mxu0 0.0
  %2498 = vmatpush1.xpose.msra.mxu0 0.0
  %2499 = vmatprep.subr.mxu0 0.0
  %2500 = vmatpush1.xpose.msra.mxu0 0.0
  %2501 = vmatprep.subr.mxu0 0.0
  %2502 = vmatpush1.xpose.msra.mxu0 0.0
  %v2503 = vand.u32 %v2338, 4294901760
  %2504 = vmatprep.mubr.f32.mxu0 %v2503
  %v2505 = vand.u32 %v2337, 4294901760
  %2506 = vmatmul.mubr.f32.gmra.mrb[0].mxu0 %v2505
  %v2507 = vpop.f32.mrb[0].mxu0
  %v2508 = vadd.f32 %v2426, %v2507
  %v2509 = vpop.f32.mrb[0].mxu0
  %2510 = vdwg.mxu0
  %v2511 = vand.u32 %v2343, 4294901760
  %v2512 = vsub.f32 %v2343, %v2511
  %2513 = vmatprep.subr.mxu0 %v2512
  %v2514 = vand.u32 %v2342, 4294901760
  %v2515 = vsub.f32 %v2342, %v2514
  %2516 = vmatpush1.xpose.msra.mxu0 %v2515
  %2517 = vmatprep.subr.mxu0 0.0
  %2518 = vmatpush1.xpose.msra.mxu0 0.0
  %2519 = vmatprep.subr.mxu0 0.0
  %2520 = vmatpush1.xpose.msra.mxu0 0.0
  %2521 = vmatprep.subr.mxu0 0.0
  %2522 = vmatpush1.xpose.msra.mxu0 0.0
  %2523 = vmatprep.subr.mxu0 0.0
  %2524 = vmatpush1.xpose.msra.mxu0 0.0
  %2525 = vmatprep.subr.mxu0 0.0
  %2526 = vmatpush1.xpose.msra.mxu0 0.0
  %2527 = vmatprep.subr.mxu0 0.0
  %2528 = vmatpush1.xpose.msra.mxu0 0.0
  %2529 = vmatprep.subr.mxu0 0.0
  %2530 = vmatpush1.xpose.msra.mxu0 0.0
  %2531 = vmatprep.subr.mxu0 0.0
  %2532 = vmatpush1.xpose.msra.mxu0 0.0
  %2533 = vmatprep.subr.mxu0 0.0
  %2534 = vmatpush1.xpose.msra.mxu0 0.0
  %2535 = vmatprep.subr.mxu0 0.0
  %2536 = vmatpush1.xpose.msra.mxu0 0.0
  %2537 = vmatprep.subr.mxu0 0.0
  %2538 = vmatpush1.xpose.msra.mxu0 0.0
  %2539 = vmatprep.subr.mxu0 0.0
  %2540 = vmatpush1.xpose.msra.mxu0 0.0
  %2541 = vmatprep.subr.mxu0 0.0
  %2542 = vmatpush1.xpose.msra.mxu0 0.0
  %2543 = vmatprep.subr.mxu0 0.0
  %2544 = vmatpush1.xpose.msra.mxu0 0.0
  %2545 = vmatprep.subr.mxu0 0.0
  %2546 = vmatpush1.xpose.msra.mxu0 0.0
  %2547 = vmatprep.subr.mxu0 0.0
  %2548 = vmatpush1.xpose.msra.mxu0 0.0
  %2549 = vmatprep.subr.mxu0 0.0
  %2550 = vmatpush1.xpose.msra.mxu0 0.0
  %2551 = vmatprep.subr.mxu0 0.0
  %2552 = vmatpush1.xpose.msra.mxu0 0.0
  %2553 = vmatprep.subr.mxu0 0.0
  %2554 = vmatpush1.xpose.msra.mxu0 0.0
  %2555 = vmatprep.subr.mxu0 0.0
  %2556 = vmatpush1.xpose.msra.mxu0 0.0
  %2557 = vmatprep.subr.mxu0 0.0
  %2558 = vmatpush1.xpose.msra.mxu0 0.0
  %2559 = vmatprep.subr.mxu0 0.0
  %2560 = vmatpush1.xpose.msra.mxu0 0.0
  %2561 = vmatprep.subr.mxu0 0.0
  %2562 = vmatpush1.xpose.msra.mxu0 0.0
  %2563 = vmatprep.subr.mxu0 0.0
  %2564 = vmatpush1.xpose.msra.mxu0 0.0
  %2565 = vmatprep.subr.mxu0 0.0
  %2566 = vmatpush1.xpose.msra.mxu0 0.0
  %2567 = vmatprep.subr.mxu0 0.0
  %2568 = vmatpush1.xpose.msra.mxu0 0.0
  %2569 = vmatprep.subr.mxu0 0.0
  %2570 = vmatpush1.xpose.msra.mxu0 0.0
  %2571 = vmatprep.subr.mxu0 0.0
  %2572 = vmatpush1.xpose.msra.mxu0 0.0
  %2573 = vmatprep.subr.mxu0 0.0
  %2574 = vmatpush1.xpose.msra.mxu0 0.0
  %2575 = vmatprep.subr.mxu0 0.0
  %2576 = vmatpush1.xpose.msra.mxu0 0.0
  %2577 = vmatprep.subr.mxu0 0.0
  %2578 = vmatpush1.xpose.msra.mxu0 0.0
  %v2579 = vand.u32 %v2338, 4294901760
  %v2580 = vsub.f32 %v2338, %v2579
  %2581 = vmatprep.mubr.f32.mxu0 %v2580
  %v2582 = vand.u32 %v2337, 4294901760
  %v2583 = vsub.f32 %v2337, %v2582
  %2584 = vmatmul.mubr.f32.gmra.mrb[0].mxu0 %v2583
  %v2585 = vpop.f32.mrb[0].mxu0
  %v2586 = vadd.f32 %v2508, %v2585
  %v2587 = vpop.f32.mrb[0].mxu0
  %2588 = vdwg.mxu0
  %v2589 = vand.u32 %v2343, 4294901760
  %2590 = vmatprep.subr.mxu0 %v2589
  %v2591 = vand.u32 %v2342, 4294901760
  %2592 = vmatpush1.xpose.msra.mxu0 %v2591
  %2593 = vmatprep.subr.mxu0 0.0
  %2594 = vmatpush1.xpose.msra.mxu0 0.0
  %2595 = vmatprep.subr.mxu0 0.0
  %2596 = vmatpush1.xpose.msra.mxu0 0.0
  %2597 = vmatprep.subr.mxu0 0.0
  %2598 = vmatpush1.xpose.msra.mxu0 0.0
  %2599 = vmatprep.subr.mxu0 0.0
  %2600 = vmatpush1.xpose.msra.mxu0 0.0
  %2601 = vmatprep.subr.mxu0 0.0
  %2602 = vmatpush1.xpose.msra.mxu0 0.0
  %2603 = vmatprep.subr.mxu0 0.0
  %2604 = vmatpush1.xpose.msra.mxu0 0.0
  %2605 = vmatprep.subr.mxu0 0.0
  %2606 = vmatpush1.xpose.msra.mxu0 0.0
  %2607 = vmatprep.subr.mxu0 0.0
  %2608 = vmatpush1.xpose.msra.mxu0 0.0
  %2609 = vmatprep.subr.mxu0 0.0
  %2610 = vmatpush1.xpose.msra.mxu0 0.0
  %2611 = vmatprep.subr.mxu0 0.0
  %2612 = vmatpush1.xpose.msra.mxu0 0.0
  %2613 = vmatprep.subr.mxu0 0.0
  %2614 = vmatpush1.xpose.msra.mxu0 0.0
  %2615 = vmatprep.subr.mxu0 0.0
  %2616 = vmatpush1.xpose.msra.mxu0 0.0
  %2617 = vmatprep.subr.mxu0 0.0
  %2618 = vmatpush1.xpose.msra.mxu0 0.0
  %2619 = vmatprep.subr.mxu0 0.0
  %2620 = vmatpush1.xpose.msra.mxu0 0.0
  %2621 = vmatprep.subr.mxu0 0.0
  %2622 = vmatpush1.xpose.msra.mxu0 0.0
  %2623 = vmatprep.subr.mxu0 0.0
  %2624 = vmatpush1.xpose.msra.mxu0 0.0
  %2625 = vmatprep.subr.mxu0 0.0
  %2626 = vmatpush1.xpose.msra.mxu0 0.0
  %2627 = vmatprep.subr.mxu0 0.0
  %2628 = vmatpush1.xpose.msra.mxu0 0.0
  %2629 = vmatprep.subr.mxu0 0.0
  %2630 = vmatpush1.xpose.msra.mxu0 0.0
  %2631 = vmatprep.subr.mxu0 0.0
  %2632 = vmatpush1.xpose.msra.mxu0 0.0
  %2633 = vmatprep.subr.mxu0 0.0
  %2634 = vmatpush1.xpose.msra.mxu0 0.0
  %2635 = vmatprep.subr.mxu0 0.0
  %2636 = vmatpush1.xpose.msra.mxu0 0.0
  %2637 = vmatprep.subr.mxu0 0.0
  %2638 = vmatpush1.xpose.msra.mxu0 0.0
  %2639 = vmatprep.subr.mxu0 0.0
  %2640 = vmatpush1.xpose.msra.mxu0 0.0
  %2641 = vmatprep.subr.mxu0 0.0
  %2642 = vmatpush1.xpose.msra.mxu0 0.0
  %2643 = vmatprep.subr.mxu0 0.0
  %2644 = vmatpush1.xpose.msra.mxu0 0.0
  %2645 = vmatprep.subr.mxu0 0.0
  %2646 = vmatpush1.xpose.msra.mxu0 0.0
  %2647 = vmatprep.subr.mxu0 0.0
  %2648 = vmatpush1.xpose.msra.mxu0 0.0
  %2649 = vmatprep.subr.mxu0 0.0
  %2650 = vmatpush1.xpose.msra.mxu0 0.0
  %2651 = vmatprep.subr.mxu0 0.0
  %2652 = vmatpush1.xpose.msra.mxu0 0.0
  %2653 = vmatprep.subr.mxu0 0.0
  %2654 = vmatpush1.xpose.msra.mxu0 0.0
  %v2655 = vand.u32 %v2338, 4294901760
  %v2656 = vsub.f32 %v2338, %v2655
  %v2657 = vand.u32 %v2656, 4294901760
  %2658 = vmatprep.mubr.f32.mxu0 %v2657
  %v2659 = vand.u32 %v2337, 4294901760
  %v2660 = vsub.f32 %v2337, %v2659
  %v2661 = vand.u32 %v2660, 4294901760
  %2662 = vmatmul.mubr.f32.gmra.mrb[0].mxu0 %v2661
  %v2663 = vpop.f32.mrb[0].mxu0
  %v2664 = vadd.f32 %v2586, %v2663
  %v2665 = vpop.f32.mrb[0].mxu0
  %2666 = vdwg.mxu0
  %v2667 = vand.u32 %v2343, 4294901760
  %v2668 = vsub.f32 %v2343, %v2667
  %v2669 = vand.u32 %v2668, 4294901760
  %2670 = vmatprep.subr.mxu0 %v2669
  %v2671 = vand.u32 %v2342, 4294901760
  %v2672 = vsub.f32 %v2342, %v2671
  %v2673 = vand.u32 %v2672, 4294901760
  %2674 = vmatpush1.xpose.msra.mxu0 %v2673
  %2675 = vmatprep.subr.mxu0 0.0
  %2676 = vmatpush1.xpose.msra.mxu0 0.0
  %2677 = vmatprep.subr.mxu0 0.0
  %2678 = vmatpush1.xpose.msra.mxu0 0.0
  %2679 = vmatprep.subr.mxu0 0.0
  %2680 = vmatpush1.xpose.msra.mxu0 0.0
  %2681 = vmatprep.subr.mxu0 0.0
  %2682 = vmatpush1.xpose.msra.mxu0 0.0
  %2683 = vmatprep.subr.mxu0 0.0
  %2684 = vmatpush1.xpose.msra.mxu0 0.0
  %2685 = vmatprep.subr.mxu0 0.0
  %2686 = vmatpush1.xpose.msra.mxu0 0.0
  %2687 = vmatprep.subr.mxu0 0.0
  %2688 = vmatpush1.xpose.msra.mxu0 0.0
  %2689 = vmatprep.subr.mxu0 0.0
  %2690 = vmatpush1.xpose.msra.mxu0 0.0
  %2691 = vmatprep.subr.mxu0 0.0
  %2692 = vmatpush1.xpose.msra.mxu0 0.0
  %2693 = vmatprep.subr.mxu0 0.0
  %2694 = vmatpush1.xpose.msra.mxu0 0.0
  %2695 = vmatprep.subr.mxu0 0.0
  %2696 = vmatpush1.xpose.msra.mxu0 0.0
  %2697 = vmatprep.subr.mxu0 0.0
  %2698 = vmatpush1.xpose.msra.mxu0 0.0
  %2699 = vmatprep.subr.mxu0 0.0
  %2700 = vmatpush1.xpose.msra.mxu0 0.0
  %2701 = vmatprep.subr.mxu0 0.0
  %2702 = vmatpush1.xpose.msra.mxu0 0.0
  %2703 = vmatprep.subr.mxu0 0.0
  %2704 = vmatpush1.xpose.msra.mxu0 0.0
  %2705 = vmatprep.subr.mxu0 0.0
  %2706 = vmatpush1.xpose.msra.mxu0 0.0
  %2707 = vmatprep.subr.mxu0 0.0
  %2708 = vmatpush1.xpose.msra.mxu0 0.0
  %2709 = vmatprep.subr.mxu0 0.0
  %2710 = vmatpush1.xpose.msra.mxu0 0.0
  %2711 = vmatprep.subr.mxu0 0.0
  %2712 = vmatpush1.xpose.msra.mxu0 0.0
  %2713 = vmatprep.subr.mxu0 0.0
  %2714 = vmatpush1.xpose.msra.mxu0 0.0
  %2715 = vmatprep.subr.mxu0 0.0
  %2716 = vmatpush1.xpose.msra.mxu0 0.0
  %2717 = vmatprep.subr.mxu0 0.0
  %2718 = vmatpush1.xpose.msra.mxu0 0.0
  %2719 = vmatprep.subr.mxu0 0.0
  %2720 = vmatpush1.xpose.msra.mxu0 0.0
  %2721 = vmatprep.subr.mxu0 0.0
  %2722 = vmatpush1.xpose.msra.mxu0 0.0
  %2723 = vmatprep.subr.mxu0 0.0
  %2724 = vmatpush1.xpose.msra.mxu0 0.0
  %2725 = vmatprep.subr.mxu0 0.0
  %2726 = vmatpush1.xpose.msra.mxu0 0.0
  %2727 = vmatprep.subr.mxu0 0.0
  %2728 = vmatpush1.xpose.msra.mxu0 0.0
  %2729 = vmatprep.subr.mxu0 0.0
  %2730 = vmatpush1.xpose.msra.mxu0 0.0
  %2731 = vmatprep.subr.mxu0 0.0
  %2732 = vmatpush1.xpose.msra.mxu0 0.0
  %2733 = vmatprep.subr.mxu0 0.0
  %2734 = vmatpush1.xpose.msra.mxu0 0.0
  %2735 = vmatprep.subr.mxu0 0.0
  %2736 = vmatpush1.xpose.msra.mxu0 0.0
  %v2737 = vand.u32 %v2338, 4294901760
  %2738 = vmatprep.mubr.f32.mxu0 %v2737
  %v2739 = vand.u32 %v2337, 4294901760
  %2740 = vmatmul.mubr.f32.gmra.mrb[0].mxu0 %v2739
  %v2741 = vpop.f32.mrb[0].mxu0
  %v2742 = vadd.f32 %v2664, %v2741
  %v2743 = vpop.f32.mrb[0].mxu0
  %2744 = vdwg.mxu0
  %v2745 = vand.u32 %v2343, 4294901760
  %2746 = vmatprep.subr.mxu0 %v2745
  %v2747 = vand.u32 %v2342, 4294901760
  %2748 = vmatpush1.xpose.msra.mxu0 %v2747
  %2749 = vmatprep.subr.mxu0 0.0
  %2750 = vmatpush1.xpose.msra.mxu0 0.0
  %2751 = vmatprep.subr.mxu0 0.0
  %2752 = vmatpush1.xpose.msra.mxu0 0.0
  %2753 = vmatprep.subr.mxu0 0.0
  %2754 = vmatpush1.xpose.msra.mxu0 0.0
  %2755 = vmatprep.subr.mxu0 0.0
  %2756 = vmatpush1.xpose.msra.mxu0 0.0
  %2757 = vmatprep.subr.mxu0 0.0
  %2758 = vmatpush1.xpose.msra.mxu0 0.0
  %2759 = vmatprep.subr.mxu0 0.0
  %2760 = vmatpush1.xpose.msra.mxu0 0.0
  %2761 = vmatprep.subr.mxu0 0.0
  %2762 = vmatpush1.xpose.msra.mxu0 0.0
  %2763 = vmatprep.subr.mxu0 0.0
  %2764 = vmatpush1.xpose.msra.mxu0 0.0
  %2765 = vmatprep.subr.mxu0 0.0
  %2766 = vmatpush1.xpose.msra.mxu0 0.0
  %2767 = vmatprep.subr.mxu0 0.0
  %2768 = vmatpush1.xpose.msra.mxu0 0.0
  %2769 = vmatprep.subr.mxu0 0.0
  %2770 = vmatpush1.xpose.msra.mxu0 0.0
  %2771 = vmatprep.subr.mxu0 0.0
  %2772 = vmatpush1.xpose.msra.mxu0 0.0
  %2773 = vmatprep.subr.mxu0 0.0
  %2774 = vmatpush1.xpose.msra.mxu0 0.0
  %2775 = vmatprep.subr.mxu0 0.0
  %2776 = vmatpush1.xpose.msra.mxu0 0.0
  %2777 = vmatprep.subr.mxu0 0.0
  %2778 = vmatpush1.xpose.msra.mxu0 0.0
  %2779 = vmatprep.subr.mxu0 0.0
  %2780 = vmatpush1.xpose.msra.mxu0 0.0
  %2781 = vmatprep.subr.mxu0 0.0
  %2782 = vmatpush1.xpose.msra.mxu0 0.0
  %2783 = vmatprep.subr.mxu0 0.0
  %2784 = vmatpush1.xpose.msra.mxu0 0.0
  %2785 = vmatprep.subr.mxu0 0.0
  %2786 = vmatpush1.xpose.msra.mxu0 0.0
  %2787 = vmatprep.subr.mxu0 0.0
  %2788 = vmatpush1.xpose.msra.mxu0 0.0
  %2789 = vmatprep.subr.mxu0 0.0
  %2790 = vmatpush1.xpose.msra.mxu0 0.0
  %2791 = vmatprep.subr.mxu0 0.0
  %2792 = vmatpush1.xpose.msra.mxu0 0.0
  %2793 = vmatprep.subr.mxu0 0.0
  %2794 = vmatpush1.xpose.msra.mxu0 0.0
  %2795 = vmatprep.subr.mxu0 0.0
  %2796 = vmatpush1.xpose.msra.mxu0 0.0
  %2797 = vmatprep.subr.mxu0 0.0
  %2798 = vmatpush1.xpose.msra.mxu0 0.0
  %2799 = vmatprep.subr.mxu0 0.0
  %2800 = vmatpush1.xpose.msra.mxu0 0.0
  %2801 = vmatprep.subr.mxu0 0.0
  %2802 = vmatpush1.xpose.msra.mxu0 0.0
  %2803 = vmatprep.subr.mxu0 0.0
  %2804 = vmatpush1.xpose.msra.mxu0 0.0
  %2805 = vmatprep.subr.mxu0 0.0
  %2806 = vmatpush1.xpose.msra.mxu0 0.0
  %2807 = vmatprep.subr.mxu0 0.0
  %2808 = vmatpush1.xpose.msra.mxu0 0.0
  %2809 = vmatprep.subr.mxu0 0.0
  %2810 = vmatpush1.xpose.msra.mxu0 0.0
  %v2811 = vand.u32 %v2338, 4294901760
  %2812 = vmatprep.mubr.f32.mxu0 %v2811
  %v2813 = vand.u32 %v2337, 4294901760
  %2814 = vmatmul.mubr.f32.gmra.mrb[0].mxu0 %v2813
  %v2815 = vpop.f32.mrb[0].mxu0
  %v2816 = vadd.f32 %v2742, %v2815
  %v2817 = vpop.f32.mrb[0].mxu0
  %2818 = vdwg.mxu0
  %v2819 = vand.u32 %v2345, 4294901760
  %2820 = vmatprep.subr.mxu0 %v2819
  %v2821 = vand.u32 %v2344, 4294901760
  %2822 = vmatpush1.xpose.msra.mxu0 %v2821
  %2823 = vmatprep.subr.mxu0 0.0
  %2824 = vmatpush1.xpose.msra.mxu0 0.0
  %2825 = vmatprep.subr.mxu0 0.0
  %2826 = vmatpush1.xpose.msra.mxu0 0.0
  %2827 = vmatprep.subr.mxu0 0.0
  %2828 = vmatpush1.xpose.msra.mxu0 0.0
  %2829 = vmatprep.subr.mxu0 0.0
  %2830 = vmatpush1.xpose.msra.mxu0 0.0
  %2831 = vmatprep.subr.mxu0 0.0
  %2832 = vmatpush1.xpose.msra.mxu0 0.0
  %2833 = vmatprep.subr.mxu0 0.0
  %2834 = vmatpush1.xpose.msra.mxu0 0.0
  %2835 = vmatprep.subr.mxu0 0.0
  %2836 = vmatpush1.xpose.msra.mxu0 0.0
  %2837 = vmatprep.subr.mxu0 0.0
  %2838 = vmatpush1.xpose.msra.mxu0 0.0
  %2839 = vmatprep.subr.mxu0 0.0
  %2840 = vmatpush1.xpose.msra.mxu0 0.0
  %2841 = vmatprep.subr.mxu0 0.0
  %2842 = vmatpush1.xpose.msra.mxu0 0.0
  %2843 = vmatprep.subr.mxu0 0.0
  %2844 = vmatpush1.xpose.msra.mxu0 0.0
  %2845 = vmatprep.subr.mxu0 0.0
  %2846 = vmatpush1.xpose.msra.mxu0 0.0
  %2847 = vmatprep.subr.mxu0 0.0
  %2848 = vmatpush1.xpose.msra.mxu0 0.0
  %2849 = vmatprep.subr.mxu0 0.0
  %2850 = vmatpush1.xpose.msra.mxu0 0.0
  %2851 = vmatprep.subr.mxu0 0.0
  %2852 = vmatpush1.xpose.msra.mxu0 0.0
  %2853 = vmatprep.subr.mxu0 0.0
  %2854 = vmatpush1.xpose.msra.mxu0 0.0
  %2855 = vmatprep.subr.mxu0 0.0
  %2856 = vmatpush1.xpose.msra.mxu0 0.0
  %2857 = vmatprep.subr.mxu0 0.0
  %2858 = vmatpush1.xpose.msra.mxu0 0.0
  %2859 = vmatprep.subr.mxu0 0.0
  %2860 = vmatpush1.xpose.msra.mxu0 0.0
  %2861 = vmatprep.subr.mxu0 0.0
  %2862 = vmatpush1.xpose.msra.mxu0 0.0
  %2863 = vmatprep.subr.mxu0 0.0
  %2864 = vmatpush1.xpose.msra.mxu0 0.0
  %2865 = vmatprep.subr.mxu0 0.0
  %2866 = vmatpush1.xpose.msra.mxu0 0.0
  %2867 = vmatprep.subr.mxu0 0.0
  %2868 = vmatpush1.xpose.msra.mxu0 0.0
  %2869 = vmatprep.subr.mxu0 0.0
  %2870 = vmatpush1.xpose.msra.mxu0 0.0
  %2871 = vmatprep.subr.mxu0 0.0
  %2872 = vmatpush1.xpose.msra.mxu0 0.0
  %2873 = vmatprep.subr.mxu0 0.0
  %2874 = vmatpush1.xpose.msra.mxu0 0.0
  %2875 = vmatprep.subr.mxu0 0.0
  %2876 = vmatpush1.xpose.msra.mxu0 0.0
  %2877 = vmatprep.subr.mxu0 0.0
  %2878 = vmatpush1.xpose.msra.mxu0 0.0
  %2879 = vmatprep.subr.mxu0 0.0
  %2880 = vmatpush1.xpose.msra.mxu0 0.0
  %2881 = vmatprep.subr.mxu0 0.0
  %2882 = vmatpush1.xpose.msra.mxu0 0.0
  %2883 = vmatprep.subr.mxu0 0.0
  %2884 = vmatpush1.xpose.msra.mxu0 0.0
  %v2885 = vand.u32 %v2340, 4294901760
  %v2886 = vsub.f32 %v2340, %v2885
  %v2887 = vand.u32 %v2886, 4294901760
  %v2888 = vsub.f32 %v2886, %v2887
  %v2889 = vand.u32 %v2888, 4294901760
  %2890 = vmatprep.mubr.f32.mxu0 %v2889
  %v2891 = vand.u32 %v2339, 4294901760
  %v2892 = vsub.f32 %v2339, %v2891
  %v2893 = vand.u32 %v2892, 4294901760
  %v2894 = vsub.f32 %v2892, %v2893
  %v2895 = vand.u32 %v2894, 4294901760
  %2896 = vmatmul.mubr.f32.gmra.mrb[0].mxu0 %v2895
  %v2897 = vpop.f32.mrb[0].mxu0
  %v2898 = vadd.f32 %v2816, %v2897
  %v2899 = vpop.f32.mrb[0].mxu0
  %2900 = vdwg.mxu0
  %v2901 = vand.u32 %v2345, 4294901760
  %v2902 = vsub.f32 %v2345, %v2901
  %v2903 = vand.u32 %v2902, 4294901760
  %v2904 = vsub.f32 %v2902, %v2903
  %v2905 = vand.u32 %v2904, 4294901760
  %2906 = vmatprep.subr.mxu0 %v2905
  %v2907 = vand.u32 %v2344, 4294901760
  %v2908 = vsub.f32 %v2344, %v2907
  %v2909 = vand.u32 %v2908, 4294901760
  %v2910 = vsub.f32 %v2908, %v2909
  %v2911 = vand.u32 %v2910, 4294901760
  %2912 = vmatpush1.xpose.msra.mxu0 %v2911
  %2913 = vmatprep.subr.mxu0 0.0
  %2914 = vmatpush1.xpose.msra.mxu0 0.0
  %2915 = vmatprep.subr.mxu0 0.0
  %2916 = vmatpush1.xpose.msra.mxu0 0.0
  %2917 = vmatprep.subr.mxu0 0.0
  %2918 = vmatpush1.xpose.msra.mxu0 0.0
  %2919 = vmatprep.subr.mxu0 0.0
  %2920 = vmatpush1.xpose.msra.mxu0 0.0
  %2921 = vmatprep.subr.mxu0 0.0
  %2922 = vmatpush1.xpose.msra.mxu0 0.0
  %2923 = vmatprep.subr.mxu0 0.0
  %2924 = vmatpush1.xpose.msra.mxu0 0.0
  %2925 = vmatprep.subr.mxu0 0.0
  %2926 = vmatpush1.xpose.msra.mxu0 0.0
  %2927 = vmatprep.subr.mxu0 0.0
  %2928 = vmatpush1.xpose.msra.mxu0 0.0
  %2929 = vmatprep.subr.mxu0 0.0
  %2930 = vmatpush1.xpose.msra.mxu0 0.0
  %2931 = vmatprep.subr.mxu0 0.0
  %2932 = vmatpush1.xpose.msra.mxu0 0.0
  %2933 = vmatprep.subr.mxu0 0.0
  %2934 = vmatpush1.xpose.msra.mxu0 0.0
  %2935 = vmatprep.subr.mxu0 0.0
  %2936 = vmatpush1.xpose.msra.mxu0 0.0
  %2937 = vmatprep.subr.mxu0 0.0
  %2938 = vmatpush1.xpose.msra.mxu0 0.0
  %2939 = vmatprep.subr.mxu0 0.0
  %2940 = vmatpush1.xpose.msra.mxu0 0.0
  %2941 = vmatprep.subr.mxu0 0.0
  %2942 = vmatpush1.xpose.msra.mxu0 0.0
  %2943 = vmatprep.subr.mxu0 0.0
  %2944 = vmatpush1.xpose.msra.mxu0 0.0
  %2945 = vmatprep.subr.mxu0 0.0
  %2946 = vmatpush1.xpose.msra.mxu0 0.0
  %2947 = vmatprep.subr.mxu0 0.0
  %2948 = vmatpush1.xpose.msra.mxu0 0.0
  %2949 = vmatprep.subr.mxu0 0.0
  %2950 = vmatpush1.xpose.msra.mxu0 0.0
  %2951 = vmatprep.subr.mxu0 0.0
  %2952 = vmatpush1.xpose.msra.mxu0 0.0
  %2953 = vmatprep.subr.mxu0 0.0
  %2954 = vmatpush1.xpose.msra.mxu0 0.0
  %2955 = vmatprep.subr.mxu0 0.0
  %2956 = vmatpush1.xpose.msra.mxu0 0.0
  %2957 = vmatprep.subr.mxu0 0.0
  %2958 = vmatpush1.xpose.msra.mxu0 0.0
  %2959 = vmatprep.subr.mxu0 0.0
  %2960 = vmatpush1.xpose.msra.mxu0 0.0
  %2961 = vmatprep.subr.mxu0 0.0
  %2962 = vmatpush1.xpose.msra.mxu0 0.0
  %2963 = vmatprep.subr.mxu0 0.0
  %2964 = vmatpush1.xpose.msra.mxu0 0.0
  %2965 = vmatprep.subr.mxu0 0.0
  %2966 = vmatpush1.xpose.msra.mxu0 0.0
  %2967 = vmatprep.subr.mxu0 0.0
  %2968 = vmatpush1.xpose.msra.mxu0 0.0
  %2969 = vmatprep.subr.mxu0 0.0
  %2970 = vmatpush1.xpose.msra.mxu0 0.0
  %2971 = vmatprep.subr.mxu0 0.0
  %2972 = vmatpush1.xpose.msra.mxu0 0.0
  %2973 = vmatprep.subr.mxu0 0.0
  %2974 = vmatpush1.xpose.msra.mxu0 0.0
  %v2975 = vand.u32 %v2340, 4294901760
  %2976 = vmatprep.mubr.f32.mxu0 %v2975
  %v2977 = vand.u32 %v2339, 4294901760
  %2978 = vmatmul.mubr.f32.gmra.mrb[0].mxu0 %v2977
  %v2979 = vpop.f32.mrb[0].mxu0
  %v2980 = vadd.f32 %v2898, %v2979
  %v2981 = vpop.f32.mrb[0].mxu0
  %2982 = vdwg.mxu0
  %v2983 = vand.u32 %v2345, 4294901760
  %v2984 = vsub.f32 %v2345, %v2983
  %2985 = vmatprep.subr.mxu0 %v2984
  %v2986 = vand.u32 %v2344, 4294901760
  %v2987 = vsub.f32 %v2344, %v2986
  %2988 = vmatpush1.xpose.msra.mxu0 %v2987
  %2989 = vmatprep.subr.mxu0 0.0
  %2990 = vmatpush1.xpose.msra.mxu0 0.0
  %2991 = vmatprep.subr.mxu0 0.0
  %2992 = vmatpush1.xpose.msra.mxu0 0.0
  %2993 = vmatprep.subr.mxu0 0.0
  %2994 = vmatpush1.xpose.msra.mxu0 0.0
  %2995 = vmatprep.subr.mxu0 0.0
  %2996 = vmatpush1.xpose.msra.mxu0 0.0
  %2997 = vmatprep.subr.mxu0 0.0
  %2998 = vmatpush1.xpose.msra.mxu0 0.0
  %2999 = vmatprep.subr.mxu0 0.0
  %3000 = vmatpush1.xpose.msra.mxu0 0.0
  %3001 = vmatprep.subr.mxu0 0.0
  %3002 = vmatpush1.xpose.msra.mxu0 0.0
  %3003 = vmatprep.subr.mxu0 0.0
  %3004 = vmatpush1.xpose.msra.mxu0 0.0
  %3005 = vmatprep.subr.mxu0 0.0
  %3006 = vmatpush1.xpose.msra.mxu0 0.0
  %3007 = vmatprep.subr.mxu0 0.0
  %3008 = vmatpush1.xpose.msra.mxu0 0.0
  %3009 = vmatprep.subr.mxu0 0.0
  %3010 = vmatpush1.xpose.msra.mxu0 0.0
  %3011 = vmatprep.subr.mxu0 0.0
  %3012 = vmatpush1.xpose.msra.mxu0 0.0
  %3013 = vmatprep.subr.mxu0 0.0
  %3014 = vmatpush1.xpose.msra.mxu0 0.0
  %3015 = vmatprep.subr.mxu0 0.0
  %3016 = vmatpush1.xpose.msra.mxu0 0.0
  %3017 = vmatprep.subr.mxu0 0.0
  %3018 = vmatpush1.xpose.msra.mxu0 0.0
  %3019 = vmatprep.subr.mxu0 0.0
  %3020 = vmatpush1.xpose.msra.mxu0 0.0
  %3021 = vmatprep.subr.mxu0 0.0
  %3022 = vmatpush1.xpose.msra.mxu0 0.0
  %3023 = vmatprep.subr.mxu0 0.0
  %3024 = vmatpush1.xpose.msra.mxu0 0.0
  %3025 = vmatprep.subr.mxu0 0.0
  %3026 = vmatpush1.xpose.msra.mxu0 0.0
  %3027 = vmatprep.subr.mxu0 0.0
  %3028 = vmatpush1.xpose.msra.mxu0 0.0
  %3029 = vmatprep.subr.mxu0 0.0
  %3030 = vmatpush1.xpose.msra.mxu0 0.0
  %3031 = vmatprep.subr.mxu0 0.0
  %3032 = vmatpush1.xpose.msra.mxu0 0.0
  %3033 = vmatprep.subr.mxu0 0.0
  %3034 = vmatpush1.xpose.msra.mxu0 0.0
  %3035 = vmatprep.subr.mxu0 0.0
  %3036 = vmatpush1.xpose.msra.mxu0 0.0
  %3037 = vmatprep.subr.mxu0 0.0
  %3038 = vmatpush1.xpose.msra.mxu0 0.0
  %3039 = vmatprep.subr.mxu0 0.0
  %3040 = vmatpush1.xpose.msra.mxu0 0.0
  %3041 = vmatprep.subr.mxu0 0.0
  %3042 = vmatpush1.xpose.msra.mxu0 0.0
  %3043 = vmatprep.subr.mxu0 0.0
  %3044 = vmatpush1.xpose.msra.mxu0 0.0
  %3045 = vmatprep.subr.mxu0 0.0
  %3046 = vmatpush1.xpose.msra.mxu0 0.0
  %3047 = vmatprep.subr.mxu0 0.0
  %3048 = vmatpush1.xpose.msra.mxu0 0.0
  %3049 = vmatprep.subr.mxu0 0.0
  %3050 = vmatpush1.xpose.msra.mxu0 0.0
  %v3051 = vand.u32 %v2340, 4294901760
  %v3052 = vsub.f32 %v2340, %v3051
  %3053 = vmatprep.mubr.f32.mxu0 %v3052
  %v3054 = vand.u32 %v2339, 4294901760
  %v3055 = vsub.f32 %v2339, %v3054
  %3056 = vmatmul.mubr.f32.gmra.mrb[0].mxu0 %v3055
  %v3057 = vpop.f32.mrb[0].mxu0
  %v3058 = vadd.f32 %v2980, %v3057
  %v3059 = vpop.f32.mrb[0].mxu0
  %3060 = vdwg.mxu0
  %v3061 = vand.u32 %v2345, 4294901760
  %3062 = vmatprep.subr.mxu0 %v3061
  %v3063 = vand.u32 %v2344, 4294901760
  %3064 = vmatpush1.xpose.msra.mxu0 %v3063
  %3065 = vmatprep.subr.mxu0 0.0
  %3066 = vmatpush1.xpose.msra.mxu0 0.0
  %3067 = vmatprep.subr.mxu0 0.0
  %3068 = vmatpush1.xpose.msra.mxu0 0.0
  %3069 = vmatprep.subr.mxu0 0.0
  %3070 = vmatpush1.xpose.msra.mxu0 0.0
  %3071 = vmatprep.subr.mxu0 0.0
  %3072 = vmatpush1.xpose.msra.mxu0 0.0
  %3073 = vmatprep.subr.mxu0 0.0
  %3074 = vmatpush1.xpose.msra.mxu0 0.0
  %3075 = vmatprep.subr.mxu0 0.0
  %3076 = vmatpush1.xpose.msra.mxu0 0.0
  %3077 = vmatprep.subr.mxu0 0.0
  %3078 = vmatpush1.xpose.msra.mxu0 0.0
  %3079 = vmatprep.subr.mxu0 0.0
  %3080 = vmatpush1.xpose.msra.mxu0 0.0
  %3081 = vmatprep.subr.mxu0 0.0
  %3082 = vmatpush1.xpose.msra.mxu0 0.0
  %3083 = vmatprep.subr.mxu0 0.0
  %3084 = vmatpush1.xpose.msra.mxu0 0.0
  %3085 = vmatprep.subr.mxu0 0.0
  %3086 = vmatpush1.xpose.msra.mxu0 0.0
  %3087 = vmatprep.subr.mxu0 0.0
  %3088 = vmatpush1.xpose.msra.mxu0 0.0
  %3089 = vmatprep.subr.mxu0 0.0
  %3090 = vmatpush1.xpose.msra.mxu0 0.0
  %3091 = vmatprep.subr.mxu0 0.0
  %3092 = vmatpush1.xpose.msra.mxu0 0.0
  %3093 = vmatprep.subr.mxu0 0.0
  %3094 = vmatpush1.xpose.msra.mxu0 0.0
  %3095 = vmatprep.subr.mxu0 0.0
  %3096 = vmatpush1.xpose.msra.mxu0 0.0
  %3097 = vmatprep.subr.mxu0 0.0
  %3098 = vmatpush1.xpose.msra.mxu0 0.0
  %3099 = vmatprep.subr.mxu0 0.0
  %3100 = vmatpush1.xpose.msra.mxu0 0.0
  %3101 = vmatprep.subr.mxu0 0.0
  %3102 = vmatpush1.xpose.msra.mxu0 0.0
  %3103 = vmatprep.subr.mxu0 0.0
  %3104 = vmatpush1.xpose.msra.mxu0 0.0
  %3105 = vmatprep.subr.mxu0 0.0
  %3106 = vmatpush1.xpose.msra.mxu0 0.0
  %3107 = vmatprep.subr.mxu0 0.0
  %3108 = vmatpush1.xpose.msra.mxu0 0.0
  %3109 = vmatprep.subr.mxu0 0.0
  %3110 = vmatpush1.xpose.msra.mxu0 0.0
  %3111 = vmatprep.subr.mxu0 0.0
  %3112 = vmatpush1.xpose.msra.mxu0 0.0
  %3113 = vmatprep.subr.mxu0 0.0
  %3114 = vmatpush1.xpose.msra.mxu0 0.0
  %3115 = vmatprep.subr.mxu0 0.0
  %3116 = vmatpush1.xpose.msra.mxu0 0.0
  %3117 = vmatprep.subr.mxu0 0.0
  %3118 = vmatpush1.xpose.msra.mxu0 0.0
  %3119 = vmatprep.subr.mxu0 0.0
  %3120 = vmatpush1.xpose.msra.mxu0 0.0
  %3121 = vmatprep.subr.mxu0 0.0
  %3122 = vmatpush1.xpose.msra.mxu0 0.0
  %3123 = vmatprep.subr.mxu0 0.0
  %3124 = vmatpush1.xpose.msra.mxu0 0.0
  %3125 = vmatprep.subr.mxu0 0.0
  %3126 = vmatpush1.xpose.msra.mxu0 0.0
  %v3127 = vand.u32 %v2340, 4294901760
  %v3128 = vsub.f32 %v2340, %v3127
  %v3129 = vand.u32 %v3128, 4294901760
  %3130 = vmatprep.mubr.f32.mxu0 %v3129
  %v3131 = vand.u32 %v2339, 4294901760
  %v3132 = vsub.f32 %v2339, %v3131
  %v3133 = vand.u32 %v3132, 4294901760
  %3134 = vmatmul.mubr.f32.gmra.mrb[0].mxu0 %v3133
  %v3135 = vpop.f32.mrb[0].mxu0
  %v3136 = vadd.f32 %v3058, %v3135
  %v3137 = vpop.f32.mrb[0].mxu0
  %3138 = vdwg.mxu0
  %v3139 = vand.u32 %v2345, 4294901760
  %v3140 = vsub.f32 %v2345, %v3139
  %v3141 = vand.u32 %v3140, 4294901760
  %3142 = vmatprep.subr.mxu0 %v3141
  %v3143 = vand.u32 %v2344, 4294901760
  %v3144 = vsub.f32 %v2344, %v3143
  %v3145 = vand.u32 %v3144, 4294901760
  %3146 = vmatpush1.xpose.msra.mxu0 %v3145
  %3147 = vmatprep.subr.mxu0 0.0
  %3148 = vmatpush1.xpose.msra.mxu0 0.0
  %3149 = vmatprep.subr.mxu0 0.0
  %3150 = vmatpush1.xpose.msra.mxu0 0.0
  %3151 = vmatprep.subr.mxu0 0.0
  %3152 = vmatpush1.xpose.msra.mxu0 0.0
  %3153 = vmatprep.subr.mxu0 0.0
  %3154 = vmatpush1.xpose.msra.mxu0 0.0
  %3155 = vmatprep.subr.mxu0 0.0
  %3156 = vmatpush1.xpose.msra.mxu0 0.0
  %3157 = vmatprep.subr.mxu0 0.0
  %3158 = vmatpush1.xpose.msra.mxu0 0.0
  %3159 = vmatprep.subr.mxu0 0.0
  %3160 = vmatpush1.xpose.msra.mxu0 0.0
  %3161 = vmatprep.subr.mxu0 0.0
  %3162 = vmatpush1.xpose.msra.mxu0 0.0
  %3163 = vmatprep.subr.mxu0 0.0
  %3164 = vmatpush1.xpose.msra.mxu0 0.0
  %3165 = vmatprep.subr.mxu0 0.0
  %3166 = vmatpush1.xpose.msra.mxu0 0.0
  %3167 = vmatprep.subr.mxu0 0.0
  %3168 = vmatpush1.xpose.msra.mxu0 0.0
  %3169 = vmatprep.subr.mxu0 0.0
  %3170 = vmatpush1.xpose.msra.mxu0 0.0
  %3171 = vmatprep.subr.mxu0 0.0
  %3172 = vmatpush1.xpose.msra.mxu0 0.0
  %3173 = vmatprep.subr.mxu0 0.0
  %3174 = vmatpush1.xpose.msra.mxu0 0.0
  %3175 = vmatprep.subr.mxu0 0.0
  %3176 = vmatpush1.xpose.msra.mxu0 0.0
  %3177 = vmatprep.subr.mxu0 0.0
  %3178 = vmatpush1.xpose.msra.mxu0 0.0
  %3179 = vmatprep.subr.mxu0 0.0
  %3180 = vmatpush1.xpose.msra.mxu0 0.0
  %3181 = vmatprep.subr.mxu0 0.0
  %3182 = vmatpush1.xpose.msra.mxu0 0.0
  %3183 = vmatprep.subr.mxu0 0.0
  %3184 = vmatpush1.xpose.msra.mxu0 0.0
  %3185 = vmatprep.subr.mxu0 0.0
  %3186 = vmatpush1.xpose.msra.mxu0 0.0
  %3187 = vmatprep.subr.mxu0 0.0
  %3188 = vmatpush1.xpose.msra.mxu0 0.0
  %3189 = vmatprep.subr.mxu0 0.0
  %3190 = vmatpush1.xpose.msra.mxu0 0.0
  %3191 = vmatprep.subr.mxu0 0.0
  %3192 = vmatpush1.xpose.msra.mxu0 0.0
  %3193 = vmatprep.subr.mxu0 0.0
  %3194 = vmatpush1.xpose.msra.mxu0 0.0
  %3195 = vmatprep.subr.mxu0 0.0
  %3196 = vmatpush1.xpose.msra.mxu0 0.0
  %3197 = vmatprep.subr.mxu0 0.0
  %3198 = vmatpush1.xpose.msra.mxu0 0.0
  %3199 = vmatprep.subr.mxu0 0.0
  %3200 = vmatpush1.xpose.msra.mxu0 0.0
  %3201 = vmatprep.subr.mxu0 0.0
  %3202 = vmatpush1.xpose.msra.mxu0 0.0
  %3203 = vmatprep.subr.mxu0 0.0
  %3204 = vmatpush1.xpose.msra.mxu0 0.0
  %3205 = vmatprep.subr.mxu0 0.0
  %3206 = vmatpush1.xpose.msra.mxu0 0.0
  %3207 = vmatprep.subr.mxu0 0.0
  %3208 = vmatpush1.xpose.msra.mxu0 0.0
  %v3209 = vand.u32 %v2340, 4294901760
  %3210 = vmatprep.mubr.f32.mxu0 %v3209
  %v3211 = vand.u32 %v2339, 4294901760
  %3212 = vmatmul.mubr.f32.gmra.mrb[0].mxu0 %v3211
  %v3213 = vpop.f32.mrb[0].mxu0
  %v3214 = vadd.f32 %v3136, %v3213
  %v3215 = vpop.f32.mrb[0].mxu0
  %3216 = vdwg.mxu0
  %v3217 = vand.u32 %v2345, 4294901760
  %3218 = vmatprep.subr.mxu0 %v3217
  %v3219 = vand.u32 %v2344, 4294901760
  %3220 = vmatpush1.xpose.msra.mxu0 %v3219
  %3221 = vmatprep.subr.mxu0 0.0
  %3222 = vmatpush1.xpose.msra.mxu0 0.0
  %3223 = vmatprep.subr.mxu0 0.0
  %3224 = vmatpush1.xpose.msra.mxu0 0.0
  %3225 = vmatprep.subr.mxu0 0.0
  %3226 = vmatpush1.xpose.msra.mxu0 0.0
  %3227 = vmatprep.subr.mxu0 0.0
  %3228 = vmatpush1.xpose.msra.mxu0 0.0
  %3229 = vmatprep.subr.mxu0 0.0
  %3230 = vmatpush1.xpose.msra.mxu0 0.0
  %3231 = vmatprep.subr.mxu0 0.0
  %3232 = vmatpush1.xpose.msra.mxu0 0.0
  %3233 = vmatprep.subr.mxu0 0.0
  %3234 = vmatpush1.xpose.msra.mxu0 0.0
  %3235 = vmatprep.subr.mxu0 0.0
  %3236 = vmatpush1.xpose.msra.mxu0 0.0
  %3237 = vmatprep.subr.mxu0 0.0
  %3238 = vmatpush1.xpose.msra.mxu0 0.0
  %3239 = vmatprep.subr.mxu0 0.0
  %3240 = vmatpush1.xpose.msra.mxu0 0.0
  %3241 = vmatprep.subr.mxu0 0.0
  %3242 = vmatpush1.xpose.msra.mxu0 0.0
  %3243 = vmatprep.subr.mxu0 0.0
  %3244 = vmatpush1.xpose.msra.mxu0 0.0
  %3245 = vmatprep.subr.mxu0 0.0
  %3246 = vmatpush1.xpose.msra.mxu0 0.0
  %3247 = vmatprep.subr.mxu0 0.0
  %3248 = vmatpush1.xpose.msra.mxu0 0.0
  %3249 = vmatprep.subr.mxu0 0.0
  %3250 = vmatpush1.xpose.msra.mxu0 0.0
  %3251 = vmatprep.subr.mxu0 0.0
  %3252 = vmatpush1.xpose.msra.mxu0 0.0
  %3253 = vmatprep.subr.mxu0 0.0
  %3254 = vmatpush1.xpose.msra.mxu0 0.0
  %3255 = vmatprep.subr.mxu0 0.0
  %3256 = vmatpush1.xpose.msra.mxu0 0.0
  %3257 = vmatprep.subr.mxu0 0.0
  %3258 = vmatpush1.xpose.msra.mxu0 0.0
  %3259 = vmatprep.subr.mxu0 0.0
  %3260 = vmatpush1.xpose.msra.mxu0 0.0
  %3261 = vmatprep.subr.mxu0 0.0
  %3262 = vmatpush1.xpose.msra.mxu0 0.0
  %3263 = vmatprep.subr.mxu0 0.0
  %3264 = vmatpush1.xpose.msra.mxu0 0.0
  %3265 = vmatprep.subr.mxu0 0.0
  %3266 = vmatpush1.xpose.msra.mxu0 0.0
  %3267 = vmatprep.subr.mxu0 0.0
  %3268 = vmatpush1.xpose.msra.mxu0 0.0
  %3269 = vmatprep.subr.mxu0 0.0
  %3270 = vmatpush1.xpose.msra.mxu0 0.0
  %3271 = vmatprep.subr.mxu0 0.0
  %3272 = vmatpush1.xpose.msra.mxu0 0.0
  %3273 = vmatprep.subr.mxu0 0.0
  %3274 = vmatpush1.xpose.msra.mxu0 0.0
  %3275 = vmatprep.subr.mxu0 0.0
  %3276 = vmatpush1.xpose.msra.mxu0 0.0
  %3277 = vmatprep.subr.mxu0 0.0
  %3278 = vmatpush1.xpose.msra.mxu0 0.0
  %3279 = vmatprep.subr.mxu0 0.0
  %3280 = vmatpush1.xpose.msra.mxu0 0.0
  %3281 = vmatprep.subr.mxu0 0.0
  %3282 = vmatpush1.xpose.msra.mxu0 0.0
  %v3283 = vand.u32 %v2340, 4294901760
  %3284 = vmatprep.mubr.f32.mxu0 %v3283
  %v3285 = vand.u32 %v2339, 4294901760
  %3286 = vmatmul.mubr.f32.gmra.mrb[0].mxu0 %v3285
  %v3287 = vpop.f32.mrb[0].mxu0
  %v3288 = vadd.f32 %v3214, %v3287
  %v3289 = vpop.f32.mrb[0].mxu0
  %3290 = vdwg.mxu0
  %3291 = vmatprep.subr.mxu0 0.0
  %v3292 = vand.u32 %v2346, 4294901760
  %3293 = vmatpush1.xpose.msra.mxu0 %v3292
  %3294 = vmatprep.subr.mxu0 0.0
  %3295 = vmatpush1.xpose.msra.mxu0 0.0
  %3296 = vmatprep.subr.mxu0 0.0
  %3297 = vmatpush1.xpose.msra.mxu0 0.0
  %3298 = vmatprep.subr.mxu0 0.0
  %3299 = vmatpush1.xpose.msra.mxu0 0.0
  %3300 = vmatprep.subr.mxu0 0.0
  %3301 = vmatpush1.xpose.msra.mxu0 0.0
  %3302 = vmatprep.subr.mxu0 0.0
  %3303 = vmatpush1.xpose.msra.mxu0 0.0
  %3304 = vmatprep.subr.mxu0 0.0
  %3305 = vmatpush1.xpose.msra.mxu0 0.0
  %3306 = vmatprep.subr.mxu0 0.0
  %3307 = vmatpush1.xpose.msra.mxu0 0.0
  %3308 = vmatprep.subr.mxu0 0.0
  %3309 = vmatpush1.xpose.msra.mxu0 0.0
  %3310 = vmatprep.subr.mxu0 0.0
  %3311 = vmatpush1.xpose.msra.mxu0 0.0
  %3312 = vmatprep.subr.mxu0 0.0
  %3313 = vmatpush1.xpose.msra.mxu0 0.0
  %3314 = vmatprep.subr.mxu0 0.0
  %3315 = vmatpush1.xpose.msra.mxu0 0.0
  %3316 = vmatprep.subr.mxu0 0.0
  %3317 = vmatpush1.xpose.msra.mxu0 0.0
  %3318 = vmatprep.subr.mxu0 0.0
  %3319 = vmatpush1.xpose.msra.mxu0 0.0
  %3320 = vmatprep.subr.mxu0 0.0
  %3321 = vmatpush1.xpose.msra.mxu0 0.0
  %3322 = vmatprep.subr.mxu0 0.0
  %3323 = vmatpush1.xpose.msra.mxu0 0.0
  %3324 = vmatprep.subr.mxu0 0.0
  %3325 = vmatpush1.xpose.msra.mxu0 0.0
  %3326 = vmatprep.subr.mxu0 0.0
  %3327 = vmatpush1.xpose.msra.mxu0 0.0
  %3328 = vmatprep.subr.mxu0 0.0
  %3329 = vmatpush1.xpose.msra.mxu0 0.0
  %3330 = vmatprep.subr.mxu0 0.0
  %3331 = vmatpush1.xpose.msra.mxu0 0.0
  %3332 = vmatprep.subr.mxu0 0.0
  %3333 = vmatpush1.xpose.msra.mxu0 0.0
  %3334 = vmatprep.subr.mxu0 0.0
  %3335 = vmatpush1.xpose.msra.mxu0 0.0
  %3336 = vmatprep.subr.mxu0 0.0
  %3337 = vmatpush1.xpose.msra.mxu0 0.0
  %3338 = vmatprep.subr.mxu0 0.0
  %3339 = vmatpush1.xpose.msra.mxu0 0.0
  %3340 = vmatprep.subr.mxu0 0.0
  %3341 = vmatpush1.xpose.msra.mxu0 0.0
  %3342 = vmatprep.subr.mxu0 0.0
  %3343 = vmatpush1.xpose.msra.mxu0 0.0
  %3344 = vmatprep.subr.mxu0 0.0
  %3345 = vmatpush1.xpose.msra.mxu0 0.0
  %3346 = vmatprep.subr.mxu0 0.0
  %3347 = vmatpush1.xpose.msra.mxu0 0.0
  %3348 = vmatprep.subr.mxu0 0.0
  %3349 = vmatpush1.xpose.msra.mxu0 0.0
  %3350 = vmatprep.subr.mxu0 0.0
  %3351 = vmatpush1.xpose.msra.mxu0 0.0
  %3352 = vmatprep.subr.mxu0 0.0
  %3353 = vmatpush1.xpose.msra.mxu0 0.0
  %3354 = vmatprep.subr.mxu0 0.0
  %3355 = vmatpush1.xpose.msra.mxu0 0.0
  %3356 = vmatprep.mubr.f32.mxu0 0.0
  %v3357 = vand.u32 %v2341, 4294901760
  %v3358 = vsub.f32 %v2341, %v3357
  %v3359 = vand.u32 %v3358, 4294901760
  %v3360 = vsub.f32 %v3358, %v3359
  %v3361 = vand.u32 %v3360, 4294901760
  %3362 = vmatmul.mubr.f32.gmra.mrb[0].mxu0 %v3361
  %v3363 = vpop.f32.mrb[0].mxu0
  %v3364 = vadd.f32 %v3288, %v3363
  %v3365 = vpop.f32.mrb[0].mxu0
  %3366 = vdwg.mxu0
  %3367 = vmatprep.subr.mxu0 0.0
  %v3368 = vand.u32 %v2346, 4294901760
  %v3369 = vsub.f32 %v2346, %v3368
  %v3370 = vand.u32 %v3369, 4294901760
  %v3371 = vsub.f32 %v3369, %v3370
  %v3372 = vand.u32 %v3371, 4294901760
  %3373 = vmatpush1.xpose.msra.mxu0 %v3372
  %3374 = vmatprep.subr.mxu0 0.0
  %3375 = vmatpush1.xpose.msra.mxu0 0.0
  %3376 = vmatprep.subr.mxu0 0.0
  %3377 = vmatpush1.xpose.msra.mxu0 0.0
  %3378 = vmatprep.subr.mxu0 0.0
  %3379 = vmatpush1.xpose.msra.mxu0 0.0
  %3380 = vmatprep.subr.mxu0 0.0
  %3381 = vmatpush1.xpose.msra.mxu0 0.0
  %3382 = vmatprep.subr.mxu0 0.0
  %3383 = vmatpush1.xpose.msra.mxu0 0.0
  %3384 = vmatprep.subr.mxu0 0.0
  %3385 = vmatpush1.xpose.msra.mxu0 0.0
  %3386 = vmatprep.subr.mxu0 0.0
  %3387 = vmatpush1.xpose.msra.mxu0 0.0
  %3388 = vmatprep.subr.mxu0 0.0
  %3389 = vmatpush1.xpose.msra.mxu0 0.0
  %3390 = vmatprep.subr.mxu0 0.0
  %3391 = vmatpush1.xpose.msra.mxu0 0.0
  %3392 = vmatprep.subr.mxu0 0.0
  %3393 = vmatpush1.xpose.msra.mxu0 0.0
  %3394 = vmatprep.subr.mxu0 0.0
  %3395 = vmatpush1.xpose.msra.mxu0 0.0
  %3396 = vmatprep.subr.mxu0 0.0
  %3397 = vmatpush1.xpose.msra.mxu0 0.0
  %3398 = vmatprep.subr.mxu0 0.0
  %3399 = vmatpush1.xpose.msra.mxu0 0.0
  %3400 = vmatprep.subr.mxu0 0.0
  %3401 = vmatpush1.xpose.msra.mxu0 0.0
  %3402 = vmatprep.subr.mxu0 0.0
  %3403 = vmatpush1.xpose.msra.mxu0 0.0
  %3404 = vmatprep.subr.mxu0 0.0
  %3405 = vmatpush1.xpose.msra.mxu0 0.0
  %3406 = vmatprep.subr.mxu0 0.0
  %3407 = vmatpush1.xpose.msra.mxu0 0.0
  %3408 = vmatprep.subr.mxu0 0.0
  %3409 = vmatpush1.xpose.msra.mxu0 0.0
  %3410 = vmatprep.subr.mxu0 0.0
  %3411 = vmatpush1.xpose.msra.mxu0 0.0
  %3412 = vmatprep.subr.mxu0 0.0
  %3413 = vmatpush1.xpose.msra.mxu0 0.0
  %3414 = vmatprep.subr.mxu0 0.0
  %3415 = vmatpush1.xpose.msra.mxu0 0.0
  %3416 = vmatprep.subr.mxu0 0.0
  %3417 = vmatpush1.xpose.msra.mxu0 0.0
  %3418 = vmatprep.subr.mxu0 0.0
  %3419 = vmatpush1.xpose.msra.mxu0 0.0
  %3420 = vmatprep.subr.mxu0 0.0
  %3421 = vmatpush1.xpose.msra.mxu0 0.0
  %3422 = vmatprep.subr.mxu0 0.0
  %3423 = vmatpush1.xpose.msra.mxu0 0.0
  %3424 = vmatprep.subr.mxu0 0.0
  %3425 = vmatpush1.xpose.msra.mxu0 0.0
  %3426 = vmatprep.subr.mxu0 0.0
  %3427 = vmatpush1.xpose.msra.mxu0 0.0
  %3428 = vmatprep.subr.mxu0 0.0
  %3429 = vmatpush1.xpose.msra.mxu0 0.0
  %3430 = vmatprep.subr.mxu0 0.0
  %3431 = vmatpush1.xpose.msra.mxu0 0.0
  %3432 = vmatprep.subr.mxu0 0.0
  %3433 = vmatpush1.xpose.msra.mxu0 0.0
  %3434 = vmatprep.subr.mxu0 0.0
  %3435 = vmatpush1.xpose.msra.mxu0 0.0
  %3436 = vmatprep.mubr.f32.mxu0 0.0
  %v3437 = vand.u32 %v2341, 4294901760
  %3438 = vmatmul.mubr.f32.gmra.mrb[0].mxu0 %v3437
  %v3439 = vpop.f32.mrb[0].mxu0
  %v3440 = vadd.f32 %v3364, %v3439
  %v3441 = vpop.f32.mrb[0].mxu0
  %3442 = vdwg.mxu0
  %3443 = vmatprep.subr.mxu0 0.0
  %v3444 = vand.u32 %v2346, 4294901760
  %v3445 = vsub.f32 %v2346, %v3444
  %3446 = vmatpush1.xpose.msra.mxu0 %v3445
  %3447 = vmatprep.subr.mxu0 0.0
  %3448 = vmatpush1.xpose.msra.mxu0 0.0
  %3449 = vmatprep.subr.mxu0 0.0
  %3450 = vmatpush1.xpose.msra.mxu0 0.0
  %3451 = vmatprep.subr.mxu0 0.0
  %3452 = vmatpush1.xpose.msra.mxu0 0.0
  %3453 = vmatprep.subr.mxu0 0.0
  %3454 = vmatpush1.xpose.msra.mxu0 0.0
  %3455 = vmatprep.subr.mxu0 0.0
  %3456 = vmatpush1.xpose.msra.mxu0 0.0
  %3457 = vmatprep.subr.mxu0 0.0
  %3458 = vmatpush1.xpose.msra.mxu0 0.0
  %3459 = vmatprep.subr.mxu0 0.0
  %3460 = vmatpush1.xpose.msra.mxu0 0.0
  %3461 = vmatprep.subr.mxu0 0.0
  %3462 = vmatpush1.xpose.msra.mxu0 0.0
  %3463 = vmatprep.subr.mxu0 0.0
  %3464 = vmatpush1.xpose.msra.mxu0 0.0
  %3465 = vmatprep.subr.mxu0 0.0
  %3466 = vmatpush1.xpose.msra.mxu0 0.0
  %3467 = vmatprep.subr.mxu0 0.0
  %3468 = vmatpush1.xpose.msra.mxu0 0.0
  %3469 = vmatprep.subr.mxu0 0.0
  %3470 = vmatpush1.xpose.msra.mxu0 0.0
  %3471 = vmatprep.subr.mxu0 0.0
  %3472 = vmatpush1.xpose.msra.mxu0 0.0
  %3473 = vmatprep.subr.mxu0 0.0
  %3474 = vmatpush1.xpose.msra.mxu0 0.0
  %3475 = vmatprep.subr.mxu0 0.0
  %3476 = vmatpush1.xpose.msra.mxu0 0.0
  %3477 = vmatprep.subr.mxu0 0.0
  %3478 = vmatpush1.xpose.msra.mxu0 0.0
  %3479 = vmatprep.subr.mxu0 0.0
  %3480 = vmatpush1.xpose.msra.mxu0 0.0
  %3481 = vmatprep.subr.mxu0 0.0
  %3482 = vmatpush1.xpose.msra.mxu0 0.0
  %3483 = vmatprep.subr.mxu0 0.0
  %3484 = vmatpush1.xpose.msra.mxu0 0.0
  %3485 = vmatprep.subr.mxu0 0.0
  %3486 = vmatpush1.xpose.msra.mxu0 0.0
  %3487 = vmatprep.subr.mxu0 0.0
  %3488 = vmatpush1.xpose.msra.mxu0 0.0
  %3489 = vmatprep.subr.mxu0 0.0
  %3490 = vmatpush1.xpose.msra.mxu0 0.0
  %3491 = vmatprep.subr.mxu0 0.0
  %3492 = vmatpush1.xpose.msra.mxu0 0.0
  %3493 = vmatprep.subr.mxu0 0.0
  %3494 = vmatpush1.xpose.msra.mxu0 0.0
  %3495 = vmatprep.subr.mxu0 0.0
  %3496 = vmatpush1.xpose.msra.mxu0 0.0
  %3497 = vmatprep.subr.mxu0 0.0
  %3498 = vmatpush1.xpose.msra.mxu0 0.0
  %3499 = vmatprep.subr.mxu0 0.0
  %3500 = vmatpush1.xpose.msra.mxu0 0.0
  %3501 = vmatprep.subr.mxu0 0.0
  %3502 = vmatpush1.xpose.msra.mxu0 0.0
  %3503 = vmatprep.subr.mxu0 0.0
  %3504 = vmatpush1.xpose.msra.mxu0 0.0
  %3505 = vmatprep.subr.mxu0 0.0
  %3506 = vmatpush1.xpose.msra.mxu0 0.0
  %3507 = vmatprep.subr.mxu0 0.0
  %3508 = vmatpush1.xpose.msra.mxu0 0.0
  %3509 = vmatprep.mubr.f32.mxu0 0.0
  %v3510 = vand.u32 %v2341, 4294901760
  %v3511 = vsub.f32 %v2341, %v3510
  %3512 = vmatmul.mubr.f32.gmra.mrb[0].mxu0 %v3511
  %v3513 = vpop.f32.mrb[0].mxu0
  %v3514 = vadd.f32 %v3440, %v3513
  %v3515 = vpop.f32.mrb[0].mxu0
  %3516 = vdwg.mxu0
  %3517 = vmatprep.subr.mxu0 0.0
  %v3518 = vand.u32 %v2346, 4294901760
  %3519 = vmatpush1.xpose.msra.mxu0 %v3518
  %3520 = vmatprep.subr.mxu0 0.0
  %3521 = vmatpush1.xpose.msra.mxu0 0.0
  %3522 = vmatprep.subr.mxu0 0.0
  %3523 = vmatpush1.xpose.msra.mxu0 0.0
  %3524 = vmatprep.subr.mxu0 0.0
  %3525 = vmatpush1.xpose.msra.mxu0 0.0
  %3526 = vmatprep.subr.mxu0 0.0
  %3527 = vmatpush1.xpose.msra.mxu0 0.0
  %3528 = vmatprep.subr.mxu0 0.0
  %3529 = vmatpush1.xpose.msra.mxu0 0.0
  %3530 = vmatprep.subr.mxu0 0.0
  %3531 = vmatpush1.xpose.msra.mxu0 0.0
  %3532 = vmatprep.subr.mxu0 0.0
  %3533 = vmatpush1.xpose.msra.mxu0 0.0
  %3534 = vmatprep.subr.mxu0 0.0
  %3535 = vmatpush1.xpose.msra.mxu0 0.0
  %3536 = vmatprep.subr.mxu0 0.0
  %3537 = vmatpush1.xpose.msra.mxu0 0.0
  %3538 = vmatprep.subr.mxu0 0.0
  %3539 = vmatpush1.xpose.msra.mxu0 0.0
  %3540 = vmatprep.subr.mxu0 0.0
  %3541 = vmatpush1.xpose.msra.mxu0 0.0
  %3542 = vmatprep.subr.mxu0 0.0
  %3543 = vmatpush1.xpose.msra.mxu0 0.0
  %3544 = vmatprep.subr.mxu0 0.0
  %3545 = vmatpush1.xpose.msra.mxu0 0.0
  %3546 = vmatprep.subr.mxu0 0.0
  %3547 = vmatpush1.xpose.msra.mxu0 0.0
  %3548 = vmatprep.subr.mxu0 0.0
  %3549 = vmatpush1.xpose.msra.mxu0 0.0
  %3550 = vmatprep.subr.mxu0 0.0
  %3551 = vmatpush1.xpose.msra.mxu0 0.0
  %3552 = vmatprep.subr.mxu0 0.0
  %3553 = vmatpush1.xpose.msra.mxu0 0.0
  %3554 = vmatprep.subr.mxu0 0.0
  %3555 = vmatpush1.xpose.msra.mxu0 0.0
  %3556 = vmatprep.subr.mxu0 0.0
  %3557 = vmatpush1.xpose.msra.mxu0 0.0
  %3558 = vmatprep.subr.mxu0 0.0
  %3559 = vmatpush1.xpose.msra.mxu0 0.0
  %3560 = vmatprep.subr.mxu0 0.0
  %3561 = vmatpush1.xpose.msra.mxu0 0.0
  %3562 = vmatprep.subr.mxu0 0.0
  %3563 = vmatpush1.xpose.msra.mxu0 0.0
  %3564 = vmatprep.subr.mxu0 0.0
  %3565 = vmatpush1.xpose.msra.mxu0 0.0
  %3566 = vmatprep.subr.mxu0 0.0
  %3567 = vmatpush1.xpose.msra.mxu0 0.0
  %3568 = vmatprep.subr.mxu0 0.0
  %3569 = vmatpush1.xpose.msra.mxu0 0.0
  %3570 = vmatprep.subr.mxu0 0.0
  %3571 = vmatpush1.xpose.msra.mxu0 0.0
  %3572 = vmatprep.subr.mxu0 0.0
  %3573 = vmatpush1.xpose.msra.mxu0 0.0
  %3574 = vmatprep.subr.mxu0 0.0
  %3575 = vmatpush1.xpose.msra.mxu0 0.0
  %3576 = vmatprep.subr.mxu0 0.0
  %3577 = vmatpush1.xpose.msra.mxu0 0.0
  %3578 = vmatprep.subr.mxu0 0.0
  %3579 = vmatpush1.xpose.msra.mxu0 0.0
  %3580 = vmatprep.subr.mxu0 0.0
  %3581 = vmatpush1.xpose.msra.mxu0 0.0
  %3582 = vmatprep.mubr.f32.mxu0 0.0
  %v3583 = vand.u32 %v2341, 4294901760
  %v3584 = vsub.f32 %v2341, %v3583
  %v3585 = vand.u32 %v3584, 4294901760
  %3586 = vmatmul.mubr.f32.gmra.mrb[0].mxu0 %v3585
  %v3587 = vpop.f32.mrb[0].mxu0
  %v3588 = vadd.f32 %v3514, %v3587
  %v3589 = vpop.f32.mrb[0].mxu0
  %3590 = vdwg.mxu0
  %3591 = vmatprep.subr.mxu0 0.0
  %v3592 = vand.u32 %v2346, 4294901760
  %v3593 = vsub.f32 %v2346, %v3592
  %v3594 = vand.u32 %v3593, 4294901760
  %3595 = vmatpush1.xpose.msra.mxu0 %v3594
  %3596 = vmatprep.subr.mxu0 0.0
  %3597 = vmatpush1.xpose.msra.mxu0 0.0
  %3598 = vmatprep.subr.mxu0 0.0
  %3599 = vmatpush1.xpose.msra.mxu0 0.0
  %3600 = vmatprep.subr.mxu0 0.0
  %3601 = vmatpush1.xpose.msra.mxu0 0.0
  %3602 = vmatprep.subr.mxu0 0.0
  %3603 = vmatpush1.xpose.msra.mxu0 0.0
  %3604 = vmatprep.subr.mxu0 0.0
  %3605 = vmatpush1.xpose.msra.mxu0 0.0
  %3606 = vmatprep.subr.mxu0 0.0
  %3607 = vmatpush1.xpose.msra.mxu0 0.0
  %3608 = vmatprep.subr.mxu0 0.0
  %3609 = vmatpush1.xpose.msra.mxu0 0.0
  %3610 = vmatprep.subr.mxu0 0.0
  %3611 = vmatpush1.xpose.msra.mxu0 0.0
  %3612 = vmatprep.subr.mxu0 0.0
  %3613 = vmatpush1.xpose.msra.mxu0 0.0
  %3614 = vmatprep.subr.mxu0 0.0
  %3615 = vmatpush1.xpose.msra.mxu0 0.0
  %3616 = vmatprep.subr.mxu0 0.0
  %3617 = vmatpush1.xpose.msra.mxu0 0.0
  %3618 = vmatprep.subr.mxu0 0.0
  %3619 = vmatpush1.xpose.msra.mxu0 0.0
  %3620 = vmatprep.subr.mxu0 0.0
  %3621 = vmatpush1.xpose.msra.mxu0 0.0
  %3622 = vmatprep.subr.mxu0 0.0
  %3623 = vmatpush1.xpose.msra.mxu0 0.0
  %3624 = vmatprep.subr.mxu0 0.0
  %3625 = vmatpush1.xpose.msra.mxu0 0.0
  %3626 = vmatprep.subr.mxu0 0.0
  %3627 = vmatpush1.xpose.msra.mxu0 0.0
  %3628 = vmatprep.subr.mxu0 0.0
  %3629 = vmatpush1.xpose.msra.mxu0 0.0
  %3630 = vmatprep.subr.mxu0 0.0
  %3631 = vmatpush1.xpose.msra.mxu0 0.0
  %3632 = vmatprep.subr.mxu0 0.0
  %3633 = vmatpush1.xpose.msra.mxu0 0.0
  %3634 = vmatprep.subr.mxu0 0.0
  %3635 = vmatpush1.xpose.msra.mxu0 0.0
  %3636 = vmatprep.subr.mxu0 0.0
  %3637 = vmatpush1.xpose.msra.mxu0 0.0
  %3638 = vmatprep.subr.mxu0 0.0
  %3639 = vmatpush1.xpose.msra.mxu0 0.0
  %3640 = vmatprep.subr.mxu0 0.0
  %3641 = vmatpush1.xpose.msra.mxu0 0.0
  %3642 = vmatprep.subr.mxu0 0.0
  %3643 = vmatpush1.xpose.msra.mxu0 0.0
  %3644 = vmatprep.subr.mxu0 0.0
  %3645 = vmatpush1.xpose.msra.mxu0 0.0
  %3646 = vmatprep.subr.mxu0 0.0
  %3647 = vmatpush1.xpose.msra.mxu0 0.0
  %3648 = vmatprep.subr.mxu0 0.0
  %3649 = vmatpush1.xpose.msra.mxu0 0.0
  %3650 = vmatprep.subr.mxu0 0.0
  %3651 = vmatpush1.xpose.msra.mxu0 0.0
  %3652 = vmatprep.subr.mxu0 0.0
  %3653 = vmatpush1.xpose.msra.mxu0 0.0
  %3654 = vmatprep.subr.mxu0 0.0
  %3655 = vmatpush1.xpose.msra.mxu0 0.0
  %3656 = vmatprep.subr.mxu0 0.0
  %3657 = vmatpush1.xpose.msra.mxu0 0.0
  %3658 = vmatprep.mubr.f32.mxu0 0.0
  %v3659 = vand.u32 %v2341, 4294901760
  %3660 = vmatmul.mubr.f32.gmra.mrb[0].mxu0 %v3659
  %v3661 = vpop.f32.mrb[0].mxu0
  %v3662 = vadd.f32 %v3588, %v3661
  %v3663 = vpop.f32.mrb[0].mxu0
  %3664 = vdwg.mxu0
  %3665 = vmatprep.subr.mxu0 0.0
  %v3666 = vand.u32 %v2346, 4294901760
  %3667 = vmatpush1.xpose.msra.mxu0 %v3666
  %3668 = vmatprep.subr.mxu0 0.0
  %3669 = vmatpush1.xpose.msra.mxu0 0.0
  %3670 = vmatprep.subr.mxu0 0.0
  %3671 = vmatpush1.xpose.msra.mxu0 0.0
  %3672 = vmatprep.subr.mxu0 0.0
  %3673 = vmatpush1.xpose.msra.mxu0 0.0
  %3674 = vmatprep.subr.mxu0 0.0
  %3675 = vmatpush1.xpose.msra.mxu0 0.0
  %3676 = vmatprep.subr.mxu0 0.0
  %3677 = vmatpush1.xpose.msra.mxu0 0.0
  %3678 = vmatprep.subr.mxu0 0.0
  %3679 = vmatpush1.xpose.msra.mxu0 0.0
  %3680 = vmatprep.subr.mxu0 0.0
  %3681 = vmatpush1.xpose.msra.mxu0 0.0
  %3682 = vmatprep.subr.mxu0 0.0
  %3683 = vmatpush1.xpose.msra.mxu0 0.0
  %3684 = vmatprep.subr.mxu0 0.0
  %3685 = vmatpush1.xpose.msra.mxu0 0.0
  %3686 = vmatprep.subr.mxu0 0.0
  %3687 = vmatpush1.xpose.msra.mxu0 0.0
  %3688 = vmatprep.subr.mxu0 0.0
  %3689 = vmatpush1.xpose.msra.mxu0 0.0
  %3690 = vmatprep.subr.mxu0 0.0
  %3691 = vmatpush1.xpose.msra.mxu0 0.0
  %3692 = vmatprep.subr.mxu0 0.0
  %3693 = vmatpush1.xpose.msra.mxu0 0.0
  %3694 = vmatprep.subr.mxu0 0.0
  %3695 = vmatpush1.xpose.msra.mxu0 0.0
  %3696 = vmatprep.subr.mxu0 0.0
  %3697 = vmatpush1.xpose.msra.mxu0 0.0
  %3698 = vmatprep.subr.mxu0 0.0
  %3699 = vmatpush1.xpose.msra.mxu0 0.0
  %3700 = vmatprep.subr.mxu0 0.0
  %3701 = vmatpush1.xpose.msra.mxu0 0.0
  %3702 = vmatprep.subr.mxu0 0.0
  %3703 = vmatpush1.xpose.msra.mxu0 0.0
  %3704 = vmatprep.subr.mxu0 0.0
  %3705 = vmatpush1.xpose.msra.mxu0 0.0
  %3706 = vmatprep.subr.mxu0 0.0
  %3707 = vmatpush1.xpose.msra.mxu0 0.0
  %3708 = vmatprep.subr.mxu0 0.0
  %3709 = vmatpush1.xpose.msra.mxu0 0.0
  %3710 = vmatprep.subr.mxu0 0.0
  %3711 = vmatpush1.xpose.msra.mxu0 0.0
  %3712 = vmatprep.subr.mxu0 0.0
  %3713 = vmatpush1.xpose.msra.mxu0 0.0
  %3714 = vmatprep.subr.mxu0 0.0
  %3715 = vmatpush1.xpose.msra.mxu0 0.0
  %3716 = vmatprep.subr.mxu0 0.0
  %3717 = vmatpush1.xpose.msra.mxu0 0.0
  %3718 = vmatprep.subr.mxu0 0.0
  %3719 = vmatpush1.xpose.msra.mxu0 0.0
  %3720 = vmatprep.subr.mxu0 0.0
  %3721 = vmatpush1.xpose.msra.mxu0 0.0
  %3722 = vmatprep.subr.mxu0 0.0
  %3723 = vmatpush1.xpose.msra.mxu0 0.0
  %3724 = vmatprep.subr.mxu0 0.0
  %3725 = vmatpush1.xpose.msra.mxu0 0.0
  %3726 = vmatprep.subr.mxu0 0.0
  %3727 = vmatpush1.xpose.msra.mxu0 0.0
  %3728 = vmatprep.subr.mxu0 0.0
  %3729 = vmatpush1.xpose.msra.mxu0 0.0
  %3730 = vmatprep.mubr.f32.mxu0 0.0
  %v3731 = vand.u32 %v2341, 4294901760
  %3732 = vmatmul.mubr.f32.gmra.mrb[0].mxu0 %v3731
  %v3733 = vpop.f32.mrb[0].mxu0
  %v3734 = vadd.f32 %v3662, %v3733
  %v3735 = vpop.f32.mrb[0].mxu0
  %3736 = vdwg.mxu0
  %v3737 = vld [vmem:[%s4] sm:$0xff]
  %v3738 = vld [vmem:[%s5] sm:$0x1]
  %v3740 = vlaneseq
  %v3741 = vshrl.u32 %v3740, 7
  %v3742 = vsub.s32 0, %v3741
  %v3743 = vrot.slane %v3738, %v3742
  %3745 = vxpose.xlu0.b32.start [1/16] %v3734, 128
  %3746 = vxpose.xlu0.b32.cont [2/16] 0.0, 128
  %3747 = vxpose.xlu0.b32.cont [3/16] 0.0, 128
  %3748 = vxpose.xlu0.b32.cont [4/16] 0.0, 128
  %3749 = vxpose.xlu0.b32.cont [5/16] 0.0, 128
  %3750 = vxpose.xlu0.b32.cont [6/16] 0.0, 128
  %3751 = vxpose.xlu0.b32.cont [7/16] 0.0, 128
  %3752 = vxpose.xlu0.b32.cont [8/16] 0.0, 128
  %3753 = vxpose.xlu0.b32.cont [9/16] 0.0, 128
  %3754 = vxpose.xlu0.b32.cont [10/16] 0.0, 128
  %3755 = vxpose.xlu0.b32.cont [11/16] 0.0, 128
  %3756 = vxpose.xlu0.b32.cont [12/16] 0.0, 128
  %3757 = vxpose.xlu0.b32.cont [13/16] 0.0, 128
  %3758 = vxpose.xlu0.b32.cont [14/16] 0.0, 128
  %3759 = vxpose.xlu0.b32.cont [15/16] 0.0, 128
  %3760 = vxpose.xlu0.b32.end [16/16] 0.0, 128
  %v3761 = vpop.trf.xlu0
  %v3762 = vpop.trf.xlu0
  %v3763 = vpop.trf.xlu0
  %v3764 = vpop.trf.xlu0
  %v3765 = vpop.trf.xlu0
  %v3766 = vpop.trf.xlu0
  %v3767 = vpop.trf.xlu0
  %v3768 = vpop.trf.xlu0
  %v3769 = vpop.trf.xlu0
  %v3770 = vpop.trf.xlu0
  %v3771 = vpop.trf.xlu0
  %v3772 = vpop.trf.xlu0
  %v3773 = vpop.trf.xlu0
  %v3774 = vpop.trf.xlu0
  %v3775 = vpop.trf.xlu0
  %v3776 = vpop.trf.xlu0
  %vm3777 = vcmask 64512
  %v3779 = vsel %vm3777, %v3761, 0
  %3781 = vmatprep.subr.mxu0 0.0
  %3782 = vmatpush1.msra.mxu0 %v3737
  %3783 = vmatprep.subr.mxu0 0.0
  %3784 = vmatpush1.msra.mxu0 0.0
  %3785 = vmatprep.subr.mxu0 0.0
  %3786 = vmatpush1.msra.mxu0 0.0
  %3787 = vmatprep.subr.mxu0 0.0
  %3788 = vmatpush1.msra.mxu0 0.0
  %3789 = vmatprep.subr.mxu0 0.0
  %3790 = vmatpush1.msra.mxu0 0.0
  %3791 = vmatprep.subr.mxu0 0.0
  %3792 = vmatpush1.msra.mxu0 0.0
  %3793 = vmatprep.subr.mxu0 0.0
  %3794 = vmatpush1.msra.mxu0 0.0
  %3795 = vmatprep.subr.mxu0 0.0
  %3796 = vmatpush1.msra.mxu0 0.0
  %3797 = vmatprep.subr.mxu0 0.0
  %3798 = vmatpush1.msra.mxu0 0.0
  %3799 = vmatprep.subr.mxu0 0.0
  %3800 = vmatpush1.msra.mxu0 0.0
  %3801 = vmatprep.subr.mxu0 0.0
  %3802 = vmatpush1.msra.mxu0 0.0
  %3803 = vmatprep.subr.mxu0 0.0
  %3804 = vmatpush1.msra.mxu0 0.0
  %3805 = vmatprep.subr.mxu0 0.0
  %3806 = vmatpush1.msra.mxu0 0.0
  %3807 = vmatprep.subr.mxu0 0.0
  %3808 = vmatpush1.msra.mxu0 0.0
  %3809 = vmatprep.subr.mxu0 0.0
  %3810 = vmatpush1.msra.mxu0 0.0
  %3811 = vmatprep.subr.mxu0 0.0
  %3812 = vmatpush1.msra.mxu0 0.0
  %3813 = vmatprep.subr.mxu0 0.0
  %3814 = vmatpush1.msra.mxu0 0.0
  %3815 = vmatprep.subr.mxu0 0.0
  %3816 = vmatpush1.msra.mxu0 0.0
  %3817 = vmatprep.subr.mxu0 0.0
  %3818 = vmatpush1.msra.mxu0 0.0
  %3819 = vmatprep.subr.mxu0 0.0
  %3820 = vmatpush1.msra.mxu0 0.0
  %3821 = vmatprep.subr.mxu0 0.0
  %3822 = vmatpush1.msra.mxu0 0.0
  %3823 = vmatprep.subr.mxu0 0.0
  %3824 = vmatpush1.msra.mxu0 0.0
  %3825 = vmatprep.subr.mxu0 0.0
  %3826 = vmatpush1.msra.mxu0 0.0
  %3827 = vmatprep.subr.mxu0 0.0
  %3828 = vmatpush1.msra.mxu0 0.0
  %3829 = vmatprep.subr.mxu0 0.0
  %3830 = vmatpush1.msra.mxu0 0.0
  %3831 = vmatprep.subr.mxu0 0.0
  %3832 = vmatpush1.msra.mxu0 0.0
  %3833 = vmatprep.subr.mxu0 0.0
  %3834 = vmatpush1.msra.mxu0 0.0
  %3835 = vmatprep.subr.mxu0 0.0
  %3836 = vmatpush1.msra.mxu0 0.0
  %3837 = vmatprep.subr.mxu0 0.0
  %3838 = vmatpush1.msra.mxu0 0.0
  %3839 = vmatprep.subr.mxu0 0.0
  %3840 = vmatpush1.msra.mxu0 0.0
  %3841 = vmatprep.subr.mxu0 0.0
  %3842 = vmatpush1.msra.mxu0 0.0
  %3843 = vmatprep.subr.mxu0 0.0
  %3844 = vmatpush1.msra.mxu0 0.0
  %3845 = vmatprep.mubr.f32.mxu0 0.0
  %3846 = vmatmul.mubr.f32.gmra.mrb[0].mxu0 %v3779
  %v3847 = vpop.f32.mrb[0].mxu0
  %v3848 = vadd.f32 %v3743, %v3847
  %v3849 = vpop.f32.mrb[0].mxu0
  %3850 = vdwg.mxu0
  %3851 = vst [vmem:[%s6] sm:$0xff] %v3848
  // Predicated region
  $region26: #{torchscript_wrapper_forward.1} parent=0 // pred_check
    _
  $region27: #{torchscript_wrapper_forward.1} parent=0 // pred_check_branch
    %3853 = sbr.rel (0) target = $region29
  $region28: #{torchscript_wrapper_forward.1} parent=0 // pred_region
    _
  $region29: #{torchscript_wrapper_forward.1} parent=0 // pred_fallthru
    _
  // Predicated region
  $region30: #{torchscript_wrapper_forward.1} parent=0 // pred_check
    _
  $region31: #{torchscript_wrapper_forward.1} parent=0 // pred_check_branch
    %3855 = sbr.rel (0) target = $region33
  $region32: #{torchscript_wrapper_forward.1} parent=0 // pred_region
    _
  $region33: #{torchscript_wrapper_forward.1} parent=0 // pred_fallthru
    _

</llo_original>
